<compile_context>
chip_gen: v7x
topology: tpu7x:2x2x1
jax: 0.10.0
libtpu: 0.0.40
codegen_flags: <defaults>
</compile_context>

<pallas_src>
import math
import functools

import jax
import jax.numpy as jnp
from jax import lax
from jax.experimental import pallas as pl
from jax.experimental.pallas import tpu as pltpu


# ----------------------------------------------------------------------------- #
# helpers (usable both in-kernel and host-side)
# ----------------------------------------------------------------------------- #
def _layernorm(x, gamma, beta, eps=1e-5):
    # nn.LayerNorm semantics: biased variance over the last axis, eps=1e-5.
    mu = jnp.mean(x, axis=-1, keepdims=True)
    var = jnp.mean((x - mu) ** 2, axis=-1, keepdims=True)
    return (x - mu) * lax.rsqrt(var + eps) * gamma + beta


def positional_encoding(t, d):
    pos = jnp.arange(t, dtype=jnp.float32)[:, None]
    i = jnp.arange(0, d, 2, dtype=jnp.float32)
    inv = jnp.exp(-jnp.log(10000.0) * i / d)
    pe = jnp.zeros((t, d), jnp.float32)
    pe = pe.at[:, 0::2].set(jnp.sin(pos * inv))
    pe = pe.at[:, 1::2].set(jnp.cos(pos * inv))
    return pe


def _vmem_capacity_bytes():
    """Best-effort per-core VMEM capacity query (conservative fallback)."""
    try:
        return int(pltpu.get_tpu_info().vmem_capacity_bytes)
    except Exception:
        pass
    try:
        kind = jax.devices()[0].device_kind.lower()
        if "v7" in kind:
            return 64 * 1024 * 1024
        return 128 * 1024 * 1024
    except Exception:
        return 64 * 1024 * 1024


def _supports_bf16_exp():
    """bf16 EUP exists on v6e/v7x; v2-v5 compute transcendentals in f32 only."""
    try:
        kind = jax.devices()[0].device_kind.lower()
        return not any(v in kind for v in ("v2", "v3", "v4", "v5"))
    except Exception:
        return False


def _vmem_budget_bytes(b_blk, T, D, d_ff, heads, attn_bytes):
    """Rough per-grid-step VMEM budget (double-buffered blocks + live temporaries)."""
    rows = b_blk * T
    bf16, f32 = 2, 4
    # double-buffered per-layer weights (bf16) + biases / LN params (f32)
    weights = 2 * ((D * 3 * D + D * D + D * d_ff + d_ff * D) * bf16
                   + (3 * D + 3 * D + d_ff + 4 * D) * f32)
    # double-buffered pipeline outputs (final x, attn maps) + mask input block
    outs = 2 * (b_blk * T * D * f32
                + b_blk * heads * T * T * attn_bytes
                + b_blk * T * f32)
    # resident activation scratch
    scratch = rows * D * f32
    # dominant simultaneously-live intermediates (qkv, h1, per-head softmax, accumulators)
    temps = (rows * 3 * D * f32 + rows * d_ff * (f32 + bf16)
             + 3 * b_blk * T * T * f32 + 2 * rows * D * f32 + rows * D * bf16)
    return weights + outs + scratch + temps


def _choose_b_blk(B, T, D, d_ff, heads, attn_bytes, vmem_cap, target_rows=512):
    """Largest divisor of B with ~target_rows rows, capped by VMEM; prefer even nb."""
    b = max(1, min(B, max(1, target_rows // max(T, 1))))
    while B % b:
        b -= 1
    # shrink while the VMEM budget exceeds ~85% of per-core VMEM
    while b > 1 and _vmem_budget_bytes(b, T, D, d_ff, heads, attn_bytes) > 0.85 * vmem_cap:
        nxt = b - 1
        while B % nxt:
            nxt -= 1
        b = nxt
    # prefer an even number of batch blocks (keeps both v7x TensorCores busy), but only
    # if it doesn't drop the row block below ~256 rows
    if (B // b) % 2:
        c = b
        while c > 1:
            c -= 1
            if B % c == 0 and (B // c) % 2 == 0 and c * T >= min(256, b * T):
                b = c
                break
    return b


# ----------------------------------------------------------------------------- #
# fused encoder-stack kernel: one grid step = (batch block, layer)
# ----------------------------------------------------------------------------- #
def encoder_stack_kernel(x_hbm_ref, mask_ref,
                         g1_ref, bn1_ref,
                         wqkv_ref, bqkv_ref,
                         wo_ref, bo_ref,
                         g2_ref, bn2_ref,
                         w1_ref, b1_ref, w2_ref, b2_ref,
                         gf_ref, bf_ref,
                         xo_ref, attn_ref,
                         x_sc, copy_sem,
                         *, heads, attn_dtype, use_bf16_exp):
    bi = pl.program_id(0)
    layer = pl.program_id(1)
    n_layers = pl.num_programs(1)

    rows, D = x_sc.shape
    b_blk = attn_ref.shape[0]
    T = attn_ref.shape[-1]
    dk = D // heads
    scale = jnp.float32(1.0 / math.sqrt(dk))

    # layer 0: DMA the (positionally-encoded) activations straight HBM -> resident scratch.
    # x is a pl.ANY input, so no (b_blk,T,D) f32 double buffer is pinned for the layer sweep.
    # NOTE: this carry requires the layer axis to stay the LAST grid axis and "arbitrary".
    @pl.when(layer == 0)
    def _():
        start = pl.multiple_of(bi * rows, rows)
        cp = pltpu.make_async_copy(x_hbm_ref.at[pl.ds(start, rows)], x_sc, copy_sem)
        cp.start()
        cp.wait()

    x = x_sc[...]                                              # (rows, D) f32

    # additive key mask, broadcast ONCE per layer (hoisted out of the head loop)
    mask_add = jnp.where(mask_ref[...] == 0.0,
                         jnp.float32(-1e9), jnp.float32(0.0))  # (b_blk, 1, T)
    mask_b = jnp.broadcast_to(mask_add, (b_blk, T, T))

    # ---- pre-LN 1 + fused QKV projection (bf16 MXU operands, f32 accumulate) ----
    x2 = _layernorm(x, g1_ref[...], bn1_ref[...]).astype(jnp.bfloat16)
    qkv = jnp.dot(x2, wqkv_ref[...],
                  preferred_element_type=jnp.float32) + bqkv_ref[...]   # (rows, 3D) f32
    # (kept f32 only; per-head q/k/v slices are cast to bf16 on use — no full bf16 copy)

    attn_out = jnp.zeros((rows, D), jnp.float32)
    # Static unroll is fine for small head counts (heads <= ~8).
    # TODO(synk): fori_loop variant for large head counts (needs dk % 128 == 0 layout).
    for h in range(heads):
        # 1/sqrt(dk) folded into q (rows*dk muls instead of T*T muls per head)
        qh = (qkv[:, h * dk:(h + 1) * dk] * scale
              ).astype(jnp.bfloat16).reshape(b_blk, T, dk)
        kh = qkv[:, D + h * dk:D + (h + 1) * dk
                 ].astype(jnp.bfloat16).reshape(b_blk, T, dk)
        vh = qkv[:, 2 * D + h * dk:2 * D + (h + 1) * dk
                 ].astype(jnp.bfloat16).reshape(b_blk, T, dk)

        # scores: contract on dk directly (no kh.T materialization)
        s = lax.dot_general(qh, kh, (((2,), (2,)), ((0,), (0,))),
                            preferred_element_type=jnp.float32)      # (b_blk, T, T)
        s = s + mask_b
        s = s - jnp.max(s, axis=-1, keepdims=True)

        if use_bf16_exp:
            p = jnp.exp(s.astype(jnp.bfloat16))        # bf16 EUP (v6e/v7x)
        else:
            p = jnp.exp(s)                             # f32 EUP (v5e)

        denom = jnp.sum(p, axis=-1, keepdims=True, dtype=jnp.float32)
        inv = pl.reciprocal(denom, approx=True)
        inv = inv * (2.0 - denom * inv)                # Newton step -> ~exact softmax rows

        attn_ref[:, h, :, :] = (p * inv).astype(attn_dtype)

        # P·V with un-normalized p; normalization applied to the (T, dk) result instead
        ho = lax.dot_general(p.astype(jnp.bfloat16), vh,
                             (((2,), (1,)), ((0,), (0,))),
                             preferred_element_type=jnp.float32) * inv   # (b_blk, T, dk)
        # accumulate per-head partial output projection (no lane-axis concat)
        attn_out = attn_out + jnp.dot(
            ho.reshape(rows, dk).astype(jnp.bfloat16),
            wo_ref[h * dk:(h + 1) * dk, :],
            preferred_element_type=jnp.float32)

    x = x + attn_out + bo_ref[...]                             # residual (dropout = id)

    # ---- pre-LN 2 + feed-forward ----
    x2 = _layernorm(x, g2_ref[...], bn2_ref[...]).astype(jnp.bfloat16)
    h1 = jnp.dot(x2, w1_ref[...],
                 preferred_element_type=jnp.float32) + b1_ref[...]
    h1 = jnp.maximum(h1, 0.0).astype(jnp.bfloat16)
    ff = jnp.dot(h1, w2_ref[...],
                 preferred_element_type=jnp.float32) + b2_ref[...]
    x = x + ff                                                 # residual (dropout = id)

    x_sc[...] = x

    # last layer: fused final LayerNorm + single HBM writeback of the activations
    @pl.when(layer == n_layers - 1)
    def _():
        xo_ref[...] = _layernorm(x, gf_ref[...], bf_ref[...]).reshape(b_blk, T, D)


# ----------------------------------------------------------------------------- #
# wrapper: one pallas_call for the whole encoder (all layers + final norm)
# ----------------------------------------------------------------------------- #
def encoder_forward(src, mask, params, *, heads,
                    attn_dtype=jnp.bfloat16, b_blk=None, use_bf16_exp=None):
    B, T, D = src.shape
    N = params["Wqkv"].shape[0]
    d_ff = params["W1"].shape[-1]
    assert D % heads == 0

    if use_bf16_exp is None:
        use_bf16_exp = _supports_bf16_exp()

    attn_bytes = jnp.dtype(attn_dtype).itemsize
    vmem_cap = _vmem_capacity_bytes()
    if b_blk is None:
        b_blk = _choose_b_blk(B, T, D, d_ff, heads, attn_bytes, vmem_cap)
    assert B % b_blk == 0
    nb = B // b_blk
    rows = b_blk * T

    budget = _vmem_budget_bytes(b_blk, T, D, d_ff, heads, attn_bytes)
    vmem_limit = int(min(vmem_cap, 128 * 1024 * 1024,
                         max(32 * 1024 * 1024, budget * 5 // 4 + (4 << 20))))

    # PositionalEncoder: x = src * sqrt(d_model) + pe[:T]   (dropout = identity)
    x = (src * math.sqrt(D) + positional_encoding(T, D)[None]).astype(jnp.float32)
    x_flat = x.reshape(B * T, D)          # manually DMA'd into the resident scratch
    mask = mask.astype(jnp.float32)

    def act_spec(shape):                        # indexed by batch block
        return pl.BlockSpec((b_blk,) + shape,
                            lambda b, l, _n=len(shape): (b,) + (0,) * _n)

    def layer_spec(shape):                      # per-layer stacked weights
        return pl.BlockSpec((None,) + shape,
                            lambda b, l, _n=len(shape): (l,) + (0,) * _n)

    def const_spec(shape):                      # layer-invariant (final norm)
        return pl.BlockSpec(shape, lambda b, l, _n=len(shape): (0,) * _n)

    in_specs = [
        pl.BlockSpec(memory_space=pl.ANY),      # x (flattened, stays in HBM; manual DMA)
        act_spec((1, T)),                       # mask
        layer_spec((1, D)), layer_spec((1, D)),             # LN1 gamma, beta
        layer_spec((D, 3 * D)), layer_spec((1, 3 * D)),     # Wqkv, bqkv
        layer_spec((D, D)), layer_spec((1, D)),             # Wo, bo
        layer_spec((1, D)), layer_spec((1, D)),             # LN2 gamma, beta
        layer_spec((D, d_ff)), layer_spec((1, d_ff)),       # W1, b1
        layer_spec((d_ff, D)), layer_spec((1, D)),          # W2, b2
        const_spec((1, D)), const_spec((1, D)),             # final LN gamma, beta
    ]
    out_specs = [
        act_spec((T, D)),                                                        # out
        pl.BlockSpec((b_blk, None, heads, T, T),
                     lambda b, l: (b, l, 0, 0, 0)),                              # attns
    ]
    out_shape = [
        jax.ShapeDtypeStruct((B, T, D), jnp.float32),
        jax.ShapeDtypeStruct((B, N, heads, T, T), attn_dtype),
    ]

    kernel = functools.partial(encoder_stack_kernel,
                               heads=heads, attn_dtype=attn_dtype,
                               use_bf16_exp=use_bf16_exp)
    out, attns = pl.pallas_call(
        kernel,
        grid=(nb, N),
        in_specs=in_specs,
        out_specs=out_specs,
        out_shape=out_shape,
        scratch_shapes=[pltpu.VMEM((rows, D), jnp.float32),
                        pltpu.SemaphoreType.DMA(())],
        compiler_params=pltpu.CompilerParams(
            dimension_semantics=("parallel", "arbitrary"),
            vmem_limit_bytes=vmem_limit),
    )(x_flat, mask,
      params["g1"], params["bn1"],
      params["Wqkv"], params["bqkv"],
      params["Wo"], params["bo"],
      params["g2"], params["bn2"],
      params["W1"], params["b1"],
      params["W2"], params["b2"],
      params["norm_g"], params["norm_b"])
    return out, attns


# ----------------------------------------------------------------------------- #
# parameters (weights stored bf16 in HBM; biases / LN params f32)
# ----------------------------------------------------------------------------- #
def init_params(key, N, d_model, d_ff, weight_dtype=jnp.bfloat16):
    ks = jax.random.split(key, 6)

    def lin(k, din, dout, s=0.05):
        return (s * jax.random.normal(k, (N, din, dout), jnp.float32)).astype(weight_dtype)

    Wq = lin(ks[0], d_model, d_model)
    Wk = lin(ks[1], d_model, d_model)
    Wv = lin(ks[2], d_model, d_model)
    return dict(
        g1=jnp.ones((N, 1, d_model), jnp.float32),
        bn1=jnp.zeros((N, 1, d_model), jnp.float32),
        Wqkv=jnp.concatenate([Wq, Wk, Wv], axis=-1),          # (N, D, 3D), fused QKV
        bqkv=jnp.zeros((N, 1, 3 * d_model), jnp.float32),
        Wo=lin(ks[3], d_model, d_model),
        bo=jnp.zeros((N, 1, d_model), jnp.float32),
        g2=jnp.ones((N, 1, d_model), jnp.float32),
        bn2=jnp.zeros((N, 1, d_model), jnp.float32),
        W1=lin(ks[4], d_model, d_ff),
        b1=jnp.zeros((N, 1, d_ff), jnp.float32),
        W2=lin(ks[5], d_ff, d_model),
        b2=jnp.zeros((N, 1, d_model), jnp.float32),
        norm_g=jnp.ones((1, d_model), jnp.float32),
        norm_b=jnp.zeros((1, d_model), jnp.float32),
    )


# ----------------------------------------------------------------------------- #
# pure-JAX f32 reference (same params) for a correctness cross-check
# ----------------------------------------------------------------------------- #
def encoder_reference(src, mask, params, *, heads):
    B, T, D = src.shape
    N = params["Wqkv"].shape[0]
    dk = D // heads
    x = src * math.sqrt(D) + positional_encoding(T, D)[None]
    attns = []
    for l in range(N):
        x2 = _layernorm(x, params["g1"][l], params["bn1"][l])
        qkv = x2 @ params["Wqkv"][l].astype(jnp.float32) + params["bqkv"][l]
        q, k, v = qkv[..., :D], qkv[..., D:2 * D], qkv[..., 2 * D:]

        def split(a):
            return a.reshape(B, T, heads, dk).transpose(0, 2, 1, 3)

        qh, kh, vh = split(q), split(k), split(v)
        s = jnp.einsum('bhqd,bhkd->bhqk', qh, kh) / math.sqrt(dk)
        s = jnp.where(mask[:, None] == 0.0, -1e9, s)
        p = jax.nn.softmax(s, axis=-1)
        attns.append(p)
        o = jnp.einsum('bhqk,bhkd->bhqd', p, vh).transpose(0, 2, 1, 3).reshape(B, T, D)
        x = x + o @ params["Wo"][l].astype(jnp.float32) + params["bo"][l]
        x2 = _layernorm(x, params["g2"][l], params["bn2"][l])
        h1 = jnp.maximum(x2 @ params["W1"][l].astype(jnp.float32) + params["b1"][l], 0.0)
        x = x + h1 @ params["W2"][l].astype(jnp.float32) + params["b2"][l]
    out = _layernorm(x, params["norm_g"], params["norm_b"])
    return out, jnp.stack(attns, axis=1)


# ----------------------------------------------------------------------------- #
if __name__ == "__main__":
    B, T, D_MODEL, HEADS, N_LAYERS, D_FF = 2, 8, 32, 4, 2, 64

    key = jax.random.PRNGKey(0)
    k_src, k_par = jax.random.split(key)

    src = jax.random.normal(k_src, (B, T, D_MODEL), jnp.float32)
    # mask (B, 1, T): 1.0 = attend, 0.0 = masked; pad out last two keys of batch 1
    mask = jnp.ones((B, 1, T), jnp.float32)
    mask = mask.at[1, 0, T - 2:].set(0.0)

    params = init_params(k_par, N_LAYERS, D_MODEL, D_FF)

    out, attns_enc = encoder_forward(src, mask, params, heads=HEADS)
    jax.block_until_ready((out, attns_enc))

    assert out.shape == (B, T, D_MODEL)
    assert attns_enc.shape == (B, N_LAYERS, HEADS, T, T)
    # each attention row is a probability distribution (bf16 storage -> loose tol)
    row_sums = jnp.sum(attns_enc.astype(jnp.float32), axis=-1)
    assert jnp.allclose(row_sums, 1.0, atol=2e-2)

    # cross-check against a pure-JAX f32 reference (bf16 MXU operands -> loose tol)
    out_ref, attns_ref = encoder_reference(src, mask, params, heads=HEADS)
    assert float(jnp.max(jnp.abs(out - out_ref))) < 5e-2
    assert float(jnp.max(jnp.abs(attns_enc.astype(jnp.float32) - attns_ref))) < 2e-2

    print("KERNEL_OK")
</pallas_src>

<mosaic_0001>
module attributes {stable_mosaic.version = 11 : i64} {
  func.func @encoder_stack_kernel(%arg0: i32, %arg1: i32, %arg2: memref<16x32xf32, #tpu.memory_space<any>>, %arg3: memref<2x1x8xf32, #tpu.memory_space<vmem>>, %arg4: memref<1x1x32xf32, #tpu.memory_space<vmem>>, %arg5: memref<1x1x32xf32, #tpu.memory_space<vmem>>, %arg6: memref<1x32x96xbf16, #tpu.memory_space<vmem>>, %arg7: memref<1x1x96xf32, #tpu.memory_space<vmem>>, %arg8: memref<1x32x32xbf16, #tpu.memory_space<vmem>>, %arg9: memref<1x1x32xf32, #tpu.memory_space<vmem>>, %arg10: memref<1x1x32xf32, #tpu.memory_space<vmem>>, %arg11: memref<1x1x32xf32, #tpu.memory_space<vmem>>, %arg12: memref<1x32x64xbf16, #tpu.memory_space<vmem>>, %arg13: memref<1x1x64xf32, #tpu.memory_space<vmem>>, %arg14: memref<1x64x32xbf16, #tpu.memory_space<vmem>>, %arg15: memref<1x1x32xf32, #tpu.memory_space<vmem>>, %arg16: memref<1x32xf32, #tpu.memory_space<vmem>>, %arg17: memref<1x32xf32, #tpu.memory_space<vmem>>, %arg18: memref<2x8x32xf32, #tpu.memory_space<vmem>>, %arg19: memref<2x1x4x8x8xbf16, #tpu.memory_space<vmem>>, %arg20: memref<16x32xf32, #tpu.memory_space<vmem>>, %arg21: memref<!tpu.dma_semaphore, #tpu.memory_space<semaphore_mem>>) attributes {dimension_semantics = [#tpu.dimension_semantics<parallel>, #tpu.dimension_semantics<arbitrary>], iteration_bounds = array<i64: 1, 2>, scalar_prefetch = 0 : i64, scratch_operands = 2 : i64, tpu.core_type = #tpu.core_type<tc>, window_params = [{}, {transform_indices = @transform_1, window_bounds = array<i64: 2, 1, 8>}, {transform_indices = @transform_2, window_bounds = array<i64: 1, 1, 32>}, {transform_indices = @transform_3, window_bounds = array<i64: 1, 1, 32>}, {transform_indices = @transform_4, window_bounds = array<i64: 1, 32, 96>}, {transform_indices = @transform_5, window_bounds = array<i64: 1, 1, 96>}, {transform_indices = @transform_6, window_bounds = array<i64: 1, 32, 32>}, {transform_indices = @transform_7, window_bounds = array<i64: 1, 1, 32>}, {transform_indices = @transform_8, window_bounds = array<i64: 1, 1, 32>}, {transform_indices = @transform_9, window_bounds = array<i64: 1, 1, 32>}, {transform_indices = @transform_10, window_bounds = array<i64: 1, 32, 64>}, {transform_indices = @transform_11, window_bounds = array<i64: 1, 1, 64>}, {transform_indices = @transform_12, window_bounds = array<i64: 1, 64, 32>}, {transform_indices = @transform_13, window_bounds = array<i64: 1, 1, 32>}, {pipeline_mode = #tpu.pipeline_mode<synchronous>, transform_indices = @transform_14, window_bounds = array<i64: 1, 32>}, {pipeline_mode = #tpu.pipeline_mode<synchronous>, transform_indices = @transform_15, window_bounds = array<i64: 1, 32>}, {transform_indices = @transform_16, window_bounds = array<i64: 2, 8, 32>}, {transform_indices = @transform_17, window_bounds = array<i64: 2, 1, 4, 8, 8>}]} {
    %c0_i32 = arith.constant 0 : i32
    %0 = arith.cmpi eq, %arg1, %c0_i32 : i32
    %1 = arith.extui %0 : i1 to i32
    %c0_i32_0 = arith.constant 0 : i32
    %2 = arith.cmpi ne, %1, %c0_i32_0 : i32
    scf.if %2 {
      %c16_i32 = arith.constant 16 : i32
      %273 = arith.muli %arg0, %c16_i32 : i32
      %274 = tpu.assume_multiple %273, 16 : i32
      %c0_i32_112 = arith.constant 0 : i32
      %275 = tpu.memref_slice %arg2[%274, %c0_i32_112] : memref<16x32xf32, #tpu.memory_space<any>> -> memref<16x32xf32, #tpu.memory_space<any>>
      tpu.enqueue_dma source(%275 : memref<16x32xf32, #tpu.memory_space<any>>) target(%arg20 : memref<16x32xf32, #tpu.memory_space<vmem>>) target_semaphore(%arg21 : memref<!tpu.dma_semaphore, #tpu.memory_space<semaphore_mem>>)
      %c0_i32_113 = arith.constant 0 : i32
      %276 = tpu.memref_slice %arg2[%274, %c0_i32_113] : memref<16x32xf32, #tpu.memory_space<any>> -> memref<16x32xf32, #tpu.memory_space<any>>
      tpu.wait_dma2 semaphore(%arg21 : memref<!tpu.dma_semaphore, #tpu.memory_space<semaphore_mem>>) src(%276 : memref<16x32xf32, #tpu.memory_space<any>>) dst(%arg20 : memref<16x32xf32, #tpu.memory_space<vmem>>)
    } else {
    }
    %c0 = arith.constant 0 : index
    %c0_1 = arith.constant 0 : index
    %3 = vector.load %arg20[%c0, %c0_1] : memref<16x32xf32, #tpu.memory_space<vmem>>, vector<16x32xf32>
    %c0_2 = arith.constant 0 : index
    %c0_3 = arith.constant 0 : index
    %c0_4 = arith.constant 0 : index
    %4 = vector.load %arg3[%c0_2, %c0_3, %c0_4] : memref<2x1x8xf32, #tpu.memory_space<vmem>>, vector<2x1x8xf32>
    %cst = arith.constant 0.000000e+00 : f32
    %5 = vector.broadcast %cst : f32 to vector<2x1x8xf32>
    %6 = arith.cmpf oeq, %4, %5 : vector<2x1x8xf32>
    %cst_5 = arith.constant -1.000000e+09 : f32
    %cst_6 = arith.constant 0.000000e+00 : f32
    %7 = vector.broadcast %cst_5 : f32 to vector<2x1x8xf32>
    %8 = vector.broadcast %cst_6 : f32 to vector<2x1x8xf32>
    %9 = arith.select %6, %7, %8 : vector<2x1x8xi1>, vector<2x1x8xf32>
    %10 = vector.shape_cast %9 : vector<2x1x8xf32> to vector<2x1x8xf32>
    %11 = vector.broadcast %10 : vector<2x1x8xf32> to vector<2x8x8xf32>
    %c0_7 = arith.constant 0 : index
    %c0_8 = arith.constant 0 : index
    %c0_9 = arith.constant 0 : index
    %12 = vector.load %arg4[%c0_7, %c0_8, %c0_9] : memref<1x1x32xf32, #tpu.memory_space<vmem>>, vector<1x1x32xf32>
    %13 = vector.shape_cast %12 : vector<1x1x32xf32> to vector<1x32xf32>
    %c0_10 = arith.constant 0 : index
    %c0_11 = arith.constant 0 : index
    %c0_12 = arith.constant 0 : index
    %14 = vector.load %arg5[%c0_10, %c0_11, %c0_12] : memref<1x1x32xf32, #tpu.memory_space<vmem>>, vector<1x1x32xf32>
    %15 = vector.shape_cast %14 : vector<1x1x32xf32> to vector<1x32xf32>
    %cst_13 = arith.constant dense<0.000000e+00> : vector<16xf32>
    %16 = vector.multi_reduction <add>, %3, %cst_13 [1] : vector<16x32xf32> to vector<16xf32>
    %17 = vector.shape_cast %16 : vector<16xf32> to vector<16x1xf32>
    %cst_14 = arith.constant 3.200000e+01 : f32
    %18 = vector.broadcast %cst_14 : f32 to vector<16x1xf32>
    %19 = arith.divf %17, %18 : vector<16x1xf32>
    %20 = vector.broadcast %19 : vector<16x1xf32> to vector<16x32xf32>
    %21 = arith.subf %3, %20 : vector<16x32xf32>
    %22 = arith.mulf %21, %21 : vector<16x32xf32>
    %cst_15 = arith.constant dense<0.000000e+00> : vector<16xf32>
    %23 = vector.multi_reduction <add>, %22, %cst_15 [1] : vector<16x32xf32> to vector<16xf32>
    %24 = vector.shape_cast %23 : vector<16xf32> to vector<16x1xf32>
    %cst_16 = arith.constant 3.200000e+01 : f32
    %25 = vector.broadcast %cst_16 : f32 to vector<16x1xf32>
    %26 = arith.divf %24, %25 : vector<16x1xf32>
    %27 = vector.broadcast %19 : vector<16x1xf32> to vector<16x32xf32>
    %28 = arith.subf %3, %27 : vector<16x32xf32>
    %cst_17 = arith.constant 9.99999974E-6 : f32
    %29 = vector.broadcast %cst_17 : f32 to vector<16x1xf32>
    %30 = arith.addf %26, %29 : vector<16x1xf32>
    %31 = math.rsqrt %30 : vector<16x1xf32>
    %32 = vector.broadcast %31 : vector<16x1xf32> to vector<16x32xf32>
    %33 = arith.mulf %28, %32 : vector<16x32xf32>
    %34 = vector.broadcast %13 : vector<1x32xf32> to vector<16x32xf32>
    %35 = arith.mulf %33, %34 : vector<16x32xf32>
    %36 = vector.broadcast %15 : vector<1x32xf32> to vector<16x32xf32>
    %37 = arith.addf %35, %36 : vector<16x32xf32>
    %38 = arith.truncf %37 : vector<16x32xf32> to vector<16x32xbf16>
    %c0_18 = arith.constant 0 : index
    %c0_19 = arith.constant 0 : index
    %c0_20 = arith.constant 0 : index
    %39 = vector.load %arg6[%c0_18, %c0_19, %c0_20] : memref<1x32x96xbf16, #tpu.memory_space<vmem>>, vector<1x32x96xbf16>
    %40 = vector.shape_cast %39 : vector<1x32x96xbf16> to vector<32x96xbf16>
    %cst_21 = arith.constant dense<0.000000e+00> : vector<16x96xf32>
    %41 = tpu.matmul %38, %40, %cst_21 {dimension_numbers = #tpu.dot_dimension_numbers<[1], [0], [0], [1], [0, 0, 1, 1], [], []>} : vector<16x32xbf16>, vector<32x96xbf16>, vector<16x96xf32> -> vector<16x96xf32>
    %c0_22 = arith.constant 0 : index
    %c0_23 = arith.constant 0 : index
    %c0_24 = arith.constant 0 : index
    %42 = vector.load %arg7[%c0_22, %c0_23, %c0_24] : memref<1x1x96xf32, #tpu.memory_space<vmem>>, vector<1x1x96xf32>
    %43 = vector.shape_cast %42 : vector<1x1x96xf32> to vector<1x96xf32>
    %44 = vector.broadcast %43 : vector<1x96xf32> to vector<16x96xf32>
    %45 = arith.addf %41, %44 : vector<16x96xf32>
    %cst_25 = arith.constant 0.000000e+00 : f32
    %46 = vector.broadcast %cst_25 : f32 to vector<16x32xf32>
    %47 = vector.extract_strided_slice %45 {offsets = [0, 0], sizes = [16, 8], strides = [1, 1]} : vector<16x96xf32> to vector<16x8xf32>
    %cst_26 = arith.constant 0.353553385 : f32
    %48 = vector.broadcast %cst_26 : f32 to vector<16x8xf32>
    %49 = arith.mulf %47, %48 : vector<16x8xf32>
    %50 = arith.truncf %49 : vector<16x8xf32> to vector<16x8xbf16>
    %51 = vector.shape_cast %50 : vector<16x8xbf16> to vector<2x8x8xbf16>
    %52 = vector.extract_strided_slice %45 {offsets = [0, 32], sizes = [16, 8], strides = [1, 1]} : vector<16x96xf32> to vector<16x8xf32>
    %53 = arith.truncf %52 : vector<16x8xf32> to vector<16x8xbf16>
    %54 = vector.shape_cast %53 : vector<16x8xbf16> to vector<2x8x8xbf16>
    %55 = vector.extract_strided_slice %45 {offsets = [0, 64], sizes = [16, 8], strides = [1, 1]} : vector<16x96xf32> to vector<16x8xf32>
    %56 = arith.truncf %55 : vector<16x8xf32> to vector<16x8xbf16>
    %57 = vector.shape_cast %56 : vector<16x8xbf16> to vector<2x8x8xbf16>
    %cst_27 = arith.constant dense<0.000000e+00> : vector<2x8x8xf32>
    %58 = tpu.matmul %51, %54, %cst_27 {dimension_numbers = #tpu.dot_dimension_numbers<[2], [2], [1], [1], [0, 0, 0, 1, 1, 1], [0], [0]>} : vector<2x8x8xbf16>, vector<2x8x8xbf16>, vector<2x8x8xf32> -> vector<2x8x8xf32>
    %59 = arith.addf %58, %11 : vector<2x8x8xf32>
    %cst_28 = arith.constant dense<0xFF800000> : vector<2x8xf32>
    %60 = vector.multi_reduction <maximumf>, %59, %cst_28 [2] : vector<2x8x8xf32> to vector<2x8xf32>
    %61 = vector.shape_cast %60 : vector<2x8xf32> to vector<2x8x1xf32>
    %62 = vector.broadcast %61 : vector<2x8x1xf32> to vector<2x8x8xf32>
    %63 = arith.subf %59, %62 : vector<2x8x8xf32>
    %64 = arith.truncf %63 : vector<2x8x8xf32> to vector<2x8x8xbf16>
    %65 = math.exp %64 : vector<2x8x8xbf16>
    %66 = arith.extf %65 : vector<2x8x8xbf16> to vector<2x8x8xf32>
    %cst_29 = arith.constant dense<0.000000e+00> : vector<2x8xf32>
    %67 = vector.multi_reduction <add>, %66, %cst_29 [2] : vector<2x8x8xf32> to vector<2x8xf32>
    %68 = vector.shape_cast %67 : vector<2x8xf32> to vector<2x8x1xf32>
    %69 = tpu.reciprocal %68 {approx = true} : vector<2x8x1xf32> -> vector<2x8x1xf32>
    %70 = arith.mulf %68, %69 : vector<2x8x1xf32>
    %cst_30 = arith.constant 2.000000e+00 : f32
    %71 = vector.broadcast %cst_30 : f32 to vector<2x8x1xf32>
    %72 = arith.subf %71, %70 : vector<2x8x1xf32>
    %73 = arith.mulf %69, %72 : vector<2x8x1xf32>
    %74 = arith.extf %65 : vector<2x8x8xbf16> to vector<2x8x8xf32>
    %75 = vector.broadcast %73 : vector<2x8x1xf32> to vector<2x8x8xf32>
    %76 = arith.mulf %74, %75 : vector<2x8x8xf32>
    %77 = arith.truncf %76 : vector<2x8x8xf32> to vector<2x8x8xbf16>
    %c0_31 = arith.constant 0 : index
    %c0_32 = arith.constant 0 : index
    %c0_33 = arith.constant 0 : index
    %c0_34 = arith.constant 0 : index
    %c0_35 = arith.constant 0 : index
    %78 = vector.load %arg19[%c0_31, %c0_32, %c0_33, %c0_34, %c0_35] : memref<2x1x4x8x8xbf16, #tpu.memory_space<vmem>>, vector<2x1x1x8x8xbf16>
    %79 = vector.shape_cast %78 : vector<2x1x1x8x8xbf16> to vector<2x8x8xbf16>
    %80 = vector.shape_cast %77 : vector<2x8x8xbf16> to vector<2x1x1x8x8xbf16>
    tpu.vector_store %arg19[%c0_31, %c0_32, %c0_33, %c0_34, %c0_35], %80 {strides = array<i32>} : memref<2x1x4x8x8xbf16, #tpu.memory_space<vmem>>, vector<2x1x1x8x8xbf16>,
    %cst_36 = arith.constant dense<0.000000e+00> : vector<2x8x8xf32>
    %81 = tpu.matmul %65, %57, %cst_36 {dimension_numbers = #tpu.dot_dimension_numbers<[2], [1], [1], [2], [0, 0, 0, 1, 1, 2], [0], [0]>} : vector<2x8x8xbf16>, vector<2x8x8xbf16>, vector<2x8x8xf32> -> vector<2x8x8xf32>
    %82 = vector.broadcast %73 : vector<2x8x1xf32> to vector<2x8x8xf32>
    %83 = arith.mulf %81, %82 : vector<2x8x8xf32>
    %84 = vector.shape_cast %83 : vector<2x8x8xf32> to vector<16x8xf32>
    %85 = arith.truncf %84 : vector<16x8xf32> to vector<16x8xbf16>
    %c0_37 = arith.constant 0 : index
    %c0_38 = arith.constant 0 : index
    %c0_39 = arith.constant 0 : index
    %86 = vector.load %arg8[%c0_37, %c0_38, %c0_39] : memref<1x32x32xbf16, #tpu.memory_space<vmem>>, vector<1x8x32xbf16>
    %87 = vector.shape_cast %86 : vector<1x8x32xbf16> to vector<8x32xbf16>
    %cst_40 = arith.constant dense<0.000000e+00> : vector<16x32xf32>
    %88 = tpu.matmul %85, %87, %cst_40 {dimension_numbers = #tpu.dot_dimension_numbers<[1], [0], [0], [1], [0, 0, 1, 1], [], []>} : vector<16x8xbf16>, vector<8x32xbf16>, vector<16x32xf32> -> vector<16x32xf32>
    %89 = arith.addf %46, %88 : vector<16x32xf32>
    %90 = vector.extract_strided_slice %45 {offsets = [0, 8], sizes = [16, 8], strides = [1, 1]} : vector<16x96xf32> to vector<16x8xf32>
    %cst_41 = arith.constant 0.353553385 : f32
    %91 = vector.broadcast %cst_41 : f32 to vector<16x8xf32>
    %92 = arith.mulf %90, %91 : vector<16x8xf32>
    %93 = arith.truncf %92 : vector<16x8xf32> to vector<16x8xbf16>
    %94 = vector.shape_cast %93 : vector<16x8xbf16> to vector<2x8x8xbf16>
    %95 = vector.extract_strided_slice %45 {offsets = [0, 40], sizes = [16, 8], strides = [1, 1]} : vector<16x96xf32> to vector<16x8xf32>
    %96 = arith.truncf %95 : vector<16x8xf32> to vector<16x8xbf16>
    %97 = vector.shape_cast %96 : vector<16x8xbf16> to vector<2x8x8xbf16>
    %98 = vector.extract_strided_slice %45 {offsets = [0, 72], sizes = [16, 8], strides = [1, 1]} : vector<16x96xf32> to vector<16x8xf32>
    %99 = arith.truncf %98 : vector<16x8xf32> to vector<16x8xbf16>
    %100 = vector.shape_cast %99 : vector<16x8xbf16> to vector<2x8x8xbf16>
    %cst_42 = arith.constant dense<0.000000e+00> : vector<2x8x8xf32>
    %101 = tpu.matmul %94, %97, %cst_42 {dimension_numbers = #tpu.dot_dimension_numbers<[2], [2], [1], [1], [0, 0, 0, 1, 1, 1], [0], [0]>} : vector<2x8x8xbf16>, vector<2x8x8xbf16>, vector<2x8x8xf32> -> vector<2x8x8xf32>
    %102 = arith.addf %101, %11 : vector<2x8x8xf32>
    %cst_43 = arith.constant dense<0xFF800000> : vector<2x8xf32>
    %103 = vector.multi_reduction <maximumf>, %102, %cst_43 [2] : vector<2x8x8xf32> to vector<2x8xf32>
    %104 = vector.shape_cast %103 : vector<2x8xf32> to vector<2x8x1xf32>
    %105 = vector.broadcast %104 : vector<2x8x1xf32> to vector<2x8x8xf32>
    %106 = arith.subf %102, %105 : vector<2x8x8xf32>
    %107 = arith.truncf %106 : vector<2x8x8xf32> to vector<2x8x8xbf16>
    %108 = math.exp %107 : vector<2x8x8xbf16>
    %109 = arith.extf %108 : vector<2x8x8xbf16> to vector<2x8x8xf32>
    %cst_44 = arith.constant dense<0.000000e+00> : vector<2x8xf32>
    %110 = vector.multi_reduction <add>, %109, %cst_44 [2] : vector<2x8x8xf32> to vector<2x8xf32>
    %111 = vector.shape_cast %110 : vector<2x8xf32> to vector<2x8x1xf32>
    %112 = tpu.reciprocal %111 {approx = true} : vector<2x8x1xf32> -> vector<2x8x1xf32>
    %113 = arith.mulf %111, %112 : vector<2x8x1xf32>
    %cst_45 = arith.constant 2.000000e+00 : f32
    %114 = vector.broadcast %cst_45 : f32 to vector<2x8x1xf32>
    %115 = arith.subf %114, %113 : vector<2x8x1xf32>
    %116 = arith.mulf %112, %115 : vector<2x8x1xf32>
    %117 = arith.extf %108 : vector<2x8x8xbf16> to vector<2x8x8xf32>
    %118 = vector.broadcast %116 : vector<2x8x1xf32> to vector<2x8x8xf32>
    %119 = arith.mulf %117, %118 : vector<2x8x8xf32>
    %120 = arith.truncf %119 : vector<2x8x8xf32> to vector<2x8x8xbf16>
    %c0_46 = arith.constant 0 : index
    %c0_47 = arith.constant 0 : index
    %c1 = arith.constant 1 : index
    %c0_48 = arith.constant 0 : index
    %c0_49 = arith.constant 0 : index
    %121 = vector.load %arg19[%c0_46, %c0_47, %c1, %c0_48, %c0_49] : memref<2x1x4x8x8xbf16, #tpu.memory_space<vmem>>, vector<2x1x1x8x8xbf16>
    %122 = vector.shape_cast %121 : vector<2x1x1x8x8xbf16> to vector<2x8x8xbf16>
    %123 = vector.shape_cast %120 : vector<2x8x8xbf16> to vector<2x1x1x8x8xbf16>
    tpu.vector_store %arg19[%c0_46, %c0_47, %c1, %c0_48, %c0_49], %123 {strides = array<i32>} : memref<2x1x4x8x8xbf16, #tpu.memory_space<vmem>>, vector<2x1x1x8x8xbf16>,
    %cst_50 = arith.constant dense<0.000000e+00> : vector<2x8x8xf32>
    %124 = tpu.matmul %108, %100, %cst_50 {dimension_numbers = #tpu.dot_dimension_numbers<[2], [1], [1], [2], [0, 0, 0, 1, 1, 2], [0], [0]>} : vector<2x8x8xbf16>, vector<2x8x8xbf16>, vector<2x8x8xf32> -> vector<2x8x8xf32>
    %125 = vector.broadcast %116 : vector<2x8x1xf32> to vector<2x8x8xf32>
    %126 = arith.mulf %124, %125 : vector<2x8x8xf32>
    %127 = vector.shape_cast %126 : vector<2x8x8xf32> to vector<16x8xf32>
    %128 = arith.truncf %127 : vector<16x8xf32> to vector<16x8xbf16>
    %c0_51 = arith.constant 0 : index
    %c8 = arith.constant 8 : index
    %c0_52 = arith.constant 0 : index
    %129 = vector.load %arg8[%c0_51, %c8, %c0_52] : memref<1x32x32xbf16, #tpu.memory_space<vmem>>, vector<1x8x32xbf16>
    %130 = vector.shape_cast %129 : vector<1x8x32xbf16> to vector<8x32xbf16>
    %cst_53 = arith.constant dense<0.000000e+00> : vector<16x32xf32>
    %131 = tpu.matmul %128, %130, %cst_53 {dimension_numbers = #tpu.dot_dimension_numbers<[1], [0], [0], [1], [0, 0, 1, 1], [], []>} : vector<16x8xbf16>, vector<8x32xbf16>, vector<16x32xf32> -> vector<16x32xf32>
    %132 = arith.addf %89, %131 : vector<16x32xf32>
    %133 = vector.extract_strided_slice %45 {offsets = [0, 16], sizes = [16, 8], strides = [1, 1]} : vector<16x96xf32> to vector<16x8xf32>
    %cst_54 = arith.constant 0.353553385 : f32
    %134 = vector.broadcast %cst_54 : f32 to vector<16x8xf32>
    %135 = arith.mulf %133, %134 : vector<16x8xf32>
    %136 = arith.truncf %135 : vector<16x8xf32> to vector<16x8xbf16>
    %137 = vector.shape_cast %136 : vector<16x8xbf16> to vector<2x8x8xbf16>
    %138 = vector.extract_strided_slice %45 {offsets = [0, 48], sizes = [16, 8], strides = [1, 1]} : vector<16x96xf32> to vector<16x8xf32>
    %139 = arith.truncf %138 : vector<16x8xf32> to vector<16x8xbf16>
    %140 = vector.shape_cast %139 : vector<16x8xbf16> to vector<2x8x8xbf16>
    %141 = vector.extract_strided_slice %45 {offsets = [0, 80], sizes = [16, 8], strides = [1, 1]} : vector<16x96xf32> to vector<16x8xf32>
    %142 = arith.truncf %141 : vector<16x8xf32> to vector<16x8xbf16>
    %143 = vector.shape_cast %142 : vector<16x8xbf16> to vector<2x8x8xbf16>
    %cst_55 = arith.constant dense<0.000000e+00> : vector<2x8x8xf32>
    %144 = tpu.matmul %137, %140, %cst_55 {dimension_numbers = #tpu.dot_dimension_numbers<[2], [2], [1], [1], [0, 0, 0, 1, 1, 1], [0], [0]>} : vector<2x8x8xbf16>, vector<2x8x8xbf16>, vector<2x8x8xf32> -> vector<2x8x8xf32>
    %145 = arith.addf %144, %11 : vector<2x8x8xf32>
    %cst_56 = arith.constant dense<0xFF800000> : vector<2x8xf32>
    %146 = vector.multi_reduction <maximumf>, %145, %cst_56 [2] : vector<2x8x8xf32> to vector<2x8xf32>
    %147 = vector.shape_cast %146 : vector<2x8xf32> to vector<2x8x1xf32>
    %148 = vector.broadcast %147 : vector<2x8x1xf32> to vector<2x8x8xf32>
    %149 = arith.subf %145, %148 : vector<2x8x8xf32>
    %150 = arith.truncf %149 : vector<2x8x8xf32> to vector<2x8x8xbf16>
    %151 = math.exp %150 : vector<2x8x8xbf16>
    %152 = arith.extf %151 : vector<2x8x8xbf16> to vector<2x8x8xf32>
    %cst_57 = arith.constant dense<0.000000e+00> : vector<2x8xf32>
    %153 = vector.multi_reduction <add>, %152, %cst_57 [2] : vector<2x8x8xf32> to vector<2x8xf32>
    %154 = vector.shape_cast %153 : vector<2x8xf32> to vector<2x8x1xf32>
    %155 = tpu.reciprocal %154 {approx = true} : vector<2x8x1xf32> -> vector<2x8x1xf32>
    %156 = arith.mulf %154, %155 : vector<2x8x1xf32>
    %cst_58 = arith.constant 2.000000e+00 : f32
    %157 = vector.broadcast %cst_58 : f32 to vector<2x8x1xf32>
    %158 = arith.subf %157, %156 : vector<2x8x1xf32>
    %159 = arith.mulf %155, %158 : vector<2x8x1xf32>
    %160 = arith.extf %151 : vector<2x8x8xbf16> to vector<2x8x8xf32>
    %161 = vector.broadcast %159 : vector<2x8x1xf32> to vector<2x8x8xf32>
    %162 = arith.mulf %160, %161 : vector<2x8x8xf32>
    %163 = arith.truncf %162 : vector<2x8x8xf32> to vector<2x8x8xbf16>
    %c0_59 = arith.constant 0 : index
    %c0_60 = arith.constant 0 : index
    %c2 = arith.constant 2 : index
    %c0_61 = arith.constant 0 : index
    %c0_62 = arith.constant 0 : index
    %164 = vector.load %arg19[%c0_59, %c0_60, %c2, %c0_61, %c0_62] : memref<2x1x4x8x8xbf16, #tpu.memory_space<vmem>>, vector<2x1x1x8x8xbf16>
    %165 = vector.shape_cast %164 : vector<2x1x1x8x8xbf16> to vector<2x8x8xbf16>
    %166 = vector.shape_cast %163 : vector<2x8x8xbf16> to vector<2x1x1x8x8xbf16>
    tpu.vector_store %arg19[%c0_59, %c0_60, %c2, %c0_61, %c0_62], %166 {strides = array<i32>} : memref<2x1x4x8x8xbf16, #tpu.memory_space<vmem>>, vector<2x1x1x8x8xbf16>,
    %cst_63 = arith.constant dense<0.000000e+00> : vector<2x8x8xf32>
    %167 = tpu.matmul %151, %143, %cst_63 {dimension_numbers = #tpu.dot_dimension_numbers<[2], [1], [1], [2], [0, 0, 0, 1, 1, 2], [0], [0]>} : vector<2x8x8xbf16>, vector<2x8x8xbf16>, vector<2x8x8xf32> -> vector<2x8x8xf32>
    %168 = vector.broadcast %159 : vector<2x8x1xf32> to vector<2x8x8xf32>
    %169 = arith.mulf %167, %168 : vector<2x8x8xf32>
    %170 = vector.shape_cast %169 : vector<2x8x8xf32> to vector<16x8xf32>
    %171 = arith.truncf %170 : vector<16x8xf32> to vector<16x8xbf16>
    %c0_64 = arith.constant 0 : index
    %c16 = arith.constant 16 : index
    %c0_65 = arith.constant 0 : index
    %172 = vector.load %arg8[%c0_64, %c16, %c0_65] : memref<1x32x32xbf16, #tpu.memory_space<vmem>>, vector<1x8x32xbf16>
    %173 = vector.shape_cast %172 : vector<1x8x32xbf16> to vector<8x32xbf16>
    %cst_66 = arith.constant dense<0.000000e+00> : vector<16x32xf32>
    %174 = tpu.matmul %171, %173, %cst_66 {dimension_numbers = #tpu.dot_dimension_numbers<[1], [0], [0], [1], [0, 0, 1, 1], [], []>} : vector<16x8xbf16>, vector<8x32xbf16>, vector<16x32xf32> -> vector<16x32xf32>
    %175 = arith.addf %132, %174 : vector<16x32xf32>
    %176 = vector.extract_strided_slice %45 {offsets = [0, 24], sizes = [16, 8], strides = [1, 1]} : vector<16x96xf32> to vector<16x8xf32>
    %cst_67 = arith.constant 0.353553385 : f32
    %177 = vector.broadcast %cst_67 : f32 to vector<16x8xf32>
    %178 = arith.mulf %176, %177 : vector<16x8xf32>
    %179 = arith.truncf %178 : vector<16x8xf32> to vector<16x8xbf16>
    %180 = vector.shape_cast %179 : vector<16x8xbf16> to vector<2x8x8xbf16>
    %181 = vector.extract_strided_slice %45 {offsets = [0, 56], sizes = [16, 8], strides = [1, 1]} : vector<16x96xf32> to vector<16x8xf32>
    %182 = arith.truncf %181 : vector<16x8xf32> to vector<16x8xbf16>
    %183 = vector.shape_cast %182 : vector<16x8xbf16> to vector<2x8x8xbf16>
    %184 = vector.extract_strided_slice %45 {offsets = [0, 88], sizes = [16, 8], strides = [1, 1]} : vector<16x96xf32> to vector<16x8xf32>
    %185 = arith.truncf %184 : vector<16x8xf32> to vector<16x8xbf16>
    %186 = vector.shape_cast %185 : vector<16x8xbf16> to vector<2x8x8xbf16>
    %cst_68 = arith.constant dense<0.000000e+00> : vector<2x8x8xf32>
    %187 = tpu.matmul %180, %183, %cst_68 {dimension_numbers = #tpu.dot_dimension_numbers<[2], [2], [1], [1], [0, 0, 0, 1, 1, 1], [0], [0]>} : vector<2x8x8xbf16>, vector<2x8x8xbf16>, vector<2x8x8xf32> -> vector<2x8x8xf32>
    %188 = arith.addf %187, %11 : vector<2x8x8xf32>
    %cst_69 = arith.constant dense<0xFF800000> : vector<2x8xf32>
    %189 = vector.multi_reduction <maximumf>, %188, %cst_69 [2] : vector<2x8x8xf32> to vector<2x8xf32>
    %190 = vector.shape_cast %189 : vector<2x8xf32> to vector<2x8x1xf32>
    %191 = vector.broadcast %190 : vector<2x8x1xf32> to vector<2x8x8xf32>
    %192 = arith.subf %188, %191 : vector<2x8x8xf32>
    %193 = arith.truncf %192 : vector<2x8x8xf32> to vector<2x8x8xbf16>
    %194 = math.exp %193 : vector<2x8x8xbf16>
    %195 = arith.extf %194 : vector<2x8x8xbf16> to vector<2x8x8xf32>
    %cst_70 = arith.constant dense<0.000000e+00> : vector<2x8xf32>
    %196 = vector.multi_reduction <add>, %195, %cst_70 [2] : vector<2x8x8xf32> to vector<2x8xf32>
    %197 = vector.shape_cast %196 : vector<2x8xf32> to vector<2x8x1xf32>
    %198 = tpu.reciprocal %197 {approx = true} : vector<2x8x1xf32> -> vector<2x8x1xf32>
    %199 = arith.mulf %197, %198 : vector<2x8x1xf32>
    %cst_71 = arith.constant 2.000000e+00 : f32
    %200 = vector.broadcast %cst_71 : f32 to vector<2x8x1xf32>
    %201 = arith.subf %200, %199 : vector<2x8x1xf32>
    %202 = arith.mulf %198, %201 : vector<2x8x1xf32>
    %203 = arith.extf %194 : vector<2x8x8xbf16> to vector<2x8x8xf32>
    %204 = vector.broadcast %202 : vector<2x8x1xf32> to vector<2x8x8xf32>
    %205 = arith.mulf %203, %204 : vector<2x8x8xf32>
    %206 = arith.truncf %205 : vector<2x8x8xf32> to vector<2x8x8xbf16>
    %c0_72 = arith.constant 0 : index
    %c0_73 = arith.constant 0 : index
    %c3 = arith.constant 3 : index
    %c0_74 = arith.constant 0 : index
    %c0_75 = arith.constant 0 : index
    %207 = vector.load %arg19[%c0_72, %c0_73, %c3, %c0_74, %c0_75] : memref<2x1x4x8x8xbf16, #tpu.memory_space<vmem>>, vector<2x1x1x8x8xbf16>
    %208 = vector.shape_cast %207 : vector<2x1x1x8x8xbf16> to vector<2x8x8xbf16>
    %209 = vector.shape_cast %206 : vector<2x8x8xbf16> to vector<2x1x1x8x8xbf16>
    tpu.vector_store %arg19[%c0_72, %c0_73, %c3, %c0_74, %c0_75], %209 {strides = array<i32>} : memref<2x1x4x8x8xbf16, #tpu.memory_space<vmem>>, vector<2x1x1x8x8xbf16>,
    %cst_76 = arith.constant dense<0.000000e+00> : vector<2x8x8xf32>
    %210 = tpu.matmul %194, %186, %cst_76 {dimension_numbers = #tpu.dot_dimension_numbers<[2], [1], [1], [2], [0, 0, 0, 1, 1, 2], [0], [0]>} : vector<2x8x8xbf16>, vector<2x8x8xbf16>, vector<2x8x8xf32> -> vector<2x8x8xf32>
    %211 = vector.broadcast %202 : vector<2x8x1xf32> to vector<2x8x8xf32>
    %212 = arith.mulf %210, %211 : vector<2x8x8xf32>
    %213 = vector.shape_cast %212 : vector<2x8x8xf32> to vector<16x8xf32>
    %214 = arith.truncf %213 : vector<16x8xf32> to vector<16x8xbf16>
    %c0_77 = arith.constant 0 : index
    %c24 = arith.constant 24 : index
    %c0_78 = arith.constant 0 : index
    %215 = vector.load %arg8[%c0_77, %c24, %c0_78] : memref<1x32x32xbf16, #tpu.memory_space<vmem>>, vector<1x8x32xbf16>
    %216 = vector.shape_cast %215 : vector<1x8x32xbf16> to vector<8x32xbf16>
    %cst_79 = arith.constant dense<0.000000e+00> : vector<16x32xf32>
    %217 = tpu.matmul %214, %216, %cst_79 {dimension_numbers = #tpu.dot_dimension_numbers<[1], [0], [0], [1], [0, 0, 1, 1], [], []>} : vector<16x8xbf16>, vector<8x32xbf16>, vector<16x32xf32> -> vector<16x32xf32>
    %218 = arith.addf %175, %217 : vector<16x32xf32>
    %219 = arith.addf %3, %218 : vector<16x32xf32>
    %c0_80 = arith.constant 0 : index
    %c0_81 = arith.constant 0 : index
    %c0_82 = arith.constant 0 : index
    %220 = vector.load %arg9[%c0_80, %c0_81, %c0_82] : memref<1x1x32xf32, #tpu.memory_space<vmem>>, vector<1x1x32xf32>
    %221 = vector.shape_cast %220 : vector<1x1x32xf32> to vector<1x32xf32>
    %222 = vector.broadcast %221 : vector<1x32xf32> to vector<16x32xf32>
    %223 = arith.addf %219, %222 : vector<16x32xf32>
    %c0_83 = arith.constant 0 : index
    %c0_84 = arith.constant 0 : index
    %c0_85 = arith.constant 0 : index
    %224 = vector.load %arg10[%c0_83, %c0_84, %c0_85] : memref<1x1x32xf32, #tpu.memory_space<vmem>>, vector<1x1x32xf32>
    %225 = vector.shape_cast %224 : vector<1x1x32xf32> to vector<1x32xf32>
    %c0_86 = arith.constant 0 : index
    %c0_87 = arith.constant 0 : index
    %c0_88 = arith.constant 0 : index
    %226 = vector.load %arg11[%c0_86, %c0_87, %c0_88] : memref<1x1x32xf32, #tpu.memory_space<vmem>>, vector<1x1x32xf32>
    %227 = vector.shape_cast %226 : vector<1x1x32xf32> to vector<1x32xf32>
    %cst_89 = arith.constant dense<0.000000e+00> : vector<16xf32>
    %228 = vector.multi_reduction <add>, %223, %cst_89 [1] : vector<16x32xf32> to vector<16xf32>
    %229 = vector.shape_cast %228 : vector<16xf32> to vector<16x1xf32>
    %cst_90 = arith.constant 3.200000e+01 : f32
    %230 = vector.broadcast %cst_90 : f32 to vector<16x1xf32>
    %231 = arith.divf %229, %230 : vector<16x1xf32>
    %232 = vector.broadcast %231 : vector<16x1xf32> to vector<16x32xf32>
    %233 = arith.subf %223, %232 : vector<16x32xf32>
    %234 = arith.mulf %233, %233 : vector<16x32xf32>
    %cst_91 = arith.constant dense<0.000000e+00> : vector<16xf32>
    %235 = vector.multi_reduction <add>, %234, %cst_91 [1] : vector<16x32xf32> to vector<16xf32>
    %236 = vector.shape_cast %235 : vector<16xf32> to vector<16x1xf32>
    %cst_92 = arith.constant 3.200000e+01 : f32
    %237 = vector.broadcast %cst_92 : f32 to vector<16x1xf32>
    %238 = arith.divf %236, %237 : vector<16x1xf32>
    %239 = vector.broadcast %231 : vector<16x1xf32> to vector<16x32xf32>
    %240 = arith.subf %223, %239 : vector<16x32xf32>
    %cst_93 = arith.constant 9.99999974E-6 : f32
    %241 = vector.broadcast %cst_93 : f32 to vector<16x1xf32>
    %242 = arith.addf %238, %241 : vector<16x1xf32>
    %243 = math.rsqrt %242 : vector<16x1xf32>
    %244 = vector.broadcast %243 : vector<16x1xf32> to vector<16x32xf32>
    %245 = arith.mulf %240, %244 : vector<16x32xf32>
    %246 = vector.broadcast %225 : vector<1x32xf32> to vector<16x32xf32>
    %247 = arith.mulf %245, %246 : vector<16x32xf32>
    %248 = vector.broadcast %227 : vector<1x32xf32> to vector<16x32xf32>
    %249 = arith.addf %247, %248 : vector<16x32xf32>
    %250 = arith.truncf %249 : vector<16x32xf32> to vector<16x32xbf16>
    %c0_94 = arith.constant 0 : index
    %c0_95 = arith.constant 0 : index
    %c0_96 = arith.constant 0 : index
    %251 = vector.load %arg12[%c0_94, %c0_95, %c0_96] : memref<1x32x64xbf16, #tpu.memory_space<vmem>>, vector<1x32x64xbf16>
    %252 = vector.shape_cast %251 : vector<1x32x64xbf16> to vector<32x64xbf16>
    %cst_97 = arith.constant dense<0.000000e+00> : vector<16x64xf32>
    %253 = tpu.matmul %250, %252, %cst_97 {dimension_numbers = #tpu.dot_dimension_numbers<[1], [0], [0], [1], [0, 0, 1, 1], [], []>} : vector<16x32xbf16>, vector<32x64xbf16>, vector<16x64xf32> -> vector<16x64xf32>
    %c0_98 = arith.constant 0 : index
    %c0_99 = arith.constant 0 : index
    %c0_100 = arith.constant 0 : index
    %254 = vector.load %arg13[%c0_98, %c0_99, %c0_100] : memref<1x1x64xf32, #tpu.memory_space<vmem>>, vector<1x1x64xf32>
    %255 = vector.shape_cast %254 : vector<1x1x64xf32> to vector<1x64xf32>
    %256 = vector.broadcast %255 : vector<1x64xf32> to vector<16x64xf32>
    %257 = arith.addf %253, %256 : vector<16x64xf32>
    %cst_101 = arith.constant 0.000000e+00 : f32
    %258 = vector.broadcast %cst_101 : f32 to vector<16x64xf32>
    %259 = arith.maximumf %257, %258 : vector<16x64xf32>
    %260 = arith.truncf %259 : vector<16x64xf32> to vector<16x64xbf16>
    %c0_102 = arith.constant 0 : index
    %c0_103 = arith.constant 0 : index
    %c0_104 = arith.constant 0 : index
    %261 = vector.load %arg14[%c0_102, %c0_103, %c0_104] : memref<1x64x32xbf16, #tpu.memory_space<vmem>>, vector<1x64x32xbf16>
    %262 = vector.shape_cast %261 : vector<1x64x32xbf16> to vector<64x32xbf16>
    %cst_105 = arith.constant dense<0.000000e+00> : vector<16x32xf32>
    %263 = tpu.matmul %260, %262, %cst_105 {dimension_numbers = #tpu.dot_dimension_numbers<[1], [0], [0], [1], [0, 0, 1, 1], [], []>} : vector<16x64xbf16>, vector<64x32xbf16>, vector<16x32xf32> -> vector<16x32xf32>
    %c0_106 = arith.constant 0 : index
    %c0_107 = arith.constant 0 : index
    %c0_108 = arith.constant 0 : index
    %264 = vector.load %arg15[%c0_106, %c0_107, %c0_108] : memref<1x1x32xf32, #tpu.memory_space<vmem>>, vector<1x1x32xf32>
    %265 = vector.shape_cast %264 : vector<1x1x32xf32> to vector<1x32xf32>
    %266 = vector.broadcast %265 : vector<1x32xf32> to vector<16x32xf32>
    %267 = arith.addf %263, %266 : vector<16x32xf32>
    %268 = arith.addf %223, %267 : vector<16x32xf32>
    %c0_109 = arith.constant 0 : index
    %c0_110 = arith.constant 0 : index
    %269 = vector.load %arg20[%c0_109, %c0_110] : memref<16x32xf32, #tpu.memory_space<vmem>>, vector<16x32xf32>
    tpu.vector_store %arg20[%c0_109, %c0_110], %268 {strides = array<i32>} : memref<16x32xf32, #tpu.memory_space<vmem>>, vector<16x32xf32>,
    %c1_i32 = arith.constant 1 : i32
    %270 = arith.cmpi eq, %arg1, %c1_i32 : i32
    %271 = arith.extui %270 : i1 to i32
    %c0_i32_111 = arith.constant 0 : i32
    %272 = arith.cmpi ne, %271, %c0_i32_111 : i32
    scf.if %272 {
      %c0_112 = arith.constant 0 : index
      %c0_113 = arith.constant 0 : index
      %273 = vector.load %arg16[%c0_112, %c0_113] : memref<1x32xf32, #tpu.memory_space<vmem>>, vector<1x32xf32>
      %c0_114 = arith.constant 0 : index
      %c0_115 = arith.constant 0 : index
      %274 = vector.load %arg17[%c0_114, %c0_115] : memref<1x32xf32, #tpu.memory_space<vmem>>, vector<1x32xf32>
      %cst_116 = arith.constant dense<0.000000e+00> : vector<16xf32>
      %275 = vector.multi_reduction <add>, %268, %cst_116 [1] : vector<16x32xf32> to vector<16xf32>
      %276 = vector.shape_cast %275 : vector<16xf32> to vector<16x1xf32>
      %cst_117 = arith.constant 3.200000e+01 : f32
      %277 = vector.broadcast %cst_117 : f32 to vector<16x1xf32>
      %278 = arith.divf %276, %277 : vector<16x1xf32>
      %279 = vector.broadcast %278 : vector<16x1xf32> to vector<16x32xf32>
      %280 = arith.subf %268, %279 : vector<16x32xf32>
      %281 = arith.mulf %280, %280 : vector<16x32xf32>
      %cst_118 = arith.constant dense<0.000000e+00> : vector<16xf32>
      %282 = vector.multi_reduction <add>, %281, %cst_118 [1] : vector<16x32xf32> to vector<16xf32>
      %283 = vector.shape_cast %282 : vector<16xf32> to vector<16x1xf32>
      %cst_119 = arith.constant 3.200000e+01 : f32
      %284 = vector.broadcast %cst_119 : f32 to vector<16x1xf32>
      %285 = arith.divf %283, %284 : vector<16x1xf32>
      %286 = vector.broadcast %278 : vector<16x1xf32> to vector<16x32xf32>
      %287 = arith.subf %268, %286 : vector<16x32xf32>
      %cst_120 = arith.constant 9.99999974E-6 : f32
      %288 = vector.broadcast %cst_120 : f32 to vector<16x1xf32>
      %289 = arith.addf %285, %288 : vector<16x1xf32>
      %290 = math.rsqrt %289 : vector<16x1xf32>
      %291 = vector.broadcast %290 : vector<16x1xf32> to vector<16x32xf32>
      %292 = arith.mulf %287, %291 : vector<16x32xf32>
      %293 = vector.broadcast %273 : vector<1x32xf32> to vector<16x32xf32>
      %294 = arith.mulf %292, %293 : vector<16x32xf32>
      %295 = vector.broadcast %274 : vector<1x32xf32> to vector<16x32xf32>
      %296 = arith.addf %294, %295 : vector<16x32xf32>
      %297 = vector.shape_cast %296 : vector<16x32xf32> to vector<2x8x32xf32>
      %c0_121 = arith.constant 0 : index
      %c0_122 = arith.constant 0 : index
      %c0_123 = arith.constant 0 : index
      %298 = vector.load %arg18[%c0_121, %c0_122, %c0_123] : memref<2x8x32xf32, #tpu.memory_space<vmem>>, vector<2x8x32xf32>
      tpu.vector_store %arg18[%c0_121, %c0_122, %c0_123], %297 {strides = array<i32>} : memref<2x8x32xf32, #tpu.memory_space<vmem>>, vector<2x8x32xf32>,
    } else {
    }
    return
  }
  func.func @transform_1(%arg0: i32, %arg1: i32) -> (i32, i32, i32) {
    %c0_i32 = arith.constant 0 : i32
    %c0_i32_0 = arith.constant 0 : i32
    %c0_i32_1 = arith.constant 0 : i32
    return %arg0, %c0_i32, %c0_i32_0 : i32, i32, i32
  }
  func.func @transform_2(%arg0: i32, %arg1: i32) -> (i32, i32, i32) {
    %c0_i32 = arith.constant 0 : i32
    %c0_i32_0 = arith.constant 0 : i32
    %c0_i32_1 = arith.constant 0 : i32
    return %arg1, %c0_i32, %c0_i32_0 : i32, i32, i32
  }
  func.func @transform_3(%arg0: i32, %arg1: i32) -> (i32, i32, i32) {
    %c0_i32 = arith.constant 0 : i32
    %c0_i32_0 = arith.constant 0 : i32
    %c0_i32_1 = arith.constant 0 : i32
    return %arg1, %c0_i32, %c0_i32_0 : i32, i32, i32
  }
  func.func @transform_4(%arg0: i32, %arg1: i32) -> (i32, i32, i32) {
    %c0_i32 = arith.constant 0 : i32
    %c0_i32_0 = arith.constant 0 : i32
    %c0_i32_1 = arith.constant 0 : i32
    return %arg1, %c0_i32, %c0_i32_0 : i32, i32, i32
  }
  func.func @transform_5(%arg0: i32, %arg1: i32) -> (i32, i32, i32) {
    %c0_i32 = arith.constant 0 : i32
    %c0_i32_0 = arith.constant 0 : i32
    %c0_i32_1 = arith.constant 0 : i32
    return %arg1, %c0_i32, %c0_i32_0 : i32, i32, i32
  }
  func.func @transform_6(%arg0: i32, %arg1: i32) -> (i32, i32, i32) {
    %c0_i32 = arith.constant 0 : i32
    %c0_i32_0 = arith.constant 0 : i32
    %c0_i32_1 = arith.constant 0 : i32
    return %arg1, %c0_i32, %c0_i32_0 : i32, i32, i32
  }
  func.func @transform_7(%arg0: i32, %arg1: i32) -> (i32, i32, i32) {
    %c0_i32 = arith.constant 0 : i32
    %c0_i32_0 = arith.constant 0 : i32
    %c0_i32_1 = arith.constant 0 : i32
    return %arg1, %c0_i32, %c0_i32_0 : i32, i32, i32
  }
  func.func @transform_8(%arg0: i32, %arg1: i32) -> (i32, i32, i32) {
    %c0_i32 = arith.constant 0 : i32
    %c0_i32_0 = arith.constant 0 : i32
    %c0_i32_1 = arith.constant 0 : i32
    return %arg1, %c0_i32, %c0_i32_0 : i32, i32, i32
  }
  func.func @transform_9(%arg0: i32, %arg1: i32) -> (i32, i32, i32) {
    %c0_i32 = arith.constant 0 : i32
    %c0_i32_0 = arith.constant 0 : i32
    %c0_i32_1 = arith.constant 0 : i32
    return %arg1, %c0_i32, %c0_i32_0 : i32, i32, i32
  }
  func.func @transform_10(%arg0: i32, %arg1: i32) -> (i32, i32, i32) {
    %c0_i32 = arith.constant 0 : i32
    %c0_i32_0 = arith.constant 0 : i32
    %c0_i32_1 = arith.constant 0 : i32
    return %arg1, %c0_i32, %c0_i32_0 : i32, i32, i32
  }
  func.func @transform_11(%arg0: i32, %arg1: i32) -> (i32, i32, i32) {
    %c0_i32 = arith.constant 0 : i32
    %c0_i32_0 = arith.constant 0 : i32
    %c0_i32_1 = arith.constant 0 : i32
    return %arg1, %c0_i32, %c0_i32_0 : i32, i32, i32
  }
  func.func @transform_12(%arg0: i32, %arg1: i32) -> (i32, i32, i32) {
    %c0_i32 = arith.constant 0 : i32
    %c0_i32_0 = arith.constant 0 : i32
    %c0_i32_1 = arith.constant 0 : i32
    return %arg1, %c0_i32, %c0_i32_0 : i32, i32, i32
  }
  func.func @transform_13(%arg0: i32, %arg1: i32) -> (i32, i32, i32) {
    %c0_i32 = arith.constant 0 : i32
    %c0_i32_0 = arith.constant 0 : i32
    %c0_i32_1 = arith.constant 0 : i32
    return %arg1, %c0_i32, %c0_i32_0 : i32, i32, i32
  }
  func.func @transform_14(%arg0: i32, %arg1: i32) -> (i32, i32) {
    %c0_i32 = arith.constant 0 : i32
    %c0_i32_0 = arith.constant 0 : i32
    %c0_i32_1 = arith.constant 0 : i32
    return %c0_i32, %c0_i32_0 : i32, i32
  }
  func.func @transform_15(%arg0: i32, %arg1: i32) -> (i32, i32) {
    %c0_i32 = arith.constant 0 : i32
    %c0_i32_0 = arith.constant 0 : i32
    %c0_i32_1 = arith.constant 0 : i32
    return %c0_i32, %c0_i32_0 : i32, i32
  }
  func.func @transform_16(%arg0: i32, %arg1: i32) -> (i32, i32, i32) {
    %c0_i32 = arith.constant 0 : i32
    %c0_i32_0 = arith.constant 0 : i32
    %c0_i32_1 = arith.constant 0 : i32
    return %arg0, %c0_i32, %c0_i32_0 : i32, i32, i32
  }
  func.func @transform_17(%arg0: i32, %arg1: i32) -> (i32, i32, i32, i32, i32) {
    %c0_i32 = arith.constant 0 : i32
    %c0_i32_0 = arith.constant 0 : i32
    %c0_i32_1 = arith.constant 0 : i32
    %c0_i32_2 = arith.constant 0 : i32
    return %arg0, %arg1, %c0_i32, %c0_i32_0, %c0_i32_1 : i32, i32, i32, i32, i32
  }
}

</mosaic_0001>

<llo_original>
// kernel: tpu_custom_call.1
$region0: #{tpu_custom_call.1}
  #allocation0 [shape = 'u32[]', space=smem, size = 0x4, offset = 0x4, fixed_abs, tag = 'smem constant byte address 0x4 - core index']
  #allocation1 [shape = 'u32[144,128]{1,0:T(1,128)}', space=vmem, size = 0x12000, scoped, tag = 'internal scratch']
  #allocation2 [shape = 'f32[16,32]{1,0:T(8,128)}', space=vmem, size = 0x2000, scoped, tag = 'scratch operand']
  #allocation3 [shape = 's32[1]{0}', space=sflag, size = 0x4, scoped, tag = 'scratch operand']
  #allocation12 [shape = 's32[]', space=sflag, size = 0x4, offset = 0, fixed_abs, tag = 'sflag constant byte address 0x0 - dummy sync flag']
  #allocation13 [shape = 's32[]', space=sflag, size = 0x4, offset = 0, fixed_abs, tag = 'sflag constant byte address 0x0 - dummy sync flag']
  #allocation14 [shape = 'u32[]', space=smem, size = 0x4, offset = 0x44, fixed_abs, tag = 'smem constant byte address 0x44 - assertion arg 0']
  #allocation15 [shape = 'u32[]', space=smem, size = 0x4, offset = 0x48, fixed_abs, tag = 'smem constant byte address 0x48 - assertion arg 1']
  #allocation16 [shape = 's32[]', space=sflag, size = 0x4, offset = 0, fixed_abs, tag = 'sflag constant byte address 0x0 - dummy sync flag']
  %s0 = inlined_call_operand.hbm [shape: f32[16,32], index: 0, kind: input, shape index: {}]
  %s1 = inlined_call_operand.vmem [shape: f32[2,1,8], index: 1, kind: input, shape index: {}]
  %s2 = inlined_call_operand.vmem [shape: f32[2,1,32], index: 2, kind: input, shape index: {}]
  %s3 = inlined_call_operand.vmem [shape: f32[2,1,32], index: 3, kind: input, shape index: {}]
  %s4 = inlined_call_operand.vmem [shape: bf16[2,32,96], index: 4, kind: input, shape index: {}]
  %s5 = inlined_call_operand.vmem [shape: f32[2,1,96], index: 5, kind: input, shape index: {}]
  %s6 = inlined_call_operand.vmem [shape: bf16[2,32,32], index: 6, kind: input, shape index: {}]
  %s7 = inlined_call_operand.vmem [shape: f32[2,1,32], index: 7, kind: input, shape index: {}]
  %s8 = inlined_call_operand.vmem [shape: f32[2,1,32], index: 8, kind: input, shape index: {}]
  %s9 = inlined_call_operand.hbm [shape: f32[2,1,32], index: 9, kind: input, shape index: {}]
  %s10 = inlined_call_operand.vmem [shape: bf16[2,32,64], index: 10, kind: input, shape index: {}]
  %s11 = inlined_call_operand.hbm [shape: f32[2,1,64], index: 11, kind: input, shape index: {}]
  %s12 = inlined_call_operand.vmem [shape: bf16[2,64,32], index: 12, kind: input, shape index: {}]
  %s13 = inlined_call_operand.vmem [shape: f32[2,1,32], index: 13, kind: input, shape index: {}]
  %s14 = inlined_call_operand.vmem [shape: f32[1,32], index: 14, kind: input, shape index: {}]
  %s15 = inlined_call_operand.vmem [shape: f32[1,32], index: 15, kind: input, shape index: {}]
  %s16 = inlined_call_operand.hbm [shape: f32[2,8,32], index: 16, kind: output, shape index: {0}]
  %s17 = inlined_call_operand.hbm [shape: bf16[2,2,4,8,8], index: 17, kind: output, shape index: {1}]
  %18 = xla_tuple %s16, %s17
  %s19 = sld [smem:[#allocation0]]
  $region121: #{tpu_custom_call.1} parent=0
    _
  %s21 = ssub.s32 1, %s19
  %s22 = scalar_select 0, %s21, %s19
  $region1: #{tpu_custom_call.1} parent=0
    #allocation4 [shape = 'u8[1024]{0}', space=vmem, size = 0x400, scoped, tag = 'input window, operand 9']
    #allocation5 [shape = 's32[2]{0}', space=sflag, size = 0x8, scoped, tag = 'scoped memory for tpu_custom_call.1']
    #allocation6 [shape = 's32[2]{0}', space=sflag, size = 0x8, scoped, tag = 'scoped memory for tpu_custom_call.1']
    #allocation7 [shape = 'u8[1024]{0}', space=vmem, size = 0x400, scoped, tag = 'input window, operand 11']
    #allocation8 [shape = 's32[2]{0}', space=sflag, size = 0x8, scoped, tag = 'scoped memory for tpu_custom_call.1']
    #allocation9 [shape = 'u8[8192]{0}', space=vmem, size = 0x2000, scoped, tag = 'output window, operand 0, single buffered']
    #allocation10 [shape = 'u8[32768]{0}', space=vmem, size = 0x8000, scoped, tag = 'output window, operand 1']
    #allocation11 [shape = 's32[2]{0}', space=sflag, size = 0x8, scoped, tag = 'scoped memory for tpu_custom_call.1']
    %23 = vsyncpa [#allocation5], 0
    %s24 = scalar_lea.sflag [#allocation5], 1
    %25 = vsyncpa %s24, 0
    %26 = vsyncpa [#allocation8], 0
    %s27 = scalar_lea.sflag [#allocation8], 1
    %28 = vsyncpa %s27, 0
    %29 = vsyncpa [#allocation6], 0
    %30 = vsyncpa [#allocation11], 0
    %s31 = scalar_lea.sflag [#allocation11], 1
    %32 = vsyncpa %s31, 0
    loop: start=0, step=1, limit=4
    $region2: #{tpu_custom_call.1} parent=1 // loop_pre_header
      _
    $region3: #{tpu_custom_call.1} parent=1 // loop_header
      %s34 = sphi 0, %s38
      %p35 = scmp.ge.s32.totalorder %s34, 4
      %s41 = sphi 0, %s53
      %s42 = sphi 0, %s49
      %s43 = sphi 0, %s41
      %s44 = sphi 0, %s42
      %s45 = sphi 0, %s43
      %s46 = sphi 0, %s44
      %s56 = sphi 0, %s58
      %s59 = sphi 0, %s56
      %s60 = sphi 0, %s59
      %s76 = sphi 0, %s60
      %s82 = sphi 0, %s84
      %s85 = sphi 0, %s82
      %s86 = sphi 0, %s85
      %s102 = sphi 0, %s86
      %s108 = sphi 0, %s110
      %s111 = sphi 0, %s108
      %s112 = sphi 0, %s111
      %s128 = sphi 0, %s112
      %s134 = sphi 0, %s136
      %s137 = sphi 0, %s134
      %s138 = sphi 0, %s137
      %s154 = sphi 0, %s138
      %s160 = sphi 0, %s162
      %s163 = sphi 0, %s160
      %s164 = sphi 0, %s163
      %s180 = sphi 0, %s164
      %s186 = sphi 0, %s188
      %s189 = sphi 0, %s186
      %s190 = sphi 0, %s189
      %s206 = sphi 0, %s190
      %s212 = sphi 0, %s214
      %s215 = sphi 0, %s212
      %s216 = sphi 0, %s215
      %s232 = sphi 0, %s216
      %s238 = sphi 0, %s240
      %s241 = sphi 0, %s238
      %s242 = sphi 0, %s241
      %s258 = sphi 0, %s242
      %s264 = sphi 0, %s266
      %s267 = sphi 0, %s264
      %s268 = sphi 0, %s267
      %s284 = sphi 0, %s268
      %s290 = sphi 0, %s292
      %s293 = sphi 0, %s290
      %s294 = sphi 0, %s293
      %s310 = sphi 0, %s294
      %s316 = sphi 0, %s318
      %s319 = sphi 0, %s316
      %s320 = sphi 0, %s319
      %s336 = sphi 0, %s320
      %s342 = sphi 0, %s344
      %s345 = sphi 0, %s342
      %s346 = sphi 0, %s345
      %s362 = sphi 0, %s346
      %s368 = sphi 0, %s370
      %s371 = sphi 0, %s368
      %s372 = sphi 0, %s371
      %s388 = sphi 0, %s372
      %s392 = sphi 0, %s392
      %s394 = sphi 0, %s392
      %s395 = sphi 0, %s394
      %s409 = sphi 0, %s395
      %s413 = sphi 0, %s413
      %s415 = sphi 0, %s413
      %s416 = sphi 0, %s415
      %s430 = sphi 0, %s416
      %s436 = sphi 0, %s438
      %s439 = sphi 0, %s436
      %s440 = sphi 0, %s439
      %s456 = sphi 0, %s440
      %s464 = sphi 0, %s466
      %s467 = sphi 0, %s464
      %s468 = sphi 0, %s467
      %s484 = sphi 0, %s468
    $region4: #{tpu_custom_call.1} parent=1 // loop_header_branch
      %37 = sbr.rel (%p35) target = $region8
    $region5: #{tpu_custom_call.1} parent=1 // loop_body
      %s39 = ssub.s32 %s34, 1
      %s40 = ssub.s32 %s34, 2
      %s47 = sadd.s32 1, %s42
      %p48 = scmp.ge.s32.totalorder %s47, 2
      %s49 = scalar_select %p48, 0, %s47
      %s50 = sadd.s32 1, %s41
      %s51 = scalar_select %p48, %s50, %s41
      %p52 = scmp.ge.s32.totalorder %s51, 1
      %s53 = scalar_select %p52, 0, %s51
      %s54 = ssub.s32 %s41, %s53
      %p55 = scmp.eq.s32.totalorder %s54, 0
      %s57 = sadd.s32 %s56, 1
      %s58 = scalar_select %p55, %s56, %s57
      %p61 = pneg %p55
      %p62 = scmp.eq.s32.totalorder %s34, 1
      %p63 = por %p61, %p62
      %p64 = scmp.ne.s32.totalorder %s56, %s59
      %p65 = scmp.eq.s32.totalorder %s34, 0
      %p66 = por %p64, %p65
      %p67 = scmp.ne.s32.totalorder %s56, %s59
      %p68 = scmp.eq.s32.totalorder %s39, 1
      %p69 = por %p67, %p68
      %p70 = scmp.ne.s32.totalorder %s59, %s60
      %p71 = scmp.eq.s32.totalorder %s39, 0
      %p72 = por %p70, %p71
      %p73 = scmp.ne.s32.totalorder %s59, %s60
      %p74 = scmp.eq.s32.totalorder %s40, 1
      %p75 = por %p73, %p74
      %p77 = scmp.ne.s32.totalorder %s60, %s76
      %p78 = scmp.eq.s32.totalorder %s40, 0
      %p79 = por %p77, %p78
      %s80 = ssub.s32 %s42, %s49
      %p81 = scmp.eq.s32.totalorder %s80, 0
      %s83 = sadd.s32 %s82, 1
      %s84 = scalar_select %p81, %s82, %s83
      %p87 = pneg %p81
      %p88 = scmp.eq.s32.totalorder %s34, 1
      %p89 = por %p87, %p88
      %p90 = scmp.ne.s32.totalorder %s82, %s85
      %p91 = scmp.eq.s32.totalorder %s34, 0
      %p92 = por %p90, %p91
      %p93 = scmp.ne.s32.totalorder %s82, %s85
      %p94 = scmp.eq.s32.totalorder %s39, 1
      %p95 = por %p93, %p94
      %p96 = scmp.ne.s32.totalorder %s85, %s86
      %p97 = scmp.eq.s32.totalorder %s39, 0
      %p98 = por %p96, %p97
      %p99 = scmp.ne.s32.totalorder %s85, %s86
      %p100 = scmp.eq.s32.totalorder %s40, 1
      %p101 = por %p99, %p100
      %p103 = scmp.ne.s32.totalorder %s86, %s102
      %p104 = scmp.eq.s32.totalorder %s40, 0
      %p105 = por %p103, %p104
      %s106 = ssub.s32 %s42, %s49
      %p107 = scmp.eq.s32.totalorder %s106, 0
      %s109 = sadd.s32 %s108, 1
      %s110 = scalar_select %p107, %s108, %s109
      %p113 = pneg %p107
      %p114 = scmp.eq.s32.totalorder %s34, 1
      %p115 = por %p113, %p114
      %p116 = scmp.ne.s32.totalorder %s108, %s111
      %p117 = scmp.eq.s32.totalorder %s34, 0
      %p118 = por %p116, %p117
      %p119 = scmp.ne.s32.totalorder %s108, %s111
      %p120 = scmp.eq.s32.totalorder %s39, 1
      %p121 = por %p119, %p120
      %p122 = scmp.ne.s32.totalorder %s111, %s112
      %p123 = scmp.eq.s32.totalorder %s39, 0
      %p124 = por %p122, %p123
      %p125 = scmp.ne.s32.totalorder %s111, %s112
      %p126 = scmp.eq.s32.totalorder %s40, 1
      %p127 = por %p125, %p126
      %p129 = scmp.ne.s32.totalorder %s112, %s128
      %p130 = scmp.eq.s32.totalorder %s40, 0
      %p131 = por %p129, %p130
      %s132 = ssub.s32 %s42, %s49
      %p133 = scmp.eq.s32.totalorder %s132, 0
      %s135 = sadd.s32 %s134, 1
      %s136 = scalar_select %p133, %s134, %s135
      %p139 = pneg %p133
      %p140 = scmp.eq.s32.totalorder %s34, 1
      %p141 = por %p139, %p140
      %p142 = scmp.ne.s32.totalorder %s134, %s137
      %p143 = scmp.eq.s32.totalorder %s34, 0
      %p144 = por %p142, %p143
      %p145 = scmp.ne.s32.totalorder %s134, %s137
      %p146 = scmp.eq.s32.totalorder %s39, 1
      %p147 = por %p145, %p146
      %p148 = scmp.ne.s32.totalorder %s137, %s138
      %p149 = scmp.eq.s32.totalorder %s39, 0
      %p150 = por %p148, %p149
      %p151 = scmp.ne.s32.totalorder %s137, %s138
      %p152 = scmp.eq.s32.totalorder %s40, 1
      %p153 = por %p151, %p152
      %p155 = scmp.ne.s32.totalorder %s138, %s154
      %p156 = scmp.eq.s32.totalorder %s40, 0
      %p157 = por %p155, %p156
      %s158 = ssub.s32 %s42, %s49
      %p159 = scmp.eq.s32.totalorder %s158, 0
      %s161 = sadd.s32 %s160, 1
      %s162 = scalar_select %p159, %s160, %s161
      %p165 = pneg %p159
      %p166 = scmp.eq.s32.totalorder %s34, 1
      %p167 = por %p165, %p166
      %p168 = scmp.ne.s32.totalorder %s160, %s163
      %p169 = scmp.eq.s32.totalorder %s34, 0
      %p170 = por %p168, %p169
      %p171 = scmp.ne.s32.totalorder %s160, %s163
      %p172 = scmp.eq.s32.totalorder %s39, 1
      %p173 = por %p171, %p172
      %p174 = scmp.ne.s32.totalorder %s163, %s164
      %p175 = scmp.eq.s32.totalorder %s39, 0
      %p176 = por %p174, %p175
      %p177 = scmp.ne.s32.totalorder %s163, %s164
      %p178 = scmp.eq.s32.totalorder %s40, 1
      %p179 = por %p177, %p178
      %p181 = scmp.ne.s32.totalorder %s164, %s180
      %p182 = scmp.eq.s32.totalorder %s40, 0
      %p183 = por %p181, %p182
      %s184 = ssub.s32 %s42, %s49
      %p185 = scmp.eq.s32.totalorder %s184, 0
      %s187 = sadd.s32 %s186, 1
      %s188 = scalar_select %p185, %s186, %s187
      %p191 = pneg %p185
      %p192 = scmp.eq.s32.totalorder %s34, 1
      %p193 = por %p191, %p192
      %p194 = scmp.ne.s32.totalorder %s186, %s189
      %p195 = scmp.eq.s32.totalorder %s34, 0
      %p196 = por %p194, %p195
      %p197 = scmp.ne.s32.totalorder %s186, %s189
      %p198 = scmp.eq.s32.totalorder %s39, 1
      %p199 = por %p197, %p198
      %p200 = scmp.ne.s32.totalorder %s189, %s190
      %p201 = scmp.eq.s32.totalorder %s39, 0
      %p202 = por %p200, %p201
      %p203 = scmp.ne.s32.totalorder %s189, %s190
      %p204 = scmp.eq.s32.totalorder %s40, 1
      %p205 = por %p203, %p204
      %p207 = scmp.ne.s32.totalorder %s190, %s206
      %p208 = scmp.eq.s32.totalorder %s40, 0
      %p209 = por %p207, %p208
      %s210 = ssub.s32 %s42, %s49
      %p211 = scmp.eq.s32.totalorder %s210, 0
      %s213 = sadd.s32 %s212, 1
      %s214 = scalar_select %p211, %s212, %s213
      %p217 = pneg %p211
      %p218 = scmp.eq.s32.totalorder %s34, 1
      %p219 = por %p217, %p218
      %p220 = scmp.ne.s32.totalorder %s212, %s215
      %p221 = scmp.eq.s32.totalorder %s34, 0
      %p222 = por %p220, %p221
      %p223 = scmp.ne.s32.totalorder %s212, %s215
      %p224 = scmp.eq.s32.totalorder %s39, 1
      %p225 = por %p223, %p224
      %p226 = scmp.ne.s32.totalorder %s215, %s216
      %p227 = scmp.eq.s32.totalorder %s39, 0
      %p228 = por %p226, %p227
      %p229 = scmp.ne.s32.totalorder %s215, %s216
      %p230 = scmp.eq.s32.totalorder %s40, 1
      %p231 = por %p229, %p230
      %p233 = scmp.ne.s32.totalorder %s216, %s232
      %p234 = scmp.eq.s32.totalorder %s40, 0
      %p235 = por %p233, %p234
      %s236 = ssub.s32 %s42, %s49
      %p237 = scmp.eq.s32.totalorder %s236, 0
      %s239 = sadd.s32 %s238, 1
      %s240 = scalar_select %p237, %s238, %s239
      %p243 = pneg %p237
      %p244 = scmp.eq.s32.totalorder %s34, 1
      %p245 = por %p243, %p244
      %p246 = scmp.ne.s32.totalorder %s238, %s241
      %p247 = scmp.eq.s32.totalorder %s34, 0
      %p248 = por %p246, %p247
      %p249 = scmp.ne.s32.totalorder %s238, %s241
      %p250 = scmp.eq.s32.totalorder %s39, 1
      %p251 = por %p249, %p250
      %p252 = scmp.ne.s32.totalorder %s241, %s242
      %p253 = scmp.eq.s32.totalorder %s39, 0
      %p254 = por %p252, %p253
      %p255 = scmp.ne.s32.totalorder %s241, %s242
      %p256 = scmp.eq.s32.totalorder %s40, 1
      %p257 = por %p255, %p256
      %p259 = scmp.ne.s32.totalorder %s242, %s258
      %p260 = scmp.eq.s32.totalorder %s40, 0
      %p261 = por %p259, %p260
      %s262 = ssub.s32 %s42, %s49
      %p263 = scmp.eq.s32.totalorder %s262, 0
      %s265 = sadd.s32 %s264, 1
      %s266 = scalar_select %p263, %s264, %s265
      %p269 = pneg %p263
      %p270 = scmp.eq.s32.totalorder %s34, 1
      %p271 = por %p269, %p270
      %p272 = scmp.ne.s32.totalorder %s264, %s267
      %p273 = scmp.eq.s32.totalorder %s34, 0
      %p274 = por %p272, %p273
      %p275 = scmp.ne.s32.totalorder %s264, %s267
      %p276 = scmp.eq.s32.totalorder %s39, 1
      %p277 = por %p275, %p276
      %p278 = scmp.ne.s32.totalorder %s267, %s268
      %p279 = scmp.eq.s32.totalorder %s39, 0
      %p280 = por %p278, %p279
      %p281 = scmp.ne.s32.totalorder %s267, %s268
      %p282 = scmp.eq.s32.totalorder %s40, 1
      %p283 = por %p281, %p282
      %p285 = scmp.ne.s32.totalorder %s268, %s284
      %p286 = scmp.eq.s32.totalorder %s40, 0
      %p287 = por %p285, %p286
      %s288 = ssub.s32 %s42, %s49
      %p289 = scmp.eq.s32.totalorder %s288, 0
      %s291 = sadd.s32 %s290, 1
      %s292 = scalar_select %p289, %s290, %s291
      %p295 = pneg %p289
      %p296 = scmp.eq.s32.totalorder %s34, 1
      %p297 = por %p295, %p296
      %p298 = scmp.ne.s32.totalorder %s290, %s293
      %p299 = scmp.eq.s32.totalorder %s34, 0
      %p300 = por %p298, %p299
      %p301 = scmp.ne.s32.totalorder %s290, %s293
      %p302 = scmp.eq.s32.totalorder %s39, 1
      %p303 = por %p301, %p302
      %p304 = scmp.ne.s32.totalorder %s293, %s294
      %p305 = scmp.eq.s32.totalorder %s39, 0
      %p306 = por %p304, %p305
      %p307 = scmp.ne.s32.totalorder %s293, %s294
      %p308 = scmp.eq.s32.totalorder %s40, 1
      %p309 = por %p307, %p308
      %p311 = scmp.ne.s32.totalorder %s294, %s310
      %p312 = scmp.eq.s32.totalorder %s40, 0
      %p313 = por %p311, %p312
      %s314 = ssub.s32 %s42, %s49
      %p315 = scmp.eq.s32.totalorder %s314, 0
      %s317 = sadd.s32 %s316, 1
      %s318 = scalar_select %p315, %s316, %s317
      %p321 = pneg %p315
      %p322 = scmp.eq.s32.totalorder %s34, 1
      %p323 = por %p321, %p322
      %p324 = scmp.ne.s32.totalorder %s316, %s319
      %p325 = scmp.eq.s32.totalorder %s34, 0
      %p326 = por %p324, %p325
      %p327 = scmp.ne.s32.totalorder %s316, %s319
      %p328 = scmp.eq.s32.totalorder %s39, 1
      %p329 = por %p327, %p328
      %p330 = scmp.ne.s32.totalorder %s319, %s320
      %p331 = scmp.eq.s32.totalorder %s39, 0
      %p332 = por %p330, %p331
      %p333 = scmp.ne.s32.totalorder %s319, %s320
      %p334 = scmp.eq.s32.totalorder %s40, 1
      %p335 = por %p333, %p334
      %p337 = scmp.ne.s32.totalorder %s320, %s336
      %p338 = scmp.eq.s32.totalorder %s40, 0
      %p339 = por %p337, %p338
      %s340 = ssub.s32 %s42, %s49
      %p341 = scmp.eq.s32.totalorder %s340, 0
      %s343 = sadd.s32 %s342, 1
      %s344 = scalar_select %p341, %s342, %s343
      %p347 = pneg %p341
      %p348 = scmp.eq.s32.totalorder %s34, 1
      %p349 = por %p347, %p348
      %p350 = scmp.ne.s32.totalorder %s342, %s345
      %p351 = scmp.eq.s32.totalorder %s34, 0
      %p352 = por %p350, %p351
      %p353 = scmp.ne.s32.totalorder %s342, %s345
      %p354 = scmp.eq.s32.totalorder %s39, 1
      %p355 = por %p353, %p354
      %p356 = scmp.ne.s32.totalorder %s345, %s346
      %p357 = scmp.eq.s32.totalorder %s39, 0
      %p358 = por %p356, %p357
      %p359 = scmp.ne.s32.totalorder %s345, %s346
      %p360 = scmp.eq.s32.totalorder %s40, 1
      %p361 = por %p359, %p360
      %p363 = scmp.ne.s32.totalorder %s346, %s362
      %p364 = scmp.eq.s32.totalorder %s40, 0
      %p365 = por %p363, %p364
      %s366 = ssub.s32 %s42, %s49
      %p367 = scmp.eq.s32.totalorder %s366, 0
      %s369 = sadd.s32 %s368, 1
      %s370 = scalar_select %p367, %s368, %s369
      %p373 = pneg %p367
      %p374 = scmp.eq.s32.totalorder %s34, 1
      %p375 = por %p373, %p374
      %p376 = scmp.ne.s32.totalorder %s368, %s371
      %p377 = scmp.eq.s32.totalorder %s34, 0
      %p378 = por %p376, %p377
      %p379 = scmp.ne.s32.totalorder %s368, %s371
      %p380 = scmp.eq.s32.totalorder %s39, 1
      %p381 = por %p379, %p380
      %p382 = scmp.ne.s32.totalorder %s371, %s372
      %p383 = scmp.eq.s32.totalorder %s39, 0
      %p384 = por %p382, %p383
      %p385 = scmp.ne.s32.totalorder %s371, %s372
      %p386 = scmp.eq.s32.totalorder %s40, 1
      %p387 = por %p385, %p386
      %p389 = scmp.ne.s32.totalorder %s372, %s388
      %p390 = scmp.eq.s32.totalorder %s40, 0
      %p391 = por %p389, %p390
      %s393 = sadd.s32 %s392, 1
      %p396 = scmp.eq.s32.totalorder %s34, 1
      %p397 = scmp.ne.s32.totalorder %s392, %s394
      %p398 = scmp.eq.s32.totalorder %s34, 0
      %p399 = por %p397, %p398
      %p400 = scmp.ne.s32.totalorder %s392, %s394
      %p401 = scmp.eq.s32.totalorder %s39, 1
      %p402 = por %p400, %p401
      %p403 = scmp.ne.s32.totalorder %s394, %s395
      %p404 = scmp.eq.s32.totalorder %s39, 0
      %p405 = por %p403, %p404
      %p406 = scmp.ne.s32.totalorder %s394, %s395
      %p407 = scmp.eq.s32.totalorder %s40, 1
      %p408 = por %p406, %p407
      %p410 = scmp.ne.s32.totalorder %s395, %s409
      %p411 = scmp.eq.s32.totalorder %s40, 0
      %p412 = por %p410, %p411
      %s414 = sadd.s32 %s413, 1
      %p417 = scmp.eq.s32.totalorder %s34, 1
      %p418 = scmp.ne.s32.totalorder %s413, %s415
      %p419 = scmp.eq.s32.totalorder %s34, 0
      %p420 = por %p418, %p419
      %p421 = scmp.ne.s32.totalorder %s413, %s415
      %p422 = scmp.eq.s32.totalorder %s39, 1
      %p423 = por %p421, %p422
      %p424 = scmp.ne.s32.totalorder %s415, %s416
      %p425 = scmp.eq.s32.totalorder %s39, 0
      %p426 = por %p424, %p425
      %p427 = scmp.ne.s32.totalorder %s415, %s416
      %p428 = scmp.eq.s32.totalorder %s40, 1
      %p429 = por %p427, %p428
      %p431 = scmp.ne.s32.totalorder %s416, %s430
      %p432 = scmp.eq.s32.totalorder %s40, 0
      %p433 = por %p431, %p432
      %s434 = ssub.s32 %s41, %s53
      %p435 = scmp.eq.s32.totalorder %s434, 0
      %s437 = sadd.s32 %s436, 1
      %s438 = scalar_select %p435, %s436, %s437
      %p441 = pneg %p435
      %p442 = scmp.eq.s32.totalorder %s34, 1
      %p443 = por %p441, %p442
      %p444 = scmp.ne.s32.totalorder %s436, %s439
      %p445 = scmp.eq.s32.totalorder %s34, 0
      %p446 = por %p444, %p445
      %p447 = scmp.ne.s32.totalorder %s436, %s439
      %p448 = scmp.eq.s32.totalorder %s39, 1
      %p449 = por %p447, %p448
      %p450 = scmp.ne.s32.totalorder %s439, %s440
      %p451 = scmp.eq.s32.totalorder %s39, 0
      %p452 = por %p450, %p451
      %p453 = scmp.ne.s32.totalorder %s439, %s440
      %p454 = scmp.eq.s32.totalorder %s40, 1
      %p455 = por %p453, %p454
      %p457 = scmp.ne.s32.totalorder %s440, %s456
      %p458 = scmp.eq.s32.totalorder %s40, 0
      %p459 = por %p457, %p458
      %s460 = ssub.s32 %s41, %s53
      %s461 = ssub.s32 %s42, %s49
      %s462 = sor.u32 %s460, %s461
      %p463 = scmp.eq.s32.totalorder %s462, 0
      %s465 = sadd.s32 %s464, 1
      %s466 = scalar_select %p463, %s464, %s465
      %p469 = pneg %p463
      %p470 = scmp.eq.s32.totalorder %s34, 1
      %p471 = por %p469, %p470
      %p472 = scmp.ne.s32.totalorder %s464, %s467
      %p473 = scmp.eq.s32.totalorder %s34, 0
      %p474 = por %p472, %p473
      %p475 = scmp.ne.s32.totalorder %s464, %s467
      %p476 = scmp.eq.s32.totalorder %s39, 1
      %p477 = por %p475, %p476
      %p478 = scmp.ne.s32.totalorder %s467, %s468
      %p479 = scmp.eq.s32.totalorder %s39, 0
      %p480 = por %p478, %p479
      %p481 = scmp.ne.s32.totalorder %s467, %s468
      %p482 = scmp.eq.s32.totalorder %s40, 1
      %p483 = por %p481, %p482
      %p485 = scmp.ne.s32.totalorder %s468, %s484
      %p486 = scmp.eq.s32.totalorder %s40, 0
      %p487 = por %p485, %p486
      %p488 = scmp.le.s32.totalorder 1, %s34
      %p489 = scmp.lt.s32.totalorder %s34, 3
      %p490 = pnand %p488, %p489
      %p491 = pneg %p490
      // Predicated region
      $region9: #{tpu_custom_call.1} parent=5 // pred_check
        _
      $region10: #{tpu_custom_call.1} parent=5 // pred_check_branch
        %493 = sbr.rel (%p490) target = $region12
      $region11: #{tpu_custom_call.1} parent=5 // pred_region
        %s494 = ssub.s32 %s34, 1
        // Predicated region
        $region13: #{tpu_custom_call.1} parent=11 // pred_check
          %p495 = pneg %p72
        $region14: #{tpu_custom_call.1} parent=11 // pred_check_branch
          %497 = sbr.rel (%p495) target = $region16
        $region15: #{tpu_custom_call.1} parent=11 // pred_region
          %s498 = smul.u32 2, %s43
          %p499 = scmp.lt.s32.totalorder %s498, 1
          %s500 = scalar_select %p499, %s498, 1
          %s501 = scalar_lea.vmem %s1, %s500
          %s502 = smul.u32 2, %s43
        $region16: #{tpu_custom_call.1} parent=11 // pred_fallthru
          _
        // Predicated region
        $region17: #{tpu_custom_call.1} parent=11 // pred_check
          %p503 = pneg %p405
        $region18: #{tpu_custom_call.1} parent=11 // pred_check_branch
          %505 = sbr.rel (%p503) target = $region20
        $region19: #{tpu_custom_call.1} parent=11 // pred_region
          _
        $region20: #{tpu_custom_call.1} parent=11 // pred_fallthru
          _
        // Predicated region
        $region21: #{tpu_custom_call.1} parent=11 // pred_check
          %p506 = pneg %p426
        $region22: #{tpu_custom_call.1} parent=11 // pred_check_branch
          %508 = sbr.rel (%p506) target = $region24
        $region23: #{tpu_custom_call.1} parent=11 // pred_region
          _
        $region24: #{tpu_custom_call.1} parent=11 // pred_fallthru
          _
      $region12: #{tpu_custom_call.1} parent=5 // pred_fallthru
        _
      %p509 = scmp.lt.s32.totalorder %s34, 2
      // Predicated region
      $region25: #{tpu_custom_call.1} parent=5 // pred_check
        %p510 = pneg %p509
      $region26: #{tpu_custom_call.1} parent=5 // pred_check_branch
        %512 = sbr.rel (%p510) target = $region28
      $region27: #{tpu_custom_call.1} parent=5 // pred_region
        // Predicated region
        $region29: #{tpu_custom_call.1} parent=27 // pred_check
          %p513 = pneg %p92
        $region30: #{tpu_custom_call.1} parent=27 // pred_check_branch
          %515 = sbr.rel (%p513) target = $region32
        $region31: #{tpu_custom_call.1} parent=27 // pred_region
          %p516 = scmp.lt.s32.totalorder %s42, 1
          %s517 = scalar_select %p516, %s42, 1
          %s518 = scalar_lea.vmem %s2, %s517
        $region32: #{tpu_custom_call.1} parent=27 // pred_fallthru
          _
        // Predicated region
        $region33: #{tpu_custom_call.1} parent=27 // pred_check
          %p519 = pneg %p118
        $region34: #{tpu_custom_call.1} parent=27 // pred_check_branch
          %521 = sbr.rel (%p519) target = $region36
        $region35: #{tpu_custom_call.1} parent=27 // pred_region
          %p522 = scmp.lt.s32.totalorder %s42, 1
          %s523 = scalar_select %p522, %s42, 1
          %s524 = scalar_lea.vmem %s3, %s523
        $region36: #{tpu_custom_call.1} parent=27 // pred_fallthru
          _
        // Predicated region
        $region37: #{tpu_custom_call.1} parent=27 // pred_check
          %p525 = pneg %p144
        $region38: #{tpu_custom_call.1} parent=27 // pred_check_branch
          %527 = sbr.rel (%p525) target = $region40
        $region39: #{tpu_custom_call.1} parent=27 // pred_region
          %p528 = scmp.lt.s32.totalorder %s42, 1
          %s529 = scalar_select %p528, %s42, 1
          %s530 = smul.addr %s529, 4
          %s531 = smul.addr %s530, 4
          %s532 = scalar_lea.vmem %s4, %s531
        $region40: #{tpu_custom_call.1} parent=27 // pred_fallthru
          _
        // Predicated region
        $region41: #{tpu_custom_call.1} parent=27 // pred_check
          %p533 = pneg %p170
        $region42: #{tpu_custom_call.1} parent=27 // pred_check_branch
          %535 = sbr.rel (%p533) target = $region44
        $region43: #{tpu_custom_call.1} parent=27 // pred_region
          %p536 = scmp.lt.s32.totalorder %s42, 1
          %s537 = scalar_select %p536, %s42, 1
          %s538 = scalar_lea.vmem %s5, %s537
        $region44: #{tpu_custom_call.1} parent=27 // pred_fallthru
          _
        // Predicated region
        $region45: #{tpu_custom_call.1} parent=27 // pred_check
          %p539 = pneg %p196
        $region46: #{tpu_custom_call.1} parent=27 // pred_check_branch
          %541 = sbr.rel (%p539) target = $region48
        $region47: #{tpu_custom_call.1} parent=27 // pred_region
          %p542 = scmp.lt.s32.totalorder %s42, 1
          %s543 = scalar_select %p542, %s42, 1
          %s544 = smul.addr %s543, 4
          %s545 = smul.addr %s544, 4
          %s546 = scalar_lea.vmem %s6, %s545
        $region48: #{tpu_custom_call.1} parent=27 // pred_fallthru
          _
        // Predicated region
        $region49: #{tpu_custom_call.1} parent=27 // pred_check
          %p547 = pneg %p222
        $region50: #{tpu_custom_call.1} parent=27 // pred_check_branch
          %549 = sbr.rel (%p547) target = $region52
        $region51: #{tpu_custom_call.1} parent=27 // pred_region
          %p550 = scmp.lt.s32.totalorder %s42, 1
          %s551 = scalar_select %p550, %s42, 1
          %s552 = scalar_lea.vmem %s7, %s551
        $region52: #{tpu_custom_call.1} parent=27 // pred_fallthru
          _
        // Predicated region
        $region53: #{tpu_custom_call.1} parent=27 // pred_check
          %p553 = pneg %p248
        $region54: #{tpu_custom_call.1} parent=27 // pred_check_branch
          %555 = sbr.rel (%p553) target = $region56
        $region55: #{tpu_custom_call.1} parent=27 // pred_region
          %p556 = scmp.lt.s32.totalorder %s42, 1
          %s557 = scalar_select %p556, %s42, 1
          %s558 = scalar_lea.vmem %s8, %s557
        $region56: #{tpu_custom_call.1} parent=27 // pred_fallthru
          _
        // Predicated region
        $region57: #{tpu_custom_call.1} parent=27 // pred_check
          %p559 = pneg %p274
        $region58: #{tpu_custom_call.1} parent=27 // pred_check_branch
          %561 = sbr.rel (%p559) target = $region60
        $region59: #{tpu_custom_call.1} parent=27 // pred_region
          %s562 = sand.u32 %s264, 1
          %s563 = scalar_lea.sflag [#allocation5], %s562
          %s564 = sand.u32 %s264, 1
          %s565 = scalar_lea.vmem [#allocation4], %s564
          %s567 = ssub.s32 16, 16
          %568 = vsyncadd %s563, %s567
          %s569 = smul.addr %s42, 16
          %s570 = scalar_lea.hbm %s9, %s569
          %s572 = sshll.u32 %s565, 4
          %s573 = int_to_ptr.vmem [resolvable:$true] %s572
          %575 = dma.hbm_to_vmem [thread:$0]  %s570, 16, %s573, %s563
        $region60: #{tpu_custom_call.1} parent=27 // pred_fallthru
          _
        // Predicated region
        $region61: #{tpu_custom_call.1} parent=27 // pred_check
          %p576 = pneg %p300
        $region62: #{tpu_custom_call.1} parent=27 // pred_check_branch
          %578 = sbr.rel (%p576) target = $region64
        $region63: #{tpu_custom_call.1} parent=27 // pred_region
          %p579 = scmp.lt.s32.totalorder %s42, 1
          %s580 = scalar_select %p579, %s42, 1
          %s581 = smul.addr %s580, 4
          %s582 = smul.addr %s581, 4
          %s583 = scalar_lea.vmem %s10, %s582
        $region64: #{tpu_custom_call.1} parent=27 // pred_fallthru
          _
        // Predicated region
        $region65: #{tpu_custom_call.1} parent=27 // pred_check
          %p584 = pneg %p326
        $region66: #{tpu_custom_call.1} parent=27 // pred_check_branch
          %586 = sbr.rel (%p584) target = $region68
        $region67: #{tpu_custom_call.1} parent=27 // pred_region
          %s587 = sand.u32 %s316, 1
          %s588 = scalar_lea.sflag [#allocation8], %s587
          %s589 = sand.u32 %s316, 1
          %s590 = scalar_lea.vmem [#allocation7], %s589
          %s592 = ssub.s32 16, 16
          %593 = vsyncadd %s588, %s592
          %s594 = smul.addr %s42, 16
          %s595 = scalar_lea.hbm %s11, %s594
          %s597 = sshll.u32 %s590, 4
          %s598 = int_to_ptr.vmem [resolvable:$true] %s597
          %600 = dma.hbm_to_vmem [thread:$0]  %s595, 16, %s598, %s588
        $region68: #{tpu_custom_call.1} parent=27 // pred_fallthru
          _
        // Predicated region
        $region69: #{tpu_custom_call.1} parent=27 // pred_check
          %p601 = pneg %p352
        $region70: #{tpu_custom_call.1} parent=27 // pred_check_branch
          %603 = sbr.rel (%p601) target = $region72
        $region71: #{tpu_custom_call.1} parent=27 // pred_region
          %p604 = scmp.lt.s32.totalorder %s42, 1
          %s605 = scalar_select %p604, %s42, 1
          %s606 = smul.addr %s605, 8
          %s607 = smul.addr %s606, 4
          %s608 = scalar_lea.vmem %s12, %s607
        $region72: #{tpu_custom_call.1} parent=27 // pred_fallthru
          _
        // Predicated region
        $region73: #{tpu_custom_call.1} parent=27 // pred_check
          %p609 = pneg %p378
        $region74: #{tpu_custom_call.1} parent=27 // pred_check_branch
          %611 = sbr.rel (%p609) target = $region76
        $region75: #{tpu_custom_call.1} parent=27 // pred_region
          %p612 = scmp.lt.s32.totalorder %s42, 1
          %s613 = scalar_select %p612, %s42, 1
          %s614 = scalar_lea.vmem %s13, %s613
        $region76: #{tpu_custom_call.1} parent=27 // pred_fallthru
          _
      $region28: #{tpu_custom_call.1} parent=5 // pred_fallthru
        _
      %p615 = scmp.le.s32.totalorder 1, %s34
      %p616 = scmp.lt.s32.totalorder %s34, 3
      %p617 = pnand %p615, %p616
      %p618 = pneg %p617
      // Predicated region
      $region77: #{tpu_custom_call.1} parent=5 // pred_check
        _
      $region78: #{tpu_custom_call.1} parent=5 // pred_check_branch
        %620 = sbr.rel (%p617) target = $region80
      $region79: #{tpu_custom_call.1} parent=5 // pred_region
        %s621 = ssub.s32 %s34, 1
        %s622 = sand.u32 %s267, 1
        %s623 = scalar_lea.sflag [#allocation5], %s622
        %s624 = sand.u32 %s267, 1
        %s625 = scalar_lea.vmem [#allocation4], %s624
        // Predicated region
        $region81: #{tpu_custom_call.1} parent=79 // pred_check
          %p626 = pneg %p280
        $region82: #{tpu_custom_call.1} parent=79 // pred_check_branch
          %628 = sbr.rel (%p626) target = $region84
        $region83: #{tpu_custom_call.1} parent=79 // pred_region
          %629 = dma.done %s623, 16
        $region84: #{tpu_custom_call.1} parent=79 // pred_fallthru
          _
        %s630 = sand.u32 %s319, 1
        %s631 = scalar_lea.sflag [#allocation8], %s630
        %s632 = sand.u32 %s319, 1
        %s633 = scalar_lea.vmem [#allocation7], %s632
        // Predicated region
        $region85: #{tpu_custom_call.1} parent=79 // pred_check
          %p634 = pneg %p332
        $region86: #{tpu_custom_call.1} parent=79 // pred_check_branch
          %636 = sbr.rel (%p634) target = $region88
        $region87: #{tpu_custom_call.1} parent=79 // pred_region
          %637 = dma.done %s631, 16
        $region88: #{tpu_custom_call.1} parent=79 // pred_fallthru
          _
        %s638 = smul.u32 2, %s43
        %p639 = scmp.lt.s32.totalorder %s638, 1
        %s640 = scalar_select %p639, %s638, 1
        %s641 = scalar_lea.vmem %s1, %s640
        %p642 = pneg %p72
        %p643 = pneg %p69
        %p644 = scmp.lt.s32.totalorder %s44, 1
        %s645 = scalar_select %p644, %s44, 1
        %s646 = scalar_lea.vmem %s2, %s645
        %p647 = pneg %p98
        %p648 = pneg %p95
        %p649 = scmp.lt.s32.totalorder %s44, 1
        %s650 = scalar_select %p649, %s44, 1
        %s651 = scalar_lea.vmem %s3, %s650
        %p652 = pneg %p124
        %p653 = pneg %p121
        %p654 = scmp.lt.s32.totalorder %s44, 1
        %s655 = scalar_select %p654, %s44, 1
        %s656 = smul.addr %s655, 4
        %s657 = smul.addr %s656, 4
        %s658 = scalar_lea.vmem %s4, %s657
        %p659 = pneg %p150
        %p660 = pneg %p147
        %p661 = scmp.lt.s32.totalorder %s44, 1
        %s662 = scalar_select %p661, %s44, 1
        %s663 = scalar_lea.vmem %s5, %s662
        %p664 = pneg %p176
        %p665 = pneg %p173
        %p666 = scmp.lt.s32.totalorder %s44, 1
        %s667 = scalar_select %p666, %s44, 1
        %s668 = smul.addr %s667, 4
        %s669 = smul.addr %s668, 4
        %s670 = scalar_lea.vmem %s6, %s669
        %p671 = pneg %p202
        %p672 = pneg %p199
        %p673 = scmp.lt.s32.totalorder %s44, 1
        %s674 = scalar_select %p673, %s44, 1
        %s675 = scalar_lea.vmem %s7, %s674
        %p676 = pneg %p228
        %p677 = pneg %p225
        %p678 = scmp.lt.s32.totalorder %s44, 1
        %s679 = scalar_select %p678, %s44, 1
        %s680 = scalar_lea.vmem %s8, %s679
        %p681 = pneg %p254
        %p682 = pneg %p251
        %s683 = sand.u32 %s267, 1
        %s684 = scalar_lea.sflag [#allocation5], %s683
        %s685 = sand.u32 %s267, 1
        %s686 = scalar_lea.vmem [#allocation4], %s685
        %p687 = pneg %p280
        %p688 = pneg %p277
        %p689 = scmp.lt.s32.totalorder %s44, 1
        %s690 = scalar_select %p689, %s44, 1
        %s691 = smul.addr %s690, 4
        %s692 = smul.addr %s691, 4
        %s693 = scalar_lea.vmem %s10, %s692
        %p694 = pneg %p306
        %p695 = pneg %p303
        %s696 = sand.u32 %s319, 1
        %s697 = scalar_lea.sflag [#allocation8], %s696
        %s698 = sand.u32 %s319, 1
        %s699 = scalar_lea.vmem [#allocation7], %s698
        %p700 = pneg %p332
        %p701 = pneg %p329
        %p702 = scmp.lt.s32.totalorder %s44, 1
        %s703 = scalar_select %p702, %s44, 1
        %s704 = smul.addr %s703, 8
        %s705 = smul.addr %s704, 4
        %s706 = scalar_lea.vmem %s12, %s705
        %p707 = pneg %p358
        %p708 = pneg %p355
        %p709 = scmp.lt.s32.totalorder %s44, 1
        %s710 = scalar_select %p709, %s44, 1
        %s711 = scalar_lea.vmem %s13, %s710
        %p712 = pneg %p384
        %p713 = pneg %p381
        %p714 = pneg %p405
        %p715 = pneg %p402
        %p716 = pneg %p426
        %p717 = pneg %p423
        %p718 = pneg %p452
        %p719 = pneg %p449
        %p720 = pneg %p480
        %p721 = pneg %p477
        %s722 = sand.u32 %s467, 1
        %s723 = scalar_lea.sflag [#allocation11], %s722
        %s724 = sand.u32 %s467, 1
        %s725 = smul.addr %s724, 32
        %s726 = scalar_lea.vmem [#allocation10], %s725
        %s727 = smul.u32 2, %s43
        %p728 = scmp.lt.s32.totalorder %s727, 1
        %s729 = scalar_select %p728, %s727, 1
        %s730 = scalar_lea.vmem %s1, %s729
        %s731 = smul.u32 2, %s43
        %p732 = scmp.lt.s32.totalorder %s44, 1
        %s733 = scalar_select %p732, %s44, 1
        %s734 = scalar_lea.vmem %s2, %s733
        %p735 = scmp.lt.s32.totalorder %s44, 1
        %s736 = scalar_select %p735, %s44, 1
        %s737 = scalar_lea.vmem %s3, %s736
        %p738 = scmp.lt.s32.totalorder %s44, 1
        %s739 = scalar_select %p738, %s44, 1
        %s740 = smul.addr %s739, 4
        %s741 = smul.addr %s740, 4
        %s742 = scalar_lea.vmem %s4, %s741
        %p743 = scmp.lt.s32.totalorder %s44, 1
        %s744 = scalar_select %p743, %s44, 1
        %s745 = scalar_lea.vmem %s5, %s744
        %p746 = scmp.lt.s32.totalorder %s44, 1
        %s747 = scalar_select %p746, %s44, 1
        %s748 = smul.addr %s747, 4
        %s749 = smul.addr %s748, 4
        %s750 = scalar_lea.vmem %s6, %s749
        %p751 = scmp.lt.s32.totalorder %s44, 1
        %s752 = scalar_select %p751, %s44, 1
        %s753 = scalar_lea.vmem %s7, %s752
        %p754 = scmp.lt.s32.totalorder %s44, 1
        %s755 = scalar_select %p754, %s44, 1
        %s756 = scalar_lea.vmem %s8, %s755
        %p757 = scmp.lt.s32.totalorder %s44, 1
        %s758 = scalar_select %p757, %s44, 1
        %s759 = smul.addr %s758, 4
        %s760 = smul.addr %s759, 4
        %s761 = scalar_lea.vmem %s10, %s760
        %p762 = scmp.lt.s32.totalorder %s44, 1
        %s763 = scalar_select %p762, %s44, 1
        %s764 = smul.addr %s763, 8
        %s765 = smul.addr %s764, 4
        %s766 = scalar_lea.vmem %s12, %s765
        %p767 = scmp.lt.s32.totalorder %s44, 1
        %s768 = scalar_select %p767, %s44, 1
        %s769 = scalar_lea.vmem %s13, %s768
        %s770 = smul.u32 2, %s43
        %s771 = smul.u32 2, %s43
        %p773 = scmp.eq.s32.totalorder %s44, 0
        // Predicated region
        $region89: #{tpu_custom_call.1} parent=79 // pred_check
          %p774 = pneg %p773
        $region90: #{tpu_custom_call.1} parent=79 // pred_check_branch
          %776 = sbr.rel (%p774) target = $region92
        $region91: #{tpu_custom_call.1} parent=79 // pred_region
          %s777 = smul.u32 %s43, 16
          %s778 = smul.addr %s777, 16
          %s779 = scalar_lea.hbm %s0, %s778
          // Predicated region
          $region93: #{tpu_custom_call.1} parent=91 // pred_check
            _
          $region94: #{tpu_custom_call.1} parent=91 // pred_check_branch
            %781 = sbr.rel target = $region96
          $region95: #{tpu_custom_call.1} parent=91 // pred_region
            %782 = sst [smem:[#allocation14]] [#allocation13]
            %783 = sst [smem:[#allocation15]] [#allocation12]
          $region96: #{tpu_custom_call.1} parent=91 // pred_fallthru
            _
          %785 = shalt.err (0)
          %s787 = sshll.u32 [#allocation2], 4
          %s788 = int_to_ptr.vmem [resolvable:$true] %s787
          %790 = dma.hbm_to_vmem [thread:$0]  %s779, 256, %s788, [#allocation3]
          %s791 = smul.u32 16, 1
          %s792 = sshll.u32 %s791, 4
          %793 = dma.done [#allocation3], %s792
        $region92: #{tpu_custom_call.1} parent=79 // pred_fallthru
          _
        %v794 = vld [vmem:[#allocation2] sm:$0xff]
        %v795 = vld [vmem:[#allocation2 + $0x8] sm:$0xff]
        %v796 = vld [vmem:[%s730] sm:$0x1]
        %v797 = vld [vmem:[%s730 + $0x1] sm:$0x1]
        %vm798 = vcmp.eq.f32.partialorder %v796, 0.0
        %vm799 = vcmp.eq.f32.partialorder %v797, 0.0
        %v800 = vsel %vm798, -1e+09, 0.0
        %v801 = vsel %vm799, -1e+09, 0.0
        %v804 = vlaneseq
        %v805 = vshrl.u32 %v804, 7
        %v806 = vsub.s32 0, %v805
        %v807 = vrot.slane %v800, %v806
        %v808 = vlaneseq
        %v809 = vshrl.u32 %v808, 7
        %v810 = vsub.s32 0, %v809
        %v811 = vrot.slane %v801, %v810
        %v814 = vld [vmem:[%s734] sm:$0x1]
        %v815 = vld [vmem:[%s737] sm:$0x1]
        %vm816 = vcmask 261120
        %v817 = vsel %vm816, %v794, 0.0
        %818 = vadd.xlane.f32.xlu0 %v817
        %v819 = vpop.xlane.xlu0 %818
        %v820 = vsel %vm816, %v795, 0.0
        %821 = vadd.xlane.f32.xlu0 %v820
        %v822 = vpop.xlane.xlu0 %821
        %v823 = vrcp.pop 32.0
        %v824 = vmul.f32 %v819, %v823
        %v825 = vmul.f32 %v822, %v823
        %v826 = vsub.f32 %v794, %v824
        %v827 = vsub.f32 %v795, %v825
        %v828 = vmul.f32 %v826, %v826
        %v829 = vmul.f32 %v827, %v827
        %v830 = vsel %vm816, %v828, 0.0
        %831 = vadd.xlane.f32.xlu0 %v830
        %v832 = vpop.xlane.xlu0 %831
        %v833 = vsel %vm816, %v829, 0.0
        %834 = vadd.xlane.f32.xlu0 %v833
        %v835 = vpop.xlane.xlu0 %834
        %v836 = vmul.f32 %v832, %v823
        %v837 = vmul.f32 %v835, %v823
        %v838 = vadd.f32 %v836, 1e-05
        %v839 = vadd.f32 %v837, 1e-05
        %v840 = vrsqrt.pop %v838
        %v841 = vrsqrt.pop %v839
        %v842 = vmul.f32 %v826, %v840
        %v843 = vmul.f32 %v827, %v841
        %v845 = vlaneseq
        %v846 = vshrl.u32 %v845, 7
        %v847 = vsub.s32 0, %v846
        %v848 = vrot.slane %v814, %v847
        %v850 = vmul.f32 %v842, %v848
        %v851 = vmul.f32 %v843, %v848
        %v853 = vlaneseq
        %v854 = vshrl.u32 %v853, 7
        %v855 = vsub.s32 0, %v854
        %v856 = vrot.slane %v815, %v855
        %v858 = vadd.f32 %v850, %v856
        %v859 = vadd.f32 %v851, %v856
        %v860 = vpack.c.bf16 %v859, %v858
        %v861 = vld [vmem:[%s742] sm:$0xf]
        %v862 = vld [vmem:[%s742 + $0x4] sm:$0xf]
        %v863 = vld [vmem:[%s742 + $0x8] sm:$0xf]
        %v864 = vld [vmem:[%s742 + $0xc] sm:$0xf]
        %v865 = vld [vmem:[%s745] sm:$0x1]
        %v867 = vlaneseq
        %v868 = vshrl.u32 %v867, 7
        %v869 = vsub.s32 0, %v868
        %v870 = vrot.slane %v865, %v869
        %v876 = vunpack.c.l.b16 %v861
        %v877 = vunpack.c.l.b16 %v862
        %v878 = vunpack.c.l.b16 %v863
        %v879 = vunpack.c.l.b16 %v864
        %v880 = vpack.c.b16 %v877, %v876
        %v881 = vpack.c.b16 %v879, %v878
        %v885 = vsel %vm816, %v860, 0
        %887 = vmatprep.subr.bf16.mxu0 0
        %888 = vmatpush1.bf16.msra.mxu0 %v880
        %889 = vmatprep.subr.bf16.mxu0 0
        %890 = vmatpush1.bf16.msra.mxu0 %v881
        %891 = vmatprep.subr.bf16.mxu0 0
        %892 = vmatpush1.bf16.msra.mxu0 0
        %893 = vmatprep.subr.bf16.mxu0 0
        %894 = vmatpush1.bf16.msra.mxu0 0
        %895 = vmatprep.subr.bf16.mxu0 0
        %896 = vmatpush1.bf16.msra.mxu0 0
        %897 = vmatprep.subr.bf16.mxu0 0
        %898 = vmatpush1.bf16.msra.mxu0 0
        %899 = vmatprep.subr.bf16.mxu0 0
        %900 = vmatpush1.bf16.msra.mxu0 0
        %901 = vmatprep.subr.bf16.mxu0 0
        %902 = vmatpush1.bf16.msra.mxu0 0
        %903 = vmatprep.subr.bf16.mxu0 0
        %904 = vmatpush1.bf16.msra.mxu0 0
        %905 = vmatprep.subr.bf16.mxu0 0
        %906 = vmatpush1.bf16.msra.mxu0 0
        %907 = vmatprep.subr.bf16.mxu0 0
        %908 = vmatpush1.bf16.msra.mxu0 0
        %909 = vmatprep.subr.bf16.mxu0 0
        %910 = vmatpush1.bf16.msra.mxu0 0
        %911 = vmatprep.subr.bf16.mxu0 0
        %912 = vmatpush1.bf16.msra.mxu0 0
        %913 = vmatprep.subr.bf16.mxu0 0
        %914 = vmatpush1.bf16.msra.mxu0 0
        %915 = vmatprep.subr.bf16.mxu0 0
        %916 = vmatpush1.bf16.msra.mxu0 0
        %917 = vmatprep.subr.bf16.mxu0 0
        %918 = vmatpush1.bf16.msra.mxu0 0
        %919 = vmatprep.mubr.bf16.mxu0 0
        %920 = vmatmul.mubr.bf16.gmra.mrb[0].mxu0 %v885
        %v921 = vpop.f32.mrb[0].mxu0
        %v922 = vadd.f32 %v870, %v921
        %v923 = vpop.f32.mrb[0].mxu0
        %v924 = vpop.f32.mrb[0].mxu0
        %v925 = vadd.f32 %v870, %v924
        %v926 = vpop.f32.mrb[0].mxu0
        %927 = vdwg.mxu0
        %v928 = vmul.f32 %v922, 0.35355338
        %v929 = vmul.f32 %v925, 0.35355338
        %v930 = vpack.c.bf16 %v929, %v928
        %v932 = vunpack.c.l.b16 %v930
        %v933 = vunpack.c.h.b16 %v930
        %v934 = vpack.c.b16 %v932, %v932
        %v935 = vpack.c.b16 %v933, %v933
        %v936 = vpack.c.bf16 %v925, %v922
        %v938 = vunpack.c.l.b16 %v936
        %v939 = vunpack.c.h.b16 %v936
        %v940 = vpack.c.b16 %v938, %v938
        %941 = vrot.lane.b32.xlu0 %v940, 96
        %v942 = vpop.permute.xlu0 %941
        %vm943 = vcmask 64512
        %v945 = vsel %vm943, %v934, 0
        %v948 = vsel %vm943, %v942, 0
        %950 = vmatprep.subr.bf16.mxu0 0
        %951 = vmatpush1.bf16.xpose.msra.mxu0 %v948
        %952 = vmatprep.subr.bf16.mxu0 0
        %953 = vmatpush1.bf16.xpose.msra.mxu0 0
        %954 = vmatprep.subr.bf16.mxu0 0
        %955 = vmatpush1.bf16.xpose.msra.mxu0 0
        %956 = vmatprep.subr.bf16.mxu0 0
        %957 = vmatpush1.bf16.xpose.msra.mxu0 0
        %958 = vmatprep.subr.bf16.mxu0 0
        %959 = vmatpush1.bf16.xpose.msra.mxu0 0
        %960 = vmatprep.subr.bf16.mxu0 0
        %961 = vmatpush1.bf16.xpose.msra.mxu0 0
        %962 = vmatprep.subr.bf16.mxu0 0
        %963 = vmatpush1.bf16.xpose.msra.mxu0 0
        %964 = vmatprep.subr.bf16.mxu0 0
        %965 = vmatpush1.bf16.xpose.msra.mxu0 0
        %966 = vmatprep.subr.bf16.mxu0 0
        %967 = vmatpush1.bf16.xpose.msra.mxu0 0
        %968 = vmatprep.subr.bf16.mxu0 0
        %969 = vmatpush1.bf16.xpose.msra.mxu0 0
        %970 = vmatprep.subr.bf16.mxu0 0
        %971 = vmatpush1.bf16.xpose.msra.mxu0 0
        %972 = vmatprep.subr.bf16.mxu0 0
        %973 = vmatpush1.bf16.xpose.msra.mxu0 0
        %974 = vmatprep.subr.bf16.mxu0 0
        %975 = vmatpush1.bf16.xpose.msra.mxu0 0
        %976 = vmatprep.subr.bf16.mxu0 0
        %977 = vmatpush1.bf16.xpose.msra.mxu0 0
        %978 = vmatprep.subr.bf16.mxu0 0
        %979 = vmatpush1.bf16.xpose.msra.mxu0 0
        %980 = vmatprep.subr.bf16.mxu0 0
        %981 = vmatpush1.bf16.xpose.msra.mxu0 0
        %982 = vmatprep.mubr.bf16.mxu0 0
        %983 = vmatmul.mubr.bf16.gmra.mrb[0].mxu0 %v945
        %v984 = vpop.f32.mrb[0].mxu0
        %v985 = vadd.f32 %v807, %v984
        %v986 = vpop.f32.mrb[0].mxu0
        %v987 = vpop.f32.mrb[0].mxu0
        %v988 = vpop.f32.mrb[0].mxu0
        %989 = vdwg.mxu0
        %v990 = vpack.c.b16 %v939, %v939
        %991 = vrot.lane.b32.xlu0 %v990, 96
        %v992 = vpop.permute.xlu0 %991
        %v994 = vsel %vm943, %v935, 0
        %v997 = vsel %vm943, %v992, 0
        %999 = vmatprep.subr.bf16.mxu0 0
        %1000 = vmatpush1.bf16.xpose.msra.mxu0 %v997
        %1001 = vmatprep.subr.bf16.mxu0 0
        %1002 = vmatpush1.bf16.xpose.msra.mxu0 0
        %1003 = vmatprep.subr.bf16.mxu0 0
        %1004 = vmatpush1.bf16.xpose.msra.mxu0 0
        %1005 = vmatprep.subr.bf16.mxu0 0
        %1006 = vmatpush1.bf16.xpose.msra.mxu0 0
        %1007 = vmatprep.subr.bf16.mxu0 0
        %1008 = vmatpush1.bf16.xpose.msra.mxu0 0
        %1009 = vmatprep.subr.bf16.mxu0 0
        %1010 = vmatpush1.bf16.xpose.msra.mxu0 0
        %1011 = vmatprep.subr.bf16.mxu0 0
        %1012 = vmatpush1.bf16.xpose.msra.mxu0 0
        %1013 = vmatprep.subr.bf16.mxu0 0
        %1014 = vmatpush1.bf16.xpose.msra.mxu0 0
        %1015 = vmatprep.subr.bf16.mxu0 0
        %1016 = vmatpush1.bf16.xpose.msra.mxu0 0
        %1017 = vmatprep.subr.bf16.mxu0 0
        %1018 = vmatpush1.bf16.xpose.msra.mxu0 0
        %1019 = vmatprep.subr.bf16.mxu0 0
        %1020 = vmatpush1.bf16.xpose.msra.mxu0 0
        %1021 = vmatprep.subr.bf16.mxu0 0
        %1022 = vmatpush1.bf16.xpose.msra.mxu0 0
        %1023 = vmatprep.subr.bf16.mxu0 0
        %1024 = vmatpush1.bf16.xpose.msra.mxu0 0
        %1025 = vmatprep.subr.bf16.mxu0 0
        %1026 = vmatpush1.bf16.xpose.msra.mxu0 0
        %1027 = vmatprep.subr.bf16.mxu0 0
        %1028 = vmatpush1.bf16.xpose.msra.mxu0 0
        %1029 = vmatprep.subr.bf16.mxu0 0
        %1030 = vmatpush1.bf16.xpose.msra.mxu0 0
        %1031 = vmatprep.mubr.bf16.mxu0 0
        %1032 = vmatmul.mubr.bf16.gmra.mrb[0].mxu0 %v994
        %v1033 = vpop.f32.mrb[0].mxu0
        %v1034 = vadd.f32 %v811, %v1033
        %v1035 = vpop.f32.mrb[0].mxu0
        %v1036 = vpop.f32.mrb[0].mxu0
        %v1037 = vpop.f32.mrb[0].mxu0
        %1038 = vdwg.mxu0
        %v1039 = vsel %vm943, %v985, -inf
        %1040 = vmax.xlane.f32.xlu0 %v1039
        %v1041 = vpop.xlane.xlu0 %1040
        %v1042 = vsel %vm943, %v1034, -inf
        %1043 = vmax.xlane.f32.xlu0 %v1042
        %v1044 = vpop.xlane.xlu0 %1043
        %v1045 = vsub.f32 %v985, %v1041
        %v1046 = vsub.f32 %v1034, %v1044
        %v1047 = vpack.c.bf16 %v1045, %v1045
        %v1048 = vpack.c.bf16 %v1046, %v1046
        %v1050 = vmul.bf16 %v1047, 1069105081
        %v1051 = vpow.bf16.pop %v1050
        %v1053 = vmul.bf16 %v1048, 1069105081
        %v1054 = vpow.bf16.pop %v1053
        %v1055 = vunpack.c.l.bf16 %v1051
        %v1056 = vunpack.c.l.bf16 %v1054
        %v1057 = vsel %vm943, %v1055, 0.0
        %1058 = vadd.xlane.f32.xlu0 %v1057
        %v1059 = vpop.xlane.xlu0 %1058
        %v1060 = vsel %vm943, %v1056, 0.0
        %1061 = vadd.xlane.f32.xlu0 %v1060
        %v1062 = vpop.xlane.xlu0 %1061
        %v1063 = vrcp.pop %v1059
        %v1064 = vrcp.pop %v1062
        %v1065 = vmul.f32 %v1059, %v1063
        %v1066 = vmul.f32 %v1062, %v1064
        %v1067 = vsub.f32 2.0, %v1065
        %v1068 = vsub.f32 2.0, %v1066
        %v1069 = vmul.f32 %v1063, %v1067
        %v1070 = vmul.f32 %v1064, %v1068
        %v1071 = vmul.f32 %v1055, %v1069
        %v1072 = vmul.f32 %v1056, %v1070
        %v1073 = vpack.c.bf16 %v1071, %v1071
        %v1074 = vpack.c.bf16 %v1072, %v1072
        %vm1075 = vcmask 60416
        %1076 = vst.msk [vmem:[%s726] sm:$0xf] %vm1075, %v1073
        %1077 = vst.msk [vmem:[%s726 + $0x10] sm:$0xf] %vm1075, %v1074
        %1078 = vrot.lane.b32.xlu0 %v940, 64
        %v1079 = vpop.permute.xlu0 %1078
        %v1081 = vsel %vm943, %v1051, 0
        %vm1083 = vcmask 1043456
        %v1085 = vsel %vm1083, %v1079, 0
        %1087 = vmatprep.subr.bf16.mxu0 0
        %1088 = vmatpush1.bf16.msra.mxu0 %v1085
        %1089 = vmatprep.subr.bf16.mxu0 0
        %1090 = vmatpush1.bf16.msra.mxu0 0
        %1091 = vmatprep.subr.bf16.mxu0 0
        %1092 = vmatpush1.bf16.msra.mxu0 0
        %1093 = vmatprep.subr.bf16.mxu0 0
        %1094 = vmatpush1.bf16.msra.mxu0 0
        %1095 = vmatprep.subr.bf16.mxu0 0
        %1096 = vmatpush1.bf16.msra.mxu0 0
        %1097 = vmatprep.subr.bf16.mxu0 0
        %1098 = vmatpush1.bf16.msra.mxu0 0
        %1099 = vmatprep.subr.bf16.mxu0 0
        %1100 = vmatpush1.bf16.msra.mxu0 0
        %1101 = vmatprep.subr.bf16.mxu0 0
        %1102 = vmatpush1.bf16.msra.mxu0 0
        %1103 = vmatprep.subr.bf16.mxu0 0
        %1104 = vmatpush1.bf16.msra.mxu0 0
        %1105 = vmatprep.subr.bf16.mxu0 0
        %1106 = vmatpush1.bf16.msra.mxu0 0
        %1107 = vmatprep.subr.bf16.mxu0 0
        %1108 = vmatpush1.bf16.msra.mxu0 0
        %1109 = vmatprep.subr.bf16.mxu0 0
        %1110 = vmatpush1.bf16.msra.mxu0 0
        %1111 = vmatprep.subr.bf16.mxu0 0
        %1112 = vmatpush1.bf16.msra.mxu0 0
        %1113 = vmatprep.subr.bf16.mxu0 0
        %1114 = vmatpush1.bf16.msra.mxu0 0
        %1115 = vmatprep.subr.bf16.mxu0 0
        %1116 = vmatpush1.bf16.msra.mxu0 0
        %1117 = vmatprep.subr.bf16.mxu0 0
        %1118 = vmatpush1.bf16.msra.mxu0 0
        %1119 = vmatprep.mubr.bf16.mxu0 0
        %1120 = vmatmul.mubr.bf16.gmra.mrb[0].mxu0 %v1081
        %v1121 = vpop.f32.mrb[0].mxu0
        %v1122 = vadd.f32 0.0, %v1121
        %v1123 = vpop.f32.mrb[0].mxu0
        %v1124 = vpop.f32.mrb[0].mxu0
        %v1125 = vpop.f32.mrb[0].mxu0
        %1126 = vdwg.mxu0
        %1127 = vrot.lane.b32.xlu0 %v990, 64
        %v1128 = vpop.permute.xlu0 %1127
        %v1130 = vsel %vm943, %v1054, 0
        %v1133 = vsel %vm1083, %v1128, 0
        %1135 = vmatprep.subr.bf16.mxu0 0
        %1136 = vmatpush1.bf16.msra.mxu0 %v1133
        %1137 = vmatprep.subr.bf16.mxu0 0
        %1138 = vmatpush1.bf16.msra.mxu0 0
        %1139 = vmatprep.subr.bf16.mxu0 0
        %1140 = vmatpush1.bf16.msra.mxu0 0
        %1141 = vmatprep.subr.bf16.mxu0 0
        %1142 = vmatpush1.bf16.msra.mxu0 0
        %1143 = vmatprep.subr.bf16.mxu0 0
        %1144 = vmatpush1.bf16.msra.mxu0 0
        %1145 = vmatprep.subr.bf16.mxu0 0
        %1146 = vmatpush1.bf16.msra.mxu0 0
        %1147 = vmatprep.subr.bf16.mxu0 0
        %1148 = vmatpush1.bf16.msra.mxu0 0
        %1149 = vmatprep.subr.bf16.mxu0 0
        %1150 = vmatpush1.bf16.msra.mxu0 0
        %1151 = vmatprep.subr.bf16.mxu0 0
        %1152 = vmatpush1.bf16.msra.mxu0 0
        %1153 = vmatprep.subr.bf16.mxu0 0
        %1154 = vmatpush1.bf16.msra.mxu0 0
        %1155 = vmatprep.subr.bf16.mxu0 0
        %1156 = vmatpush1.bf16.msra.mxu0 0
        %1157 = vmatprep.subr.bf16.mxu0 0
        %1158 = vmatpush1.bf16.msra.mxu0 0
        %1159 = vmatprep.subr.bf16.mxu0 0
        %1160 = vmatpush1.bf16.msra.mxu0 0
        %1161 = vmatprep.subr.bf16.mxu0 0
        %1162 = vmatpush1.bf16.msra.mxu0 0
        %1163 = vmatprep.subr.bf16.mxu0 0
        %1164 = vmatpush1.bf16.msra.mxu0 0
        %1165 = vmatprep.subr.bf16.mxu0 0
        %1166 = vmatpush1.bf16.msra.mxu0 0
        %1167 = vmatprep.mubr.bf16.mxu0 0
        %1168 = vmatmul.mubr.bf16.gmra.mrb[0].mxu0 %v1130
        %v1169 = vpop.f32.mrb[0].mxu0
        %v1170 = vadd.f32 0.0, %v1169
        %v1171 = vpop.f32.mrb[0].mxu0
        %v1172 = vpop.f32.mrb[0].mxu0
        %v1173 = vpop.f32.mrb[0].mxu0
        %1174 = vdwg.mxu0
        %v1175 = vmul.f32 %v1122, %v1069
        %v1176 = vmul.f32 %v1170, %v1070
        %v1177 = vpack.c.bf16 %v1176, %v1175
        %v1178 = vld [vmem:[%s750] sm:$0xf]
        %1179 = vrot.lane.b32.xlu0 %v934, 120
        %v1180 = vpop.permute.xlu0 %1179
        %1181 = vrot.lane.b32.xlu0 %v940, 88
        %v1182 = vpop.permute.xlu0 %1181
        %v1184 = vsel %vm943, %v1180, 0
        %v1187 = vsel %vm943, %v1182, 0
        %1189 = vmatprep.subr.bf16.mxu0 0
        %1190 = vmatpush1.bf16.xpose.msra.mxu0 %v1187
        %1191 = vmatprep.subr.bf16.mxu0 0
        %1192 = vmatpush1.bf16.xpose.msra.mxu0 0
        %1193 = vmatprep.subr.bf16.mxu0 0
        %1194 = vmatpush1.bf16.xpose.msra.mxu0 0
        %1195 = vmatprep.subr.bf16.mxu0 0
        %1196 = vmatpush1.bf16.xpose.msra.mxu0 0
        %1197 = vmatprep.subr.bf16.mxu0 0
        %1198 = vmatpush1.bf16.xpose.msra.mxu0 0
        %1199 = vmatprep.subr.bf16.mxu0 0
        %1200 = vmatpush1.bf16.xpose.msra.mxu0 0
        %1201 = vmatprep.subr.bf16.mxu0 0
        %1202 = vmatpush1.bf16.xpose.msra.mxu0 0
        %1203 = vmatprep.subr.bf16.mxu0 0
        %1204 = vmatpush1.bf16.xpose.msra.mxu0 0
        %1205 = vmatprep.subr.bf16.mxu0 0
        %1206 = vmatpush1.bf16.xpose.msra.mxu0 0
        %1207 = vmatprep.subr.bf16.mxu0 0
        %1208 = vmatpush1.bf16.xpose.msra.mxu0 0
        %1209 = vmatprep.subr.bf16.mxu0 0
        %1210 = vmatpush1.bf16.xpose.msra.mxu0 0
        %1211 = vmatprep.subr.bf16.mxu0 0
        %1212 = vmatpush1.bf16.xpose.msra.mxu0 0
        %1213 = vmatprep.subr.bf16.mxu0 0
        %1214 = vmatpush1.bf16.xpose.msra.mxu0 0
        %1215 = vmatprep.subr.bf16.mxu0 0
        %1216 = vmatpush1.bf16.xpose.msra.mxu0 0
        %1217 = vmatprep.subr.bf16.mxu0 0
        %1218 = vmatpush1.bf16.xpose.msra.mxu0 0
        %1219 = vmatprep.subr.bf16.mxu0 0
        %1220 = vmatpush1.bf16.xpose.msra.mxu0 0
        %1221 = vmatprep.mubr.bf16.mxu0 0
        %1222 = vmatmul.mubr.bf16.gmra.mrb[0].mxu0 %v1184
        %v1223 = vpop.f32.mrb[0].mxu0
        %v1224 = vadd.f32 %v807, %v1223
        %v1225 = vpop.f32.mrb[0].mxu0
        %v1226 = vpop.f32.mrb[0].mxu0
        %v1227 = vpop.f32.mrb[0].mxu0
        %1228 = vdwg.mxu0
        %1229 = vrot.lane.b32.xlu0 %v935, 120
        %v1230 = vpop.permute.xlu0 %1229
        %1231 = vrot.lane.b32.xlu0 %v990, 88
        %v1232 = vpop.permute.xlu0 %1231
        %v1234 = vsel %vm943, %v1230, 0
        %v1237 = vsel %vm943, %v1232, 0
        %1239 = vmatprep.subr.bf16.mxu0 0
        %1240 = vmatpush1.bf16.xpose.msra.mxu0 %v1237
        %1241 = vmatprep.subr.bf16.mxu0 0
        %1242 = vmatpush1.bf16.xpose.msra.mxu0 0
        %1243 = vmatprep.subr.bf16.mxu0 0
        %1244 = vmatpush1.bf16.xpose.msra.mxu0 0
        %1245 = vmatprep.subr.bf16.mxu0 0
        %1246 = vmatpush1.bf16.xpose.msra.mxu0 0
        %1247 = vmatprep.subr.bf16.mxu0 0
        %1248 = vmatpush1.bf16.xpose.msra.mxu0 0
        %1249 = vmatprep.subr.bf16.mxu0 0
        %1250 = vmatpush1.bf16.xpose.msra.mxu0 0
        %1251 = vmatprep.subr.bf16.mxu0 0
        %1252 = vmatpush1.bf16.xpose.msra.mxu0 0
        %1253 = vmatprep.subr.bf16.mxu0 0
        %1254 = vmatpush1.bf16.xpose.msra.mxu0 0
        %1255 = vmatprep.subr.bf16.mxu0 0
        %1256 = vmatpush1.bf16.xpose.msra.mxu0 0
        %1257 = vmatprep.subr.bf16.mxu0 0
        %1258 = vmatpush1.bf16.xpose.msra.mxu0 0
        %1259 = vmatprep.subr.bf16.mxu0 0
        %1260 = vmatpush1.bf16.xpose.msra.mxu0 0
        %1261 = vmatprep.subr.bf16.mxu0 0
        %1262 = vmatpush1.bf16.xpose.msra.mxu0 0
        %1263 = vmatprep.subr.bf16.mxu0 0
        %1264 = vmatpush1.bf16.xpose.msra.mxu0 0
        %1265 = vmatprep.subr.bf16.mxu0 0
        %1266 = vmatpush1.bf16.xpose.msra.mxu0 0
        %1267 = vmatprep.subr.bf16.mxu0 0
        %1268 = vmatpush1.bf16.xpose.msra.mxu0 0
        %1269 = vmatprep.subr.bf16.mxu0 0
        %1270 = vmatpush1.bf16.xpose.msra.mxu0 0
        %1271 = vmatprep.mubr.bf16.mxu0 0
        %1272 = vmatmul.mubr.bf16.gmra.mrb[0].mxu0 %v1234
        %v1273 = vpop.f32.mrb[0].mxu0
        %v1274 = vadd.f32 %v811, %v1273
        %v1275 = vpop.f32.mrb[0].mxu0
        %v1276 = vpop.f32.mrb[0].mxu0
        %v1277 = vpop.f32.mrb[0].mxu0
        %1278 = vdwg.mxu0
        %v1279 = vsel %vm943, %v1224, -inf
        %1280 = vmax.xlane.f32.xlu0 %v1279
        %v1281 = vpop.xlane.xlu0 %1280
        %v1282 = vsel %vm943, %v1274, -inf
        %1283 = vmax.xlane.f32.xlu0 %v1282
        %v1284 = vpop.xlane.xlu0 %1283
        %v1285 = vsub.f32 %v1224, %v1281
        %v1286 = vsub.f32 %v1274, %v1284
        %v1287 = vpack.c.bf16 %v1285, %v1285
        %v1288 = vpack.c.bf16 %v1286, %v1286
        %v1290 = vmul.bf16 %v1287, 1069105081
        %v1291 = vpow.bf16.pop %v1290
        %v1293 = vmul.bf16 %v1288, 1069105081
        %v1294 = vpow.bf16.pop %v1293
        %v1295 = vunpack.c.l.bf16 %v1291
        %v1296 = vunpack.c.l.bf16 %v1294
        %v1297 = vsel %vm943, %v1295, 0.0
        %1298 = vadd.xlane.f32.xlu0 %v1297
        %v1299 = vpop.xlane.xlu0 %1298
        %v1300 = vsel %vm943, %v1296, 0.0
        %1301 = vadd.xlane.f32.xlu0 %v1300
        %v1302 = vpop.xlane.xlu0 %1301
        %v1303 = vrcp.pop %v1299
        %v1304 = vrcp.pop %v1302
        %v1305 = vmul.f32 %v1299, %v1303
        %v1306 = vmul.f32 %v1302, %v1304
        %v1307 = vsub.f32 2.0, %v1305
        %v1308 = vsub.f32 2.0, %v1306
        %v1309 = vmul.f32 %v1303, %v1307
        %v1310 = vmul.f32 %v1304, %v1308
        %v1311 = vmul.f32 %v1295, %v1309
        %v1312 = vmul.f32 %v1296, %v1310
        %v1313 = vpack.c.bf16 %v1311, %v1311
        %v1314 = vpack.c.bf16 %v1312, %v1312
        %s1315 = scalar_lea.vmem %s726, 4 [#allocation10]
        %1316 = vst.msk [vmem:[%s1315] sm:$0xf] %vm1075, %v1313
        %1317 = vst.msk [vmem:[%s1315 + $0x10] sm:$0xf] %vm1075, %v1314
        %1318 = vrot.lane.b32.xlu0 %v940, 56
        %v1319 = vpop.permute.xlu0 %1318
        %v1321 = vsel %vm943, %v1291, 0
        %v1324 = vsel %vm1083, %v1319, 0
        %1326 = vmatprep.subr.bf16.mxu0 0
        %1327 = vmatpush1.bf16.msra.mxu0 %v1324
        %1328 = vmatprep.subr.bf16.mxu0 0
        %1329 = vmatpush1.bf16.msra.mxu0 0
        %1330 = vmatprep.subr.bf16.mxu0 0
        %1331 = vmatpush1.bf16.msra.mxu0 0
        %1332 = vmatprep.subr.bf16.mxu0 0
        %1333 = vmatpush1.bf16.msra.mxu0 0
        %1334 = vmatprep.subr.bf16.mxu0 0
        %1335 = vmatpush1.bf16.msra.mxu0 0
        %1336 = vmatprep.subr.bf16.mxu0 0
        %1337 = vmatpush1.bf16.msra.mxu0 0
        %1338 = vmatprep.subr.bf16.mxu0 0
        %1339 = vmatpush1.bf16.msra.mxu0 0
        %1340 = vmatprep.subr.bf16.mxu0 0
        %1341 = vmatpush1.bf16.msra.mxu0 0
        %1342 = vmatprep.subr.bf16.mxu0 0
        %1343 = vmatpush1.bf16.msra.mxu0 0
        %1344 = vmatprep.subr.bf16.mxu0 0
        %1345 = vmatpush1.bf16.msra.mxu0 0
        %1346 = vmatprep.subr.bf16.mxu0 0
        %1347 = vmatpush1.bf16.msra.mxu0 0
        %1348 = vmatprep.subr.bf16.mxu0 0
        %1349 = vmatpush1.bf16.msra.mxu0 0
        %1350 = vmatprep.subr.bf16.mxu0 0
        %1351 = vmatpush1.bf16.msra.mxu0 0
        %1352 = vmatprep.subr.bf16.mxu0 0
        %1353 = vmatpush1.bf16.msra.mxu0 0
        %1354 = vmatprep.subr.bf16.mxu0 0
        %1355 = vmatpush1.bf16.msra.mxu0 0
        %1356 = vmatprep.subr.bf16.mxu0 0
        %1357 = vmatpush1.bf16.msra.mxu0 0
        %1358 = vmatprep.mubr.bf16.mxu0 0
        %1359 = vmatmul.mubr.bf16.gmra.mrb[0].mxu0 %v1321
        %v1360 = vpop.f32.mrb[0].mxu0
        %v1361 = vadd.f32 0.0, %v1360
        %v1362 = vpop.f32.mrb[0].mxu0
        %v1363 = vpop.f32.mrb[0].mxu0
        %v1364 = vpop.f32.mrb[0].mxu0
        %1365 = vdwg.mxu0
        %1366 = vrot.lane.b32.xlu0 %v990, 56
        %v1367 = vpop.permute.xlu0 %1366
        %v1369 = vsel %vm943, %v1294, 0
        %v1372 = vsel %vm1083, %v1367, 0
        %1374 = vmatprep.subr.bf16.mxu0 0
        %1375 = vmatpush1.bf16.msra.mxu0 %v1372
        %1376 = vmatprep.subr.bf16.mxu0 0
        %1377 = vmatpush1.bf16.msra.mxu0 0
        %1378 = vmatprep.subr.bf16.mxu0 0
        %1379 = vmatpush1.bf16.msra.mxu0 0
        %1380 = vmatprep.subr.bf16.mxu0 0
        %1381 = vmatpush1.bf16.msra.mxu0 0
        %1382 = vmatprep.subr.bf16.mxu0 0
        %1383 = vmatpush1.bf16.msra.mxu0 0
        %1384 = vmatprep.subr.bf16.mxu0 0
        %1385 = vmatpush1.bf16.msra.mxu0 0
        %1386 = vmatprep.subr.bf16.mxu0 0
        %1387 = vmatpush1.bf16.msra.mxu0 0
        %1388 = vmatprep.subr.bf16.mxu0 0
        %1389 = vmatpush1.bf16.msra.mxu0 0
        %1390 = vmatprep.subr.bf16.mxu0 0
        %1391 = vmatpush1.bf16.msra.mxu0 0
        %1392 = vmatprep.subr.bf16.mxu0 0
        %1393 = vmatpush1.bf16.msra.mxu0 0
        %1394 = vmatprep.subr.bf16.mxu0 0
        %1395 = vmatpush1.bf16.msra.mxu0 0
        %1396 = vmatprep.subr.bf16.mxu0 0
        %1397 = vmatpush1.bf16.msra.mxu0 0
        %1398 = vmatprep.subr.bf16.mxu0 0
        %1399 = vmatpush1.bf16.msra.mxu0 0
        %1400 = vmatprep.subr.bf16.mxu0 0
        %1401 = vmatpush1.bf16.msra.mxu0 0
        %1402 = vmatprep.subr.bf16.mxu0 0
        %1403 = vmatpush1.bf16.msra.mxu0 0
        %1404 = vmatprep.subr.bf16.mxu0 0
        %1405 = vmatpush1.bf16.msra.mxu0 0
        %1406 = vmatprep.mubr.bf16.mxu0 0
        %1407 = vmatmul.mubr.bf16.gmra.mrb[0].mxu0 %v1369
        %v1408 = vpop.f32.mrb[0].mxu0
        %v1409 = vadd.f32 0.0, %v1408
        %v1410 = vpop.f32.mrb[0].mxu0
        %v1411 = vpop.f32.mrb[0].mxu0
        %v1412 = vpop.f32.mrb[0].mxu0
        %1413 = vdwg.mxu0
        %v1414 = vmul.f32 %v1361, %v1309
        %v1415 = vmul.f32 %v1409, %v1310
        %v1416 = vpack.c.bf16 %v1415, %v1414
        %v1417 = vld [vmem:[%s750 + $0x4] sm:$0xf]
        %v1419 = vsel %vm943, %v1416, 0
        %v1422 = vsel %vm1083, %v1417, 0
        %1424 = vmatprep.subr.bf16.mxu0 0
        %1425 = vmatpush1.bf16.msra.mxu0 %v1422
        %1426 = vmatprep.subr.bf16.mxu0 0
        %1427 = vmatpush1.bf16.msra.mxu0 0
        %1428 = vmatprep.subr.bf16.mxu0 0
        %1429 = vmatpush1.bf16.msra.mxu0 0
        %1430 = vmatprep.subr.bf16.mxu0 0
        %1431 = vmatpush1.bf16.msra.mxu0 0
        %1432 = vmatprep.subr.bf16.mxu0 0
        %1433 = vmatpush1.bf16.msra.mxu0 0
        %1434 = vmatprep.subr.bf16.mxu0 0
        %1435 = vmatpush1.bf16.msra.mxu0 0
        %1436 = vmatprep.subr.bf16.mxu0 0
        %1437 = vmatpush1.bf16.msra.mxu0 0
        %1438 = vmatprep.subr.bf16.mxu0 0
        %1439 = vmatpush1.bf16.msra.mxu0 0
        %1440 = vmatprep.subr.bf16.mxu0 0
        %1441 = vmatpush1.bf16.msra.mxu0 0
        %1442 = vmatprep.subr.bf16.mxu0 0
        %1443 = vmatpush1.bf16.msra.mxu0 0
        %1444 = vmatprep.subr.bf16.mxu0 0
        %1445 = vmatpush1.bf16.msra.mxu0 0
        %1446 = vmatprep.subr.bf16.mxu0 0
        %1447 = vmatpush1.bf16.msra.mxu0 0
        %1448 = vmatprep.subr.bf16.mxu0 0
        %1449 = vmatpush1.bf16.msra.mxu0 0
        %1450 = vmatprep.subr.bf16.mxu0 0
        %1451 = vmatpush1.bf16.msra.mxu0 0
        %1452 = vmatprep.subr.bf16.mxu0 0
        %1453 = vmatpush1.bf16.msra.mxu0 0
        %1454 = vmatprep.subr.bf16.mxu0 0
        %1455 = vmatpush1.bf16.msra.mxu0 0
        %1456 = vmatprep.mubr.bf16.mxu0 0
        %1457 = vmatmul.mubr.bf16.gmra.mrb[0].mxu0 %v1419
        %v1458 = vpop.f32.mrb[0].mxu0
        %v1459 = vadd.f32 0.0, %v1458
        %v1460 = vpop.f32.mrb[0].mxu0
        %v1461 = vpop.f32.mrb[0].mxu0
        %v1462 = vadd.f32 0.0, %v1461
        %v1463 = vpop.f32.mrb[0].mxu0
        %1464 = vdwg.mxu0
        %v1466 = vsel %vm943, %v1177, 0
        %v1469 = vsel %vm1083, %v1178, 0
        %1471 = vmatprep.subr.bf16.mxu0 0
        %1472 = vmatpush1.bf16.msra.mxu0 %v1469
        %1473 = vmatprep.subr.bf16.mxu0 0
        %1474 = vmatpush1.bf16.msra.mxu0 0
        %1475 = vmatprep.subr.bf16.mxu0 0
        %1476 = vmatpush1.bf16.msra.mxu0 0
        %1477 = vmatprep.subr.bf16.mxu0 0
        %1478 = vmatpush1.bf16.msra.mxu0 0
        %1479 = vmatprep.subr.bf16.mxu0 0
        %1480 = vmatpush1.bf16.msra.mxu0 0
        %1481 = vmatprep.subr.bf16.mxu0 0
        %1482 = vmatpush1.bf16.msra.mxu0 0
        %1483 = vmatprep.subr.bf16.mxu0 0
        %1484 = vmatpush1.bf16.msra.mxu0 0
        %1485 = vmatprep.subr.bf16.mxu0 0
        %1486 = vmatpush1.bf16.msra.mxu0 0
        %1487 = vmatprep.subr.bf16.mxu0 0
        %1488 = vmatpush1.bf16.msra.mxu0 0
        %1489 = vmatprep.subr.bf16.mxu0 0
        %1490 = vmatpush1.bf16.msra.mxu0 0
        %1491 = vmatprep.subr.bf16.mxu0 0
        %1492 = vmatpush1.bf16.msra.mxu0 0
        %1493 = vmatprep.subr.bf16.mxu0 0
        %1494 = vmatpush1.bf16.msra.mxu0 0
        %1495 = vmatprep.subr.bf16.mxu0 0
        %1496 = vmatpush1.bf16.msra.mxu0 0
        %1497 = vmatprep.subr.bf16.mxu0 0
        %1498 = vmatpush1.bf16.msra.mxu0 0
        %1499 = vmatprep.subr.bf16.mxu0 0
        %1500 = vmatpush1.bf16.msra.mxu0 0
        %1501 = vmatprep.subr.bf16.mxu0 0
        %1502 = vmatpush1.bf16.msra.mxu0 0
        %1503 = vmatprep.mubr.bf16.mxu0 0
        %1504 = vmatmul.mubr.bf16.gmra.mrb[0].mxu0 %v1466
        %v1505 = vpop.f32.mrb[0].mxu0
        %v1506 = vadd.f32 %v1459, %v1505
        %v1507 = vpop.f32.mrb[0].mxu0
        %v1508 = vpop.f32.mrb[0].mxu0
        %v1509 = vadd.f32 %v1462, %v1508
        %v1510 = vpop.f32.mrb[0].mxu0
        %1511 = vdwg.mxu0
        %1512 = vrot.lane.b32.xlu0 %v934, 112
        %v1513 = vpop.permute.xlu0 %1512
        %1514 = vrot.lane.b32.xlu0 %v940, 80
        %v1515 = vpop.permute.xlu0 %1514
        %v1517 = vsel %vm943, %v1513, 0
        %v1520 = vsel %vm943, %v1515, 0
        %1522 = vmatprep.subr.bf16.mxu0 0
        %1523 = vmatpush1.bf16.xpose.msra.mxu0 %v1520
        %1524 = vmatprep.subr.bf16.mxu0 0
        %1525 = vmatpush1.bf16.xpose.msra.mxu0 0
        %1526 = vmatprep.subr.bf16.mxu0 0
        %1527 = vmatpush1.bf16.xpose.msra.mxu0 0
        %1528 = vmatprep.subr.bf16.mxu0 0
        %1529 = vmatpush1.bf16.xpose.msra.mxu0 0
        %1530 = vmatprep.subr.bf16.mxu0 0
        %1531 = vmatpush1.bf16.xpose.msra.mxu0 0
        %1532 = vmatprep.subr.bf16.mxu0 0
        %1533 = vmatpush1.bf16.xpose.msra.mxu0 0
        %1534 = vmatprep.subr.bf16.mxu0 0
        %1535 = vmatpush1.bf16.xpose.msra.mxu0 0
        %1536 = vmatprep.subr.bf16.mxu0 0
        %1537 = vmatpush1.bf16.xpose.msra.mxu0 0
        %1538 = vmatprep.subr.bf16.mxu0 0
        %1539 = vmatpush1.bf16.xpose.msra.mxu0 0
        %1540 = vmatprep.subr.bf16.mxu0 0
        %1541 = vmatpush1.bf16.xpose.msra.mxu0 0
        %1542 = vmatprep.subr.bf16.mxu0 0
        %1543 = vmatpush1.bf16.xpose.msra.mxu0 0
        %1544 = vmatprep.subr.bf16.mxu0 0
        %1545 = vmatpush1.bf16.xpose.msra.mxu0 0
        %1546 = vmatprep.subr.bf16.mxu0 0
        %1547 = vmatpush1.bf16.xpose.msra.mxu0 0
        %1548 = vmatprep.subr.bf16.mxu0 0
        %1549 = vmatpush1.bf16.xpose.msra.mxu0 0
        %1550 = vmatprep.subr.bf16.mxu0 0
        %1551 = vmatpush1.bf16.xpose.msra.mxu0 0
        %1552 = vmatprep.subr.bf16.mxu0 0
        %1553 = vmatpush1.bf16.xpose.msra.mxu0 0
        %1554 = vmatprep.mubr.bf16.mxu0 0
        %1555 = vmatmul.mubr.bf16.gmra.mrb[0].mxu0 %v1517
        %v1556 = vpop.f32.mrb[0].mxu0
        %v1557 = vadd.f32 %v807, %v1556
        %v1558 = vpop.f32.mrb[0].mxu0
        %v1559 = vpop.f32.mrb[0].mxu0
        %v1560 = vpop.f32.mrb[0].mxu0
        %1561 = vdwg.mxu0
        %1562 = vrot.lane.b32.xlu0 %v935, 112
        %v1563 = vpop.permute.xlu0 %1562
        %1564 = vrot.lane.b32.xlu0 %v990, 80
        %v1565 = vpop.permute.xlu0 %1564
        %v1567 = vsel %vm943, %v1563, 0
        %v1570 = vsel %vm943, %v1565, 0
        %1572 = vmatprep.subr.bf16.mxu0 0
        %1573 = vmatpush1.bf16.xpose.msra.mxu0 %v1570
        %1574 = vmatprep.subr.bf16.mxu0 0
        %1575 = vmatpush1.bf16.xpose.msra.mxu0 0
        %1576 = vmatprep.subr.bf16.mxu0 0
        %1577 = vmatpush1.bf16.xpose.msra.mxu0 0
        %1578 = vmatprep.subr.bf16.mxu0 0
        %1579 = vmatpush1.bf16.xpose.msra.mxu0 0
        %1580 = vmatprep.subr.bf16.mxu0 0
        %1581 = vmatpush1.bf16.xpose.msra.mxu0 0
        %1582 = vmatprep.subr.bf16.mxu0 0
        %1583 = vmatpush1.bf16.xpose.msra.mxu0 0
        %1584 = vmatprep.subr.bf16.mxu0 0
        %1585 = vmatpush1.bf16.xpose.msra.mxu0 0
        %1586 = vmatprep.subr.bf16.mxu0 0
        %1587 = vmatpush1.bf16.xpose.msra.mxu0 0
        %1588 = vmatprep.subr.bf16.mxu0 0
        %1589 = vmatpush1.bf16.xpose.msra.mxu0 0
        %1590 = vmatprep.subr.bf16.mxu0 0
        %1591 = vmatpush1.bf16.xpose.msra.mxu0 0
        %1592 = vmatprep.subr.bf16.mxu0 0
        %1593 = vmatpush1.bf16.xpose.msra.mxu0 0
        %1594 = vmatprep.subr.bf16.mxu0 0
        %1595 = vmatpush1.bf16.xpose.msra.mxu0 0
        %1596 = vmatprep.subr.bf16.mxu0 0
        %1597 = vmatpush1.bf16.xpose.msra.mxu0 0
        %1598 = vmatprep.subr.bf16.mxu0 0
        %1599 = vmatpush1.bf16.xpose.msra.mxu0 0
        %1600 = vmatprep.subr.bf16.mxu0 0
        %1601 = vmatpush1.bf16.xpose.msra.mxu0 0
        %1602 = vmatprep.subr.bf16.mxu0 0
        %1603 = vmatpush1.bf16.xpose.msra.mxu0 0
        %1604 = vmatprep.mubr.bf16.mxu0 0
        %1605 = vmatmul.mubr.bf16.gmra.mrb[0].mxu0 %v1567
        %v1606 = vpop.f32.mrb[0].mxu0
        %v1607 = vadd.f32 %v811, %v1606
        %v1608 = vpop.f32.mrb[0].mxu0
        %v1609 = vpop.f32.mrb[0].mxu0
        %v1610 = vpop.f32.mrb[0].mxu0
        %1611 = vdwg.mxu0
        %v1612 = vsel %vm943, %v1557, -inf
        %1613 = vmax.xlane.f32.xlu0 %v1612
        %v1614 = vpop.xlane.xlu0 %1613
        %v1615 = vsel %vm943, %v1607, -inf
        %1616 = vmax.xlane.f32.xlu0 %v1615
        %v1617 = vpop.xlane.xlu0 %1616
        %v1618 = vsub.f32 %v1557, %v1614
        %v1619 = vsub.f32 %v1607, %v1617
        %v1620 = vpack.c.bf16 %v1618, %v1618
        %v1621 = vpack.c.bf16 %v1619, %v1619
        %v1623 = vmul.bf16 %v1620, 1069105081
        %v1624 = vpow.bf16.pop %v1623
        %v1626 = vmul.bf16 %v1621, 1069105081
        %v1627 = vpow.bf16.pop %v1626
        %v1628 = vunpack.c.l.bf16 %v1624
        %v1629 = vunpack.c.l.bf16 %v1627
        %v1630 = vsel %vm943, %v1628, 0.0
        %1631 = vadd.xlane.f32.xlu0 %v1630
        %v1632 = vpop.xlane.xlu0 %1631
        %v1633 = vsel %vm943, %v1629, 0.0
        %1634 = vadd.xlane.f32.xlu0 %v1633
        %v1635 = vpop.xlane.xlu0 %1634
        %v1636 = vrcp.pop %v1632
        %v1637 = vrcp.pop %v1635
        %v1638 = vmul.f32 %v1632, %v1636
        %v1639 = vmul.f32 %v1635, %v1637
        %v1640 = vsub.f32 2.0, %v1638
        %v1641 = vsub.f32 2.0, %v1639
        %v1642 = vmul.f32 %v1636, %v1640
        %v1643 = vmul.f32 %v1637, %v1641
        %v1644 = vmul.f32 %v1628, %v1642
        %v1645 = vmul.f32 %v1629, %v1643
        %v1646 = vpack.c.bf16 %v1644, %v1644
        %v1647 = vpack.c.bf16 %v1645, %v1645
        %s1648 = scalar_lea.vmem %s726, 8 [#allocation10]
        %1649 = vst.msk [vmem:[%s1648] sm:$0xf] %vm1075, %v1646
        %1650 = vst.msk [vmem:[%s1648 + $0x10] sm:$0xf] %vm1075, %v1647
        %1651 = vrot.lane.b32.xlu0 %v940, 48
        %v1652 = vpop.permute.xlu0 %1651
        %v1654 = vsel %vm943, %v1624, 0
        %v1657 = vsel %vm1083, %v1652, 0
        %1659 = vmatprep.subr.bf16.mxu0 0
        %1660 = vmatpush1.bf16.msra.mxu0 %v1657
        %1661 = vmatprep.subr.bf16.mxu0 0
        %1662 = vmatpush1.bf16.msra.mxu0 0
        %1663 = vmatprep.subr.bf16.mxu0 0
        %1664 = vmatpush1.bf16.msra.mxu0 0
        %1665 = vmatprep.subr.bf16.mxu0 0
        %1666 = vmatpush1.bf16.msra.mxu0 0
        %1667 = vmatprep.subr.bf16.mxu0 0
        %1668 = vmatpush1.bf16.msra.mxu0 0
        %1669 = vmatprep.subr.bf16.mxu0 0
        %1670 = vmatpush1.bf16.msra.mxu0 0
        %1671 = vmatprep.subr.bf16.mxu0 0
        %1672 = vmatpush1.bf16.msra.mxu0 0
        %1673 = vmatprep.subr.bf16.mxu0 0
        %1674 = vmatpush1.bf16.msra.mxu0 0
        %1675 = vmatprep.subr.bf16.mxu0 0
        %1676 = vmatpush1.bf16.msra.mxu0 0
        %1677 = vmatprep.subr.bf16.mxu0 0
        %1678 = vmatpush1.bf16.msra.mxu0 0
        %1679 = vmatprep.subr.bf16.mxu0 0
        %1680 = vmatpush1.bf16.msra.mxu0 0
        %1681 = vmatprep.subr.bf16.mxu0 0
        %1682 = vmatpush1.bf16.msra.mxu0 0
        %1683 = vmatprep.subr.bf16.mxu0 0
        %1684 = vmatpush1.bf16.msra.mxu0 0
        %1685 = vmatprep.subr.bf16.mxu0 0
        %1686 = vmatpush1.bf16.msra.mxu0 0
        %1687 = vmatprep.subr.bf16.mxu0 0
        %1688 = vmatpush1.bf16.msra.mxu0 0
        %1689 = vmatprep.subr.bf16.mxu0 0
        %1690 = vmatpush1.bf16.msra.mxu0 0
        %1691 = vmatprep.mubr.bf16.mxu0 0
        %1692 = vmatmul.mubr.bf16.gmra.mrb[0].mxu0 %v1654
        %v1693 = vpop.f32.mrb[0].mxu0
        %v1694 = vadd.f32 0.0, %v1693
        %v1695 = vpop.f32.mrb[0].mxu0
        %v1696 = vpop.f32.mrb[0].mxu0
        %v1697 = vpop.f32.mrb[0].mxu0
        %1698 = vdwg.mxu0
        %1699 = vrot.lane.b32.xlu0 %v990, 48
        %v1700 = vpop.permute.xlu0 %1699
        %v1702 = vsel %vm943, %v1627, 0
        %v1705 = vsel %vm1083, %v1700, 0
        %1707 = vmatprep.subr.bf16.mxu0 0
        %1708 = vmatpush1.bf16.msra.mxu0 %v1705
        %1709 = vmatprep.subr.bf16.mxu0 0
        %1710 = vmatpush1.bf16.msra.mxu0 0
        %1711 = vmatprep.subr.bf16.mxu0 0
        %1712 = vmatpush1.bf16.msra.mxu0 0
        %1713 = vmatprep.subr.bf16.mxu0 0
        %1714 = vmatpush1.bf16.msra.mxu0 0
        %1715 = vmatprep.subr.bf16.mxu0 0
        %1716 = vmatpush1.bf16.msra.mxu0 0
        %1717 = vmatprep.subr.bf16.mxu0 0
        %1718 = vmatpush1.bf16.msra.mxu0 0
        %1719 = vmatprep.subr.bf16.mxu0 0
        %1720 = vmatpush1.bf16.msra.mxu0 0
        %1721 = vmatprep.subr.bf16.mxu0 0
        %1722 = vmatpush1.bf16.msra.mxu0 0
        %1723 = vmatprep.subr.bf16.mxu0 0
        %1724 = vmatpush1.bf16.msra.mxu0 0
        %1725 = vmatprep.subr.bf16.mxu0 0
        %1726 = vmatpush1.bf16.msra.mxu0 0
        %1727 = vmatprep.subr.bf16.mxu0 0
        %1728 = vmatpush1.bf16.msra.mxu0 0
        %1729 = vmatprep.subr.bf16.mxu0 0
        %1730 = vmatpush1.bf16.msra.mxu0 0
        %1731 = vmatprep.subr.bf16.mxu0 0
        %1732 = vmatpush1.bf16.msra.mxu0 0
        %1733 = vmatprep.subr.bf16.mxu0 0
        %1734 = vmatpush1.bf16.msra.mxu0 0
        %1735 = vmatprep.subr.bf16.mxu0 0
        %1736 = vmatpush1.bf16.msra.mxu0 0
        %1737 = vmatprep.subr.bf16.mxu0 0
        %1738 = vmatpush1.bf16.msra.mxu0 0
        %1739 = vmatprep.mubr.bf16.mxu0 0
        %1740 = vmatmul.mubr.bf16.gmra.mrb[0].mxu0 %v1702
        %v1741 = vpop.f32.mrb[0].mxu0
        %v1742 = vadd.f32 0.0, %v1741
        %v1743 = vpop.f32.mrb[0].mxu0
        %v1744 = vpop.f32.mrb[0].mxu0
        %v1745 = vpop.f32.mrb[0].mxu0
        %1746 = vdwg.mxu0
        %v1747 = vmul.f32 %v1694, %v1642
        %v1748 = vmul.f32 %v1742, %v1643
        %v1749 = vpack.c.bf16 %v1748, %v1747
        %v1750 = vld [vmem:[%s750 + $0x8] sm:$0xf]
        %v1752 = vsel %vm943, %v1749, 0
        %v1755 = vsel %vm1083, %v1750, 0
        %1757 = vmatprep.subr.bf16.mxu0 0
        %1758 = vmatpush1.bf16.msra.mxu0 %v1755
        %1759 = vmatprep.subr.bf16.mxu0 0
        %1760 = vmatpush1.bf16.msra.mxu0 0
        %1761 = vmatprep.subr.bf16.mxu0 0
        %1762 = vmatpush1.bf16.msra.mxu0 0
        %1763 = vmatprep.subr.bf16.mxu0 0
        %1764 = vmatpush1.bf16.msra.mxu0 0
        %1765 = vmatprep.subr.bf16.mxu0 0
        %1766 = vmatpush1.bf16.msra.mxu0 0
        %1767 = vmatprep.subr.bf16.mxu0 0
        %1768 = vmatpush1.bf16.msra.mxu0 0
        %1769 = vmatprep.subr.bf16.mxu0 0
        %1770 = vmatpush1.bf16.msra.mxu0 0
        %1771 = vmatprep.subr.bf16.mxu0 0
        %1772 = vmatpush1.bf16.msra.mxu0 0
        %1773 = vmatprep.subr.bf16.mxu0 0
        %1774 = vmatpush1.bf16.msra.mxu0 0
        %1775 = vmatprep.subr.bf16.mxu0 0
        %1776 = vmatpush1.bf16.msra.mxu0 0
        %1777 = vmatprep.subr.bf16.mxu0 0
        %1778 = vmatpush1.bf16.msra.mxu0 0
        %1779 = vmatprep.subr.bf16.mxu0 0
        %1780 = vmatpush1.bf16.msra.mxu0 0
        %1781 = vmatprep.subr.bf16.mxu0 0
        %1782 = vmatpush1.bf16.msra.mxu0 0
        %1783 = vmatprep.subr.bf16.mxu0 0
        %1784 = vmatpush1.bf16.msra.mxu0 0
        %1785 = vmatprep.subr.bf16.mxu0 0
        %1786 = vmatpush1.bf16.msra.mxu0 0
        %1787 = vmatprep.subr.bf16.mxu0 0
        %1788 = vmatpush1.bf16.msra.mxu0 0
        %1789 = vmatprep.mubr.bf16.mxu0 0
        %1790 = vmatmul.mubr.bf16.gmra.mrb[0].mxu0 %v1752
        %v1791 = vpop.f32.mrb[0].mxu0
        %v1792 = vadd.f32 0.0, %v1791
        %v1793 = vpop.f32.mrb[0].mxu0
        %v1794 = vpop.f32.mrb[0].mxu0
        %v1795 = vadd.f32 0.0, %v1794
        %v1796 = vpop.f32.mrb[0].mxu0
        %1797 = vdwg.mxu0
        %v1798 = vadd.f32 %v1506, %v1792
        %v1799 = vadd.f32 %v1509, %v1795
        %1800 = vrot.lane.b32.xlu0 %v934, 104
        %v1801 = vpop.permute.xlu0 %1800
        %1802 = vrot.lane.b32.xlu0 %v940, 72
        %v1803 = vpop.permute.xlu0 %1802
        %v1805 = vsel %vm943, %v1801, 0
        %v1808 = vsel %vm943, %v1803, 0
        %1810 = vmatprep.subr.bf16.mxu0 0
        %1811 = vmatpush1.bf16.xpose.msra.mxu0 %v1808
        %1812 = vmatprep.subr.bf16.mxu0 0
        %1813 = vmatpush1.bf16.xpose.msra.mxu0 0
        %1814 = vmatprep.subr.bf16.mxu0 0
        %1815 = vmatpush1.bf16.xpose.msra.mxu0 0
        %1816 = vmatprep.subr.bf16.mxu0 0
        %1817 = vmatpush1.bf16.xpose.msra.mxu0 0
        %1818 = vmatprep.subr.bf16.mxu0 0
        %1819 = vmatpush1.bf16.xpose.msra.mxu0 0
        %1820 = vmatprep.subr.bf16.mxu0 0
        %1821 = vmatpush1.bf16.xpose.msra.mxu0 0
        %1822 = vmatprep.subr.bf16.mxu0 0
        %1823 = vmatpush1.bf16.xpose.msra.mxu0 0
        %1824 = vmatprep.subr.bf16.mxu0 0
        %1825 = vmatpush1.bf16.xpose.msra.mxu0 0
        %1826 = vmatprep.subr.bf16.mxu0 0
        %1827 = vmatpush1.bf16.xpose.msra.mxu0 0
        %1828 = vmatprep.subr.bf16.mxu0 0
        %1829 = vmatpush1.bf16.xpose.msra.mxu0 0
        %1830 = vmatprep.subr.bf16.mxu0 0
        %1831 = vmatpush1.bf16.xpose.msra.mxu0 0
        %1832 = vmatprep.subr.bf16.mxu0 0
        %1833 = vmatpush1.bf16.xpose.msra.mxu0 0
        %1834 = vmatprep.subr.bf16.mxu0 0
        %1835 = vmatpush1.bf16.xpose.msra.mxu0 0
        %1836 = vmatprep.subr.bf16.mxu0 0
        %1837 = vmatpush1.bf16.xpose.msra.mxu0 0
        %1838 = vmatprep.subr.bf16.mxu0 0
        %1839 = vmatpush1.bf16.xpose.msra.mxu0 0
        %1840 = vmatprep.subr.bf16.mxu0 0
        %1841 = vmatpush1.bf16.xpose.msra.mxu0 0
        %1842 = vmatprep.mubr.bf16.mxu0 0
        %1843 = vmatmul.mubr.bf16.gmra.mrb[0].mxu0 %v1805
        %v1844 = vpop.f32.mrb[0].mxu0
        %v1845 = vadd.f32 %v807, %v1844
        %v1846 = vpop.f32.mrb[0].mxu0
        %v1847 = vpop.f32.mrb[0].mxu0
        %v1848 = vpop.f32.mrb[0].mxu0
        %1849 = vdwg.mxu0
        %1850 = vrot.lane.b32.xlu0 %v935, 104
        %v1851 = vpop.permute.xlu0 %1850
        %1852 = vrot.lane.b32.xlu0 %v990, 72
        %v1853 = vpop.permute.xlu0 %1852
        %v1855 = vsel %vm943, %v1851, 0
        %v1858 = vsel %vm943, %v1853, 0
        %1860 = vmatprep.subr.bf16.mxu0 0
        %1861 = vmatpush1.bf16.xpose.msra.mxu0 %v1858
        %1862 = vmatprep.subr.bf16.mxu0 0
        %1863 = vmatpush1.bf16.xpose.msra.mxu0 0
        %1864 = vmatprep.subr.bf16.mxu0 0
        %1865 = vmatpush1.bf16.xpose.msra.mxu0 0
        %1866 = vmatprep.subr.bf16.mxu0 0
        %1867 = vmatpush1.bf16.xpose.msra.mxu0 0
        %1868 = vmatprep.subr.bf16.mxu0 0
        %1869 = vmatpush1.bf16.xpose.msra.mxu0 0
        %1870 = vmatprep.subr.bf16.mxu0 0
        %1871 = vmatpush1.bf16.xpose.msra.mxu0 0
        %1872 = vmatprep.subr.bf16.mxu0 0
        %1873 = vmatpush1.bf16.xpose.msra.mxu0 0
        %1874 = vmatprep.subr.bf16.mxu0 0
        %1875 = vmatpush1.bf16.xpose.msra.mxu0 0
        %1876 = vmatprep.subr.bf16.mxu0 0
        %1877 = vmatpush1.bf16.xpose.msra.mxu0 0
        %1878 = vmatprep.subr.bf16.mxu0 0
        %1879 = vmatpush1.bf16.xpose.msra.mxu0 0
        %1880 = vmatprep.subr.bf16.mxu0 0
        %1881 = vmatpush1.bf16.xpose.msra.mxu0 0
        %1882 = vmatprep.subr.bf16.mxu0 0
        %1883 = vmatpush1.bf16.xpose.msra.mxu0 0
        %1884 = vmatprep.subr.bf16.mxu0 0
        %1885 = vmatpush1.bf16.xpose.msra.mxu0 0
        %1886 = vmatprep.subr.bf16.mxu0 0
        %1887 = vmatpush1.bf16.xpose.msra.mxu0 0
        %1888 = vmatprep.subr.bf16.mxu0 0
        %1889 = vmatpush1.bf16.xpose.msra.mxu0 0
        %1890 = vmatprep.subr.bf16.mxu0 0
        %1891 = vmatpush1.bf16.xpose.msra.mxu0 0
        %1892 = vmatprep.mubr.bf16.mxu0 0
        %1893 = vmatmul.mubr.bf16.gmra.mrb[0].mxu0 %v1855
        %v1894 = vpop.f32.mrb[0].mxu0
        %v1895 = vadd.f32 %v811, %v1894
        %v1896 = vpop.f32.mrb[0].mxu0
        %v1897 = vpop.f32.mrb[0].mxu0
        %v1898 = vpop.f32.mrb[0].mxu0
        %1899 = vdwg.mxu0
        %v1900 = vsel %vm943, %v1845, -inf
        %1901 = vmax.xlane.f32.xlu0 %v1900
        %v1902 = vpop.xlane.xlu0 %1901
        %v1903 = vsel %vm943, %v1895, -inf
        %1904 = vmax.xlane.f32.xlu0 %v1903
        %v1905 = vpop.xlane.xlu0 %1904
        %v1906 = vsub.f32 %v1845, %v1902
        %v1907 = vsub.f32 %v1895, %v1905
        %v1908 = vpack.c.bf16 %v1906, %v1906
        %v1909 = vpack.c.bf16 %v1907, %v1907
        %v1911 = vmul.bf16 %v1908, 1069105081
        %v1912 = vpow.bf16.pop %v1911
        %v1914 = vmul.bf16 %v1909, 1069105081
        %v1915 = vpow.bf16.pop %v1914
        %v1916 = vunpack.c.l.bf16 %v1912
        %v1917 = vunpack.c.l.bf16 %v1915
        %v1918 = vsel %vm943, %v1916, 0.0
        %1919 = vadd.xlane.f32.xlu0 %v1918
        %v1920 = vpop.xlane.xlu0 %1919
        %v1921 = vsel %vm943, %v1917, 0.0
        %1922 = vadd.xlane.f32.xlu0 %v1921
        %v1923 = vpop.xlane.xlu0 %1922
        %v1924 = vrcp.pop %v1920
        %v1925 = vrcp.pop %v1923
        %v1926 = vmul.f32 %v1920, %v1924
        %v1927 = vmul.f32 %v1923, %v1925
        %v1928 = vsub.f32 2.0, %v1926
        %v1929 = vsub.f32 2.0, %v1927
        %v1930 = vmul.f32 %v1924, %v1928
        %v1931 = vmul.f32 %v1925, %v1929
        %v1932 = vmul.f32 %v1916, %v1930
        %v1933 = vmul.f32 %v1917, %v1931
        %v1934 = vpack.c.bf16 %v1932, %v1932
        %v1935 = vpack.c.bf16 %v1933, %v1933
        %s1936 = scalar_lea.vmem %s726, 12 [#allocation10]
        %1937 = vst.msk [vmem:[%s1936] sm:$0xf] %vm1075, %v1934
        %1938 = vst.msk [vmem:[%s1936 + $0x10] sm:$0xf] %vm1075, %v1935
        %1939 = vrot.lane.b32.xlu0 %v940, 40
        %v1940 = vpop.permute.xlu0 %1939
        %v1942 = vsel %vm943, %v1912, 0
        %v1945 = vsel %vm1083, %v1940, 0
        %1947 = vmatprep.subr.bf16.mxu0 0
        %1948 = vmatpush1.bf16.msra.mxu0 %v1945
        %1949 = vmatprep.subr.bf16.mxu0 0
        %1950 = vmatpush1.bf16.msra.mxu0 0
        %1951 = vmatprep.subr.bf16.mxu0 0
        %1952 = vmatpush1.bf16.msra.mxu0 0
        %1953 = vmatprep.subr.bf16.mxu0 0
        %1954 = vmatpush1.bf16.msra.mxu0 0
        %1955 = vmatprep.subr.bf16.mxu0 0
        %1956 = vmatpush1.bf16.msra.mxu0 0
        %1957 = vmatprep.subr.bf16.mxu0 0
        %1958 = vmatpush1.bf16.msra.mxu0 0
        %1959 = vmatprep.subr.bf16.mxu0 0
        %1960 = vmatpush1.bf16.msra.mxu0 0
        %1961 = vmatprep.subr.bf16.mxu0 0
        %1962 = vmatpush1.bf16.msra.mxu0 0
        %1963 = vmatprep.subr.bf16.mxu0 0
        %1964 = vmatpush1.bf16.msra.mxu0 0
        %1965 = vmatprep.subr.bf16.mxu0 0
        %1966 = vmatpush1.bf16.msra.mxu0 0
        %1967 = vmatprep.subr.bf16.mxu0 0
        %1968 = vmatpush1.bf16.msra.mxu0 0
        %1969 = vmatprep.subr.bf16.mxu0 0
        %1970 = vmatpush1.bf16.msra.mxu0 0
        %1971 = vmatprep.subr.bf16.mxu0 0
        %1972 = vmatpush1.bf16.msra.mxu0 0
        %1973 = vmatprep.subr.bf16.mxu0 0
        %1974 = vmatpush1.bf16.msra.mxu0 0
        %1975 = vmatprep.subr.bf16.mxu0 0
        %1976 = vmatpush1.bf16.msra.mxu0 0
        %1977 = vmatprep.subr.bf16.mxu0 0
        %1978 = vmatpush1.bf16.msra.mxu0 0
        %1979 = vmatprep.mubr.bf16.mxu0 0
        %1980 = vmatmul.mubr.bf16.gmra.mrb[0].mxu0 %v1942
        %v1981 = vpop.f32.mrb[0].mxu0
        %v1982 = vadd.f32 0.0, %v1981
        %v1983 = vpop.f32.mrb[0].mxu0
        %v1984 = vpop.f32.mrb[0].mxu0
        %v1985 = vpop.f32.mrb[0].mxu0
        %1986 = vdwg.mxu0
        %1987 = vrot.lane.b32.xlu0 %v990, 40
        %v1988 = vpop.permute.xlu0 %1987
        %v1990 = vsel %vm943, %v1915, 0
        %v1993 = vsel %vm1083, %v1988, 0
        %1995 = vmatprep.subr.bf16.mxu0 0
        %1996 = vmatpush1.bf16.msra.mxu0 %v1993
        %1997 = vmatprep.subr.bf16.mxu0 0
        %1998 = vmatpush1.bf16.msra.mxu0 0
        %1999 = vmatprep.subr.bf16.mxu0 0
        %2000 = vmatpush1.bf16.msra.mxu0 0
        %2001 = vmatprep.subr.bf16.mxu0 0
        %2002 = vmatpush1.bf16.msra.mxu0 0
        %2003 = vmatprep.subr.bf16.mxu0 0
        %2004 = vmatpush1.bf16.msra.mxu0 0
        %2005 = vmatprep.subr.bf16.mxu0 0
        %2006 = vmatpush1.bf16.msra.mxu0 0
        %2007 = vmatprep.subr.bf16.mxu0 0
        %2008 = vmatpush1.bf16.msra.mxu0 0
        %2009 = vmatprep.subr.bf16.mxu0 0
        %2010 = vmatpush1.bf16.msra.mxu0 0
        %2011 = vmatprep.subr.bf16.mxu0 0
        %2012 = vmatpush1.bf16.msra.mxu0 0
        %2013 = vmatprep.subr.bf16.mxu0 0
        %2014 = vmatpush1.bf16.msra.mxu0 0
        %2015 = vmatprep.subr.bf16.mxu0 0
        %2016 = vmatpush1.bf16.msra.mxu0 0
        %2017 = vmatprep.subr.bf16.mxu0 0
        %2018 = vmatpush1.bf16.msra.mxu0 0
        %2019 = vmatprep.subr.bf16.mxu0 0
        %2020 = vmatpush1.bf16.msra.mxu0 0
        %2021 = vmatprep.subr.bf16.mxu0 0
        %2022 = vmatpush1.bf16.msra.mxu0 0
        %2023 = vmatprep.subr.bf16.mxu0 0
        %2024 = vmatpush1.bf16.msra.mxu0 0
        %2025 = vmatprep.subr.bf16.mxu0 0
        %2026 = vmatpush1.bf16.msra.mxu0 0
        %2027 = vmatprep.mubr.bf16.mxu0 0
        %2028 = vmatmul.mubr.bf16.gmra.mrb[0].mxu0 %v1990
        %v2029 = vpop.f32.mrb[0].mxu0
        %v2030 = vadd.f32 0.0, %v2029
        %v2031 = vpop.f32.mrb[0].mxu0
        %v2032 = vpop.f32.mrb[0].mxu0
        %v2033 = vpop.f32.mrb[0].mxu0
        %2034 = vdwg.mxu0
        %v2035 = vmul.f32 %v1982, %v1930
        %v2036 = vmul.f32 %v2030, %v1931
        %v2037 = vpack.c.bf16 %v2036, %v2035
        %v2038 = vld [vmem:[%s750 + $0xc] sm:$0xf]
        %v2040 = vsel %vm943, %v2037, 0
        %v2043 = vsel %vm1083, %v2038, 0
        %2045 = vmatprep.subr.bf16.mxu0 0
        %2046 = vmatpush1.bf16.msra.mxu0 %v2043
        %2047 = vmatprep.subr.bf16.mxu0 0
        %2048 = vmatpush1.bf16.msra.mxu0 0
        %2049 = vmatprep.subr.bf16.mxu0 0
        %2050 = vmatpush1.bf16.msra.mxu0 0
        %2051 = vmatprep.subr.bf16.mxu0 0
        %2052 = vmatpush1.bf16.msra.mxu0 0
        %2053 = vmatprep.subr.bf16.mxu0 0
        %2054 = vmatpush1.bf16.msra.mxu0 0
        %2055 = vmatprep.subr.bf16.mxu0 0
        %2056 = vmatpush1.bf16.msra.mxu0 0
        %2057 = vmatprep.subr.bf16.mxu0 0
        %2058 = vmatpush1.bf16.msra.mxu0 0
        %2059 = vmatprep.subr.bf16.mxu0 0
        %2060 = vmatpush1.bf16.msra.mxu0 0
        %2061 = vmatprep.subr.bf16.mxu0 0
        %2062 = vmatpush1.bf16.msra.mxu0 0
        %2063 = vmatprep.subr.bf16.mxu0 0
        %2064 = vmatpush1.bf16.msra.mxu0 0
        %2065 = vmatprep.subr.bf16.mxu0 0
        %2066 = vmatpush1.bf16.msra.mxu0 0
        %2067 = vmatprep.subr.bf16.mxu0 0
        %2068 = vmatpush1.bf16.msra.mxu0 0
        %2069 = vmatprep.subr.bf16.mxu0 0
        %2070 = vmatpush1.bf16.msra.mxu0 0
        %2071 = vmatprep.subr.bf16.mxu0 0
        %2072 = vmatpush1.bf16.msra.mxu0 0
        %2073 = vmatprep.subr.bf16.mxu0 0
        %2074 = vmatpush1.bf16.msra.mxu0 0
        %2075 = vmatprep.subr.bf16.mxu0 0
        %2076 = vmatpush1.bf16.msra.mxu0 0
        %2077 = vmatprep.mubr.bf16.mxu0 0
        %2078 = vmatmul.mubr.bf16.gmra.mrb[0].mxu0 %v2040
        %v2079 = vpop.f32.mrb[0].mxu0
        %v2080 = vadd.f32 0.0, %v2079
        %v2081 = vpop.f32.mrb[0].mxu0
        %v2082 = vpop.f32.mrb[0].mxu0
        %v2083 = vadd.f32 0.0, %v2082
        %v2084 = vpop.f32.mrb[0].mxu0
        %2085 = vdwg.mxu0
        %v2086 = vadd.f32 %v1798, %v2080
        %v2087 = vadd.f32 %v1799, %v2083
        %v2088 = vadd.f32 %v794, %v2086
        %v2089 = vadd.f32 %v795, %v2087
        %v2090 = vld [vmem:[%s753] sm:$0x1]
        %v2092 = vlaneseq
        %v2093 = vshrl.u32 %v2092, 7
        %v2094 = vsub.s32 0, %v2093
        %v2095 = vrot.slane %v2090, %v2094
        %v2097 = vadd.f32 %v2088, %v2095
        %v2098 = vadd.f32 %v2089, %v2095
        %v2099 = vld [vmem:[%s756] sm:$0x1]
        %v2100 = vld [vmem:[%s625] sm:$0x1]
        %v2101 = vsel %vm816, %v2097, 0.0
        %2102 = vadd.xlane.f32.xlu0 %v2101
        %v2103 = vpop.xlane.xlu0 %2102
        %v2104 = vsel %vm816, %v2098, 0.0
        %2105 = vadd.xlane.f32.xlu0 %v2104
        %v2106 = vpop.xlane.xlu0 %2105
        %v2107 = vmul.f32 %v2103, %v823
        %v2108 = vmul.f32 %v2106, %v823
        %v2109 = vsub.f32 %v2097, %v2107
        %v2110 = vsub.f32 %v2098, %v2108
        %v2111 = vmul.f32 %v2109, %v2109
        %v2112 = vmul.f32 %v2110, %v2110
        %v2113 = vsel %vm816, %v2111, 0.0
        %2114 = vadd.xlane.f32.xlu0 %v2113
        %v2115 = vpop.xlane.xlu0 %2114
        %v2116 = vsel %vm816, %v2112, 0.0
        %2117 = vadd.xlane.f32.xlu0 %v2116
        %v2118 = vpop.xlane.xlu0 %2117
        %v2119 = vmul.f32 %v2115, %v823
        %v2120 = vmul.f32 %v2118, %v823
        %v2121 = vadd.f32 %v2119, 1e-05
        %v2122 = vadd.f32 %v2120, 1e-05
        %v2123 = vrsqrt.pop %v2121
        %v2124 = vrsqrt.pop %v2122
        %v2125 = vmul.f32 %v2109, %v2123
        %v2126 = vmul.f32 %v2110, %v2124
        %v2128 = vlaneseq
        %v2129 = vshrl.u32 %v2128, 7
        %v2130 = vsub.s32 0, %v2129
        %v2131 = vrot.slane %v2099, %v2130
        %v2133 = vmul.f32 %v2125, %v2131
        %v2134 = vmul.f32 %v2126, %v2131
        %v2136 = vlaneseq
        %v2137 = vshrl.u32 %v2136, 7
        %v2138 = vsub.s32 0, %v2137
        %v2139 = vrot.slane %v2100, %v2138
        %v2141 = vadd.f32 %v2133, %v2139
        %v2142 = vadd.f32 %v2134, %v2139
        %v2143 = vpack.c.bf16 %v2142, %v2141
        %v2144 = vld [vmem:[%s761] sm:$0xf]
        %v2145 = vld [vmem:[%s761 + $0x4] sm:$0xf]
        %v2146 = vld [vmem:[%s761 + $0x8] sm:$0xf]
        %v2147 = vld [vmem:[%s761 + $0xc] sm:$0xf]
        %v2148 = vld [vmem:[%s633] sm:$0x1]
        %v2150 = vlaneseq
        %v2151 = vshrl.u32 %v2150, 7
        %v2152 = vsub.s32 0, %v2151
        %v2153 = vrot.slane %v2148, %v2152
        %v2159 = vunpack.c.l.b16 %v2144
        %v2160 = vunpack.c.l.b16 %v2145
        %v2161 = vunpack.c.l.b16 %v2146
        %v2162 = vunpack.c.l.b16 %v2147
        %v2163 = vpack.c.b16 %v2160, %v2159
        %v2164 = vpack.c.b16 %v2162, %v2161
        %v2168 = vsel %vm816, %v2143, 0
        %2170 = vmatprep.subr.bf16.mxu0 0
        %2171 = vmatpush1.bf16.msra.mxu0 %v2163
        %2172 = vmatprep.subr.bf16.mxu0 0
        %2173 = vmatpush1.bf16.msra.mxu0 %v2164
        %2174 = vmatprep.subr.bf16.mxu0 0
        %2175 = vmatpush1.bf16.msra.mxu0 0
        %2176 = vmatprep.subr.bf16.mxu0 0
        %2177 = vmatpush1.bf16.msra.mxu0 0
        %2178 = vmatprep.subr.bf16.mxu0 0
        %2179 = vmatpush1.bf16.msra.mxu0 0
        %2180 = vmatprep.subr.bf16.mxu0 0
        %2181 = vmatpush1.bf16.msra.mxu0 0
        %2182 = vmatprep.subr.bf16.mxu0 0
        %2183 = vmatpush1.bf16.msra.mxu0 0
        %2184 = vmatprep.subr.bf16.mxu0 0
        %2185 = vmatpush1.bf16.msra.mxu0 0
        %2186 = vmatprep.subr.bf16.mxu0 0
        %2187 = vmatpush1.bf16.msra.mxu0 0
        %2188 = vmatprep.subr.bf16.mxu0 0
        %2189 = vmatpush1.bf16.msra.mxu0 0
        %2190 = vmatprep.subr.bf16.mxu0 0
        %2191 = vmatpush1.bf16.msra.mxu0 0
        %2192 = vmatprep.subr.bf16.mxu0 0
        %2193 = vmatpush1.bf16.msra.mxu0 0
        %2194 = vmatprep.subr.bf16.mxu0 0
        %2195 = vmatpush1.bf16.msra.mxu0 0
        %2196 = vmatprep.subr.bf16.mxu0 0
        %2197 = vmatpush1.bf16.msra.mxu0 0
        %2198 = vmatprep.subr.bf16.mxu0 0
        %2199 = vmatpush1.bf16.msra.mxu0 0
        %2200 = vmatprep.subr.bf16.mxu0 0
        %2201 = vmatpush1.bf16.msra.mxu0 0
        %2202 = vmatprep.mubr.bf16.mxu0 0
        %2203 = vmatmul.mubr.bf16.gmra.mrb[0].mxu0 %v2168
        %v2204 = vpop.f32.mrb[0].mxu0
        %v2205 = vadd.f32 %v2153, %v2204
        %v2206 = vpop.f32.mrb[0].mxu0
        %v2207 = vpop.f32.mrb[0].mxu0
        %v2208 = vadd.f32 %v2153, %v2207
        %v2209 = vpop.f32.mrb[0].mxu0
        %2210 = vdwg.mxu0
        %v2211 = vmax.f32 %v2205, 0.0
        %v2212 = vmax.f32 %v2208, 0.0
        %v2213 = vpack.c.bf16 %v2212, %v2211
        %v2214 = vld [vmem:[%s766] sm:$0xf]
        %v2215 = vld [vmem:[%s766 + $0x4] sm:$0xf]
        %v2216 = vld [vmem:[%s766 + $0x8] sm:$0xf]
        %v2217 = vld [vmem:[%s766 + $0xc] sm:$0xf]
        %v2218 = vld [vmem:[%s766 + $0x10] sm:$0xf]
        %v2219 = vld [vmem:[%s766 + $0x14] sm:$0xf]
        %v2220 = vld [vmem:[%s766 + $0x18] sm:$0xf]
        %v2221 = vld [vmem:[%s766 + $0x1c] sm:$0xf]
        %v2222 = vld [vmem:[%s769] sm:$0x1]
        %v2224 = vlaneseq
        %v2225 = vshrl.u32 %v2224, 7
        %v2226 = vsub.s32 0, %v2225
        %v2227 = vrot.slane %v2222, %v2226
        %v2237 = vunpack.c.l.b16 %v2214
        %v2238 = vunpack.c.l.b16 %v2215
        %v2239 = vunpack.c.l.b16 %v2216
        %v2240 = vunpack.c.l.b16 %v2217
        %v2241 = vunpack.c.l.b16 %v2218
        %v2242 = vunpack.c.l.b16 %v2219
        %v2243 = vunpack.c.l.b16 %v2220
        %v2244 = vunpack.c.l.b16 %v2221
        %v2245 = vpack.c.b16 %v2238, %v2237
        %v2246 = vpack.c.b16 %v2240, %v2239
        %v2247 = vpack.c.b16 %v2242, %v2241
        %v2248 = vpack.c.b16 %v2244, %v2243
        %vm2253 = vcmask 523264
        %v2255 = vsel %vm2253, %v2213, 0
        %2257 = vmatprep.subr.bf16.mxu0 0
        %2258 = vmatpush1.bf16.msra.mxu0 %v2245
        %2259 = vmatprep.subr.bf16.mxu0 0
        %2260 = vmatpush1.bf16.msra.mxu0 %v2246
        %2261 = vmatprep.subr.bf16.mxu0 0
        %2262 = vmatpush1.bf16.msra.mxu0 %v2247
        %2263 = vmatprep.subr.bf16.mxu0 0
        %2264 = vmatpush1.bf16.msra.mxu0 %v2248
        %2265 = vmatprep.subr.bf16.mxu0 0
        %2266 = vmatpush1.bf16.msra.mxu0 0
        %2267 = vmatprep.subr.bf16.mxu0 0
        %2268 = vmatpush1.bf16.msra.mxu0 0
        %2269 = vmatprep.subr.bf16.mxu0 0
        %2270 = vmatpush1.bf16.msra.mxu0 0
        %2271 = vmatprep.subr.bf16.mxu0 0
        %2272 = vmatpush1.bf16.msra.mxu0 0
        %2273 = vmatprep.subr.bf16.mxu0 0
        %2274 = vmatpush1.bf16.msra.mxu0 0
        %2275 = vmatprep.subr.bf16.mxu0 0
        %2276 = vmatpush1.bf16.msra.mxu0 0
        %2277 = vmatprep.subr.bf16.mxu0 0
        %2278 = vmatpush1.bf16.msra.mxu0 0
        %2279 = vmatprep.subr.bf16.mxu0 0
        %2280 = vmatpush1.bf16.msra.mxu0 0
        %2281 = vmatprep.subr.bf16.mxu0 0
        %2282 = vmatpush1.bf16.msra.mxu0 0
        %2283 = vmatprep.subr.bf16.mxu0 0
        %2284 = vmatpush1.bf16.msra.mxu0 0
        %2285 = vmatprep.subr.bf16.mxu0 0
        %2286 = vmatpush1.bf16.msra.mxu0 0
        %2287 = vmatprep.subr.bf16.mxu0 0
        %2288 = vmatpush1.bf16.msra.mxu0 0
        %2289 = vmatprep.mubr.bf16.mxu0 0
        %2290 = vmatmul.mubr.bf16.gmra.mrb[0].mxu0 %v2255
        %v2291 = vpop.f32.mrb[0].mxu0
        %v2292 = vadd.f32 %v2227, %v2291
        %v2293 = vpop.f32.mrb[0].mxu0
        %v2294 = vpop.f32.mrb[0].mxu0
        %v2295 = vadd.f32 %v2227, %v2294
        %v2296 = vpop.f32.mrb[0].mxu0
        %2297 = vdwg.mxu0
        %v2298 = vadd.f32 %v2097, %v2292
        %v2299 = vadd.f32 %v2098, %v2295
        %2300 = vst.msk [vmem:[#allocation2] sm:$0xff] %vm816, %v2298
        %2301 = vst.msk [vmem:[#allocation2 + $0x8] sm:$0xff] %vm816, %v2299
        %p2302 = scmp.eq.s32.totalorder %s44, 1
        // Predicated region
        $region97: #{tpu_custom_call.1} parent=79 // pred_check
          %p2303 = pneg %p2302
        $region98: #{tpu_custom_call.1} parent=79 // pred_check_branch
          %2305 = sbr.rel (%p2303) target = $region100
        $region99: #{tpu_custom_call.1} parent=79 // pred_region
          %v2306 = vld [vmem:[%s14] sm:$0x1]
          %v2307 = vld [vmem:[%s15] sm:$0x1]
          %v2308 = vsel %vm816, %v2298, 0.0
          %2309 = vadd.xlane.f32.xlu0 %v2308
          %v2310 = vpop.xlane.xlu0 %2309
          %v2311 = vsel %vm816, %v2299, 0.0
          %2312 = vadd.xlane.f32.xlu0 %v2311
          %v2313 = vpop.xlane.xlu0 %2312
          %v2314 = vmul.f32 %v2310, %v823
          %v2315 = vmul.f32 %v2313, %v823
          %v2316 = vsub.f32 %v2298, %v2314
          %v2317 = vsub.f32 %v2299, %v2315
          %v2318 = vmul.f32 %v2316, %v2316
          %v2319 = vmul.f32 %v2317, %v2317
          %v2320 = vsel %vm816, %v2318, 0.0
          %2321 = vadd.xlane.f32.xlu0 %v2320
          %v2322 = vpop.xlane.xlu0 %2321
          %v2323 = vsel %vm816, %v2319, 0.0
          %2324 = vadd.xlane.f32.xlu0 %v2323
          %v2325 = vpop.xlane.xlu0 %2324
          %v2326 = vmul.f32 %v2322, %v823
          %v2327 = vmul.f32 %v2325, %v823
          %v2328 = vadd.f32 %v2326, 1e-05
          %v2329 = vadd.f32 %v2327, 1e-05
          %v2330 = vrsqrt.pop %v2328
          %v2331 = vrsqrt.pop %v2329
          %v2332 = vmul.f32 %v2316, %v2330
          %v2333 = vmul.f32 %v2317, %v2331
          %v2335 = vlaneseq
          %v2336 = vshrl.u32 %v2335, 7
          %v2337 = vsub.s32 0, %v2336
          %v2338 = vrot.slane %v2306, %v2337
          %v2340 = vmul.f32 %v2332, %v2338
          %v2341 = vmul.f32 %v2333, %v2338
          %v2343 = vlaneseq
          %v2344 = vshrl.u32 %v2343, 7
          %v2345 = vsub.s32 0, %v2344
          %v2346 = vrot.slane %v2307, %v2345
          %v2348 = vadd.f32 %v2340, %v2346
          %v2349 = vadd.f32 %v2341, %v2346
          %2350 = vst.msk [vmem:[#allocation9] sm:$0xff] %vm816, %v2348
          %2351 = vst.msk [vmem:[#allocation9 + $0x8] sm:$0xff] %vm816, %v2349
        $region100: #{tpu_custom_call.1} parent=79 // pred_fallthru
          _
        %s2352 = sand.u32 %s467, 1
        %s2353 = scalar_lea.sflag [#allocation11], %s2352
        %s2354 = sand.u32 %s467, 1
        %s2355 = smul.addr %s2354, 32
        %s2356 = scalar_lea.vmem [#allocation10], %s2355
        // Predicated region
        $region101: #{tpu_custom_call.1} parent=79 // pred_check
          %p2357 = pneg %p449
        $region102: #{tpu_custom_call.1} parent=79 // pred_check_branch
          %2359 = sbr.rel (%p2357) target = $region104
        $region103: #{tpu_custom_call.1} parent=79 // pred_region
          %s2360 = smul.u32 2, %s43
          %s2362 = ssub.s32 256, 256
          %2363 = vsyncadd [#allocation6], %s2362
          %s2364 = smul.addr %s2360, 128
          %s2365 = scalar_lea.hbm %s16, %s2364
          %s2366 = sshll.u32 [#allocation9], 4
          %s2367 = int_to_ptr.vmem [resolvable:$true] %s2366
          %2372 = dma.vmem_to_hbm [thread:$0]  %s2367, 256, %s2365, [#allocation6], 128, 128, 8
        $region104: #{tpu_custom_call.1} parent=79 // pred_fallthru
          _
        // Predicated region
        $region105: #{tpu_custom_call.1} parent=79 // pred_check
          %p2373 = pneg %p477
        $region106: #{tpu_custom_call.1} parent=79 // pred_check_branch
          %2375 = sbr.rel (%p2373) target = $region108
        $region107: #{tpu_custom_call.1} parent=79 // pred_region
          #allocation17 [shape = 'u32[6]{0}', space=smem, size = 0x18, scoped, tag = 'DMA stride descriptor']
          %s2376 = smul.u32 2, %s43
          %s2378 = ssub.s32 512, 512
          %2379 = vsyncadd %s2353, %s2378
          %s2380 = smul.addr %s44, 4
          %s2381 = smul.addr %s2376, 8
          %s2382 = sadd.s32 %s2380, %s2381
          %s2383 = smul.addr %s2382, 64
          %s2384 = scalar_lea.hbm %s17, %s2383
          %s2386 = sshll.u32 1, 14
          %s2387 = sxor.u32 4294967295, %s2386
          %s2390 = sshll.u32 7, 18
          %s2391 = sxor.u32 4294967295, %s2390
          %s2392 = sand.u32 0, %s2391
          %s2394 = sor.u32 %s2392, 0
          %s2396 = sshll.u32 3, 24
          %s2397 = sxor.u32 4294967295, %s2396
          %s2398 = sand.u32 %s2394, %s2397
          %s2400 = sor.u32 %s2398, 0
          %s2401 = sshll.u32 %s2356, 4
          %s2402 = int_to_ptr.vmem [resolvable:$true] %s2401
          %2408 = sst [smem:[#allocation17]] 256
          %s2409 = scalar_lea.smem [#allocation17], 1
          %2410 = sst [smem:[%s2409]] 512
          %s2411 = scalar_lea.smem [#allocation17], 2
          %2412 = sst [smem:[%s2411]] 4
          %s2413 = scalar_lea.smem [#allocation17], 3
          %2414 = sst [smem:[%s2413]] 64
          %s2415 = scalar_lea.smem [#allocation17], 4
          %2416 = sst [smem:[%s2415]] 64
          %s2417 = scalar_lea.smem [#allocation17], 5
          %2418 = sst [smem:[%s2417]] 4
          %2420 = dma.general %s2402, 512, %s2384, %s2353, [#allocation16], [#allocation17], %s2400, 0
        $region108: #{tpu_custom_call.1} parent=79 // pred_fallthru
          _
        // Predicated region
        $region109: #{tpu_custom_call.1} parent=79 // pred_check
          %p2421 = pneg %p449
        $region110: #{tpu_custom_call.1} parent=79 // pred_check_branch
          %2423 = sbr.rel (%p2421) target = $region112
        $region111: #{tpu_custom_call.1} parent=79 // pred_region
          %2424 = dma.done [#allocation6], 256
        $region112: #{tpu_custom_call.1} parent=79 // pred_fallthru
          _
      $region80: #{tpu_custom_call.1} parent=5 // pred_fallthru
        _
      %p2425 = scmp.le.s32.totalorder 2, %s34
      // Predicated region
      $region113: #{tpu_custom_call.1} parent=5 // pred_check
        %p2426 = pneg %p2425
      $region114: #{tpu_custom_call.1} parent=5 // pred_check_branch
        %2428 = sbr.rel (%p2426) target = $region116
      $region115: #{tpu_custom_call.1} parent=5 // pred_region
        %s2429 = ssub.s32 %s34, 2
        // Predicated region
        $region117: #{tpu_custom_call.1} parent=115 // pred_check
          %p2430 = pneg %p483
        $region118: #{tpu_custom_call.1} parent=115 // pred_check_branch
          %2432 = sbr.rel (%p2430) target = $region120
        $region119: #{tpu_custom_call.1} parent=115 // pred_region
          %s2433 = sand.u32 %s468, 1
          %s2434 = scalar_lea.sflag [#allocation11], %s2433
          %s2435 = sand.u32 %s468, 1
          %s2436 = smul.addr %s2435, 32
          %s2437 = scalar_lea.vmem [#allocation10], %s2436
          %2438 = dma.done %s2434, 512
        $region120: #{tpu_custom_call.1} parent=115 // pred_fallthru
          _
      $region116: #{tpu_custom_call.1} parent=5 // pred_fallthru
        _
    $region6: #{tpu_custom_call.1} parent=1 // loop_footer
      %s38 = sadd.s32 1, %s34
    $region7: #{tpu_custom_call.1} parent=1 // loop_footer_branch
      %33 = sbr.rel target = $region3
    $region8: #{tpu_custom_call.1} parent=1 // loop_exit
      _
    %2439 = vsyncpa [#allocation5], 1
    %s2440 = scalar_lea.sflag [#allocation5], 1
    %2441 = vsyncpa %s2440, 1
    %2442 = vsyncpa [#allocation8], 1
    %s2443 = scalar_lea.sflag [#allocation8], 1
    %2444 = vsyncpa %s2443, 1
    %2445 = vsyncpa [#allocation6], 1
    %s2446 = scalar_lea.sflag [#allocation6], 1
    %2447 = vsyncpa %s2446, 1
    %2448 = vsyncpa [#allocation11], 1
    %s2449 = scalar_lea.sflag [#allocation11], 1
    %2450 = vsyncpa %s2449, 1
  %2451 = vsyncmov [#allocation3]
  %s2452 = vpop.sfrf %2451
  %p2453 = scmp.eq.s32.totalorder %s2452, 0
  %p2454 = pneg %p2453
  %2456 = shalt.err (%p2454)

</llo_original>
